<compile_context>
chip_gen: v5e
topology: v5e:2x2
jax: 0.10.0
libtpu: 0.0.40
codegen_flags: <defaults>
</compile_context>

<pallas_src>
import jax
import jax.numpy as jnp
from jax import lax
from jax.experimental import pallas as pl
from jax.experimental.pallas import tpu as pltpu

# ---------------- small synthetic config (stands in for args / pretrained cfg) ----
VOCAB = 100
HIDDEN = 32          # args.roberta_hidden
N_HEADS = 2
HEAD_DIM = HIDDEN // N_HEADS
INTERMEDIATE = 64
N_LAYERS = 4         # need >= 4 layers so hidden_states[-4] exists
MAX_POS = 66
CLASSES = 3          # args.classes
C_PAD = 128          # lane-dense padded class dim (sliced back to CLASSES)
PAD_ID = 1
LN_EPS = 1e-5
BATCH = 2
SEQ = 8


# ----------------------------- in-kernel helpers ------------------------------------
def _ln(x, g, b):
    mean = jnp.mean(x, axis=-1, keepdims=True)
    var = jnp.mean((x - mean) ** 2, axis=-1, keepdims=True)
    return (x - mean) * lax.rsqrt(var + LN_EPS) * g + b


def _dot(a, w):
    """a[..., K] @ w[K, N]: bf16 operands on the MXU, f32 accumulation."""
    return lax.dot_general(
        a.astype(jnp.bfloat16), w.astype(jnp.bfloat16),
        (((a.ndim - 1,), (0,)), ((), ())),
        preferred_element_type=jnp.float32)


# ----------------------------- fused whole-model kernel -----------------------------
def _model_kernel(emb_ref, mask_ref, embg_ref, embb_ref,
                  qkv_w_ref, qkv_b_ref, ao_w_ref, ao_b_ref,
                  ln1_g_ref, ln1_b_ref, i_w_ref, i_b_ref,
                  fo_w_ref, fo_b_ref, ln2_g_ref, ln2_b_ref,
                  hw_ref, hb_ref,
                  logits_ref,
                  ctx_sc, cls_sc):
    """Single invocation (no grid): embedding LN -> N_LAYERS transformer layers
    (static unroll) -> CLS 4-concat -> classification head.

    ctx_sc : VMEM [B, S, H]   per-head context assembly (lane-offset stores)
    cls_sc : VMEM [B, 4H]     CLS concat in torch order (vec1 | vec2 | vec3 | vec4)
    """
    H, dH = HIDDEN, HEAD_DIM
    scale = 1.0 / (dH ** 0.5)
    mask = mask_ref[...]                                           # [B, 1, S] additive

    cls_sc[...] = jnp.zeros_like(cls_sc)

    # hidden_states[0]: embedding LayerNorm (eval mode -> all dropouts identity;
    # roberta_drop is defined in the torch module but never applied in forward).
    x = _ln(emb_ref[...], embg_ref[...], embb_ref[...])            # [B, S, H] f32

    # torch: out = cat([CLS(hs[-1]), CLS(hs[-2]), CLS(hs[-3]), CLS(hs[-4])]) so
    # hidden_states[k] feeds l0.weight row-block `slot = (len(hs)-1) - k`.
    if N_LAYERS < 4:                                               # hs[0] only matters then
        cls_sc[:, N_LAYERS * H:(N_LAYERS + 1) * H] = x[:, 0, :]

    for l in range(N_LAYERS):                                      # static unroll
        # ---- fused QKV projection: one [B*S,H]@[H,3H] MXU call --------------------
        qkv = _dot(x, qkv_w_ref[l]) + qkv_b_ref[l]                 # [B, S, 3H] f32

        # ---- attention: per head, batched over B (2 batched matmuls / head) -------
        for h in range(N_HEADS):                                   # static unroll
            q_h = qkv[:, :, h * dH:(h + 1) * dH].astype(jnp.bfloat16)
            k_h = qkv[:, :, H + h * dH:H + (h + 1) * dH].astype(jnp.bfloat16)
            v_h = qkv[:, :, 2 * H + h * dH:2 * H + (h + 1) * dH].astype(jnp.bfloat16)
            s = lax.dot_general(q_h, k_h, (((2,), (2,)), ((0,), (0,))),
                                preferred_element_type=jnp.float32) * scale  # [B,S,S]
            s = s + mask
            s = s - jnp.max(s, axis=-1, keepdims=True)
            p = jnp.exp(s)
            p = p / jnp.sum(p, axis=-1, keepdims=True)             # exact division
            ctx_h = lax.dot_general(p.astype(jnp.bfloat16), v_h,
                                    (((2,), (1,)), ((0,), (0,))),
                                    preferred_element_type=jnp.float32)       # [B,S,dH]
            ctx_sc[:, :, h * dH:(h + 1) * dH] = ctx_h              # lane-offset store

        # ---- single output projection over all heads ------------------------------
        attn = _dot(ctx_sc[...], ao_w_ref[l]) + ao_b_ref[l]        # [B, S, H]
        x1 = _ln(attn + x, ln1_g_ref[l], ln1_b_ref[l])

        # ---- FFN -------------------------------------------------------------------
        inter = _dot(x1, i_w_ref[l]) + i_b_ref[l]
        # TODO(synk): HF XLM-R uses exact (erf) GELU; tanh approximation used here.
        inter = jax.nn.gelu(inter, approximate=True)
        ffn = _dot(inter, fo_w_ref[l]) + fo_b_ref[l]
        x = _ln(ffn + x1, ln2_g_ref[l], ln2_b_ref[l])

        # ---- CLS of this layer (only the last 4 layers contribute to the head) ----
        slot = N_LAYERS - 1 - l                                    # hs[l+1] -> slot
        if 0 <= slot < 4:
            cls_sc[:, slot * H:(slot + 1) * H] = x[:, 0, :]

    # ---- classification head on lane-dense (128-wide) padded classes --------------
    logits_ref[...] = _dot(cls_sc[...], hw_ref[...]) + hb_ref[...]


# ----------------------------- pallas_call wrapper ----------------------------------
def _run_model(emb, mask_add, p):
    B, S, H = emb.shape
    vmem = pl.BlockSpec(memory_space=pltpu.MemorySpace.VMEM)
    return pl.pallas_call(
        _model_kernel,
        out_shape=jax.ShapeDtypeStruct((B, C_PAD), jnp.float32),
        in_specs=[vmem] * 18,
        out_specs=vmem,
        scratch_shapes=[
            pltpu.VMEM((B, S, H), jnp.float32),        # per-head context assembly
            pltpu.VMEM((B, 4 * H), jnp.float32),       # CLS 4-concat (head input)
        ],
    )(emb, mask_add,
      p['emb_ln_g'], p['emb_ln_b'],
      p['qkv_w'], p['qkv_b'], p['ao_w'], p['ao_b'],
      p['ln1_g'], p['ln1_b'], p['i_w'], p['i_b'],
      p['fo_w'], p['fo_b'], p['ln2_g'], p['ln2_b'],
      p['hw_pad'], p['hb_pad'])


# ----------------------------- model (embeddings in XLA + fused kernel) --------------
@jax.jit
def forward(params, ids, attention_mask):
    """Replicates RobertaBengaliNext.forward (eval mode)."""
    B, S = ids.shape

    # HF XLM-R create_position_ids_from_input_ids: derived from ids != padding_idx.
    tok_mask = (ids != PAD_ID).astype(jnp.int32)
    pos_ids = jnp.cumsum(tok_mask, axis=1) * tok_mask + PAD_ID
    emb = (params['word_emb'][ids]
           + params['pos_emb'][pos_ids]
           + params['type_emb'][jnp.zeros_like(ids)]).astype(jnp.float32)   # [B,S,H]
    mask_add = ((1.0 - attention_mask.astype(jnp.float32)) * -1e9)[:, None, :]  # [B,1,S]

    bf16 = jnp.bfloat16
    kparams = {
        'emb_ln_g': params['emb_ln_g'], 'emb_ln_b': params['emb_ln_b'],
        'qkv_w': params['qkv_w'].astype(bf16), 'qkv_b': params['qkv_b'],
        'ao_w': params['ao_w'].astype(bf16), 'ao_b': params['ao_b'],
        'ln1_g': params['ln1_g'], 'ln1_b': params['ln1_b'],
        'i_w': params['i_w'].astype(bf16), 'i_b': params['i_b'],
        'fo_w': params['fo_w'].astype(bf16), 'fo_b': params['fo_b'],
        'ln2_g': params['ln2_g'], 'ln2_b': params['ln2_b'],
        # lane-dense padded head: [4H, 128] / [1, 128]; columns >= CLASSES are zero.
        'hw_pad': jnp.zeros((4 * HIDDEN, C_PAD), jnp.float32)
                     .at[:, :CLASSES].set(params['l0_w']).astype(bf16),
        'hb_pad': jnp.zeros((1, C_PAD), jnp.float32)
                     .at[:, :CLASSES].set(params['l0_b']),
    }
    logits_pad = _run_model(emb, mask_add, kparams)
    return logits_pad[:, :CLASSES]


def init_params(key):
    keys = iter(jax.random.split(key, 32))

    def nrm(shape, std=0.02):
        return jax.random.normal(next(keys), shape, jnp.float32) * std

    params = {
        'word_emb': nrm((VOCAB, HIDDEN)),
        'pos_emb': nrm((MAX_POS, HIDDEN)),
        'type_emb': nrm((1, HIDDEN)),
        'emb_ln_g': jnp.ones((1, HIDDEN), jnp.float32),
        'emb_ln_b': jnp.zeros((1, HIDDEN), jnp.float32),
        # classification head: torch.nn.init.normal_(weight, std=0.02), bias -> 0
        'l0_w': nrm((4 * HIDDEN, CLASSES)),
        'l0_b': jnp.zeros((1, CLASSES), jnp.float32),
        # stacked per-layer encoder weights (Q|K|V fused along the output dim)
        'qkv_w': nrm((N_LAYERS, HIDDEN, 3 * HIDDEN)),
        'qkv_b': jnp.zeros((N_LAYERS, 1, 3 * HIDDEN), jnp.float32),
        'ao_w': nrm((N_LAYERS, HIDDEN, HIDDEN)),
        'ao_b': jnp.zeros((N_LAYERS, 1, HIDDEN), jnp.float32),
        'ln1_g': jnp.ones((N_LAYERS, 1, HIDDEN), jnp.float32),
        'ln1_b': jnp.zeros((N_LAYERS, 1, HIDDEN), jnp.float32),
        'i_w': nrm((N_LAYERS, HIDDEN, INTERMEDIATE)),
        'i_b': jnp.zeros((N_LAYERS, 1, INTERMEDIATE), jnp.float32),
        'fo_w': nrm((N_LAYERS, INTERMEDIATE, HIDDEN)),
        'fo_b': jnp.zeros((N_LAYERS, 1, HIDDEN), jnp.float32),
        'ln2_g': jnp.ones((N_LAYERS, 1, HIDDEN), jnp.float32),
        'ln2_b': jnp.zeros((N_LAYERS, 1, HIDDEN), jnp.float32),
    }
    return params


if __name__ == "__main__":
    key = jax.random.PRNGKey(0)
    pkey, ikey = jax.random.split(key)
    params = init_params(pkey)

    ids = jax.random.randint(ikey, (BATCH, SEQ), 2, VOCAB, dtype=jnp.int32)
    attention_mask = jnp.ones((BATCH, SEQ), jnp.int32)
    # pad the tail of the second sequence
    attention_mask = attention_mask.at[1, -2:].set(0)
    ids = jnp.where(attention_mask == 1, ids, PAD_ID)

    logits = forward(params, ids, attention_mask)
    logits = jax.block_until_ready(logits)
    assert logits.shape == (BATCH, CLASSES)
    assert bool(jnp.all(jnp.isfinite(logits)))
    print("KERNEL_OK")
</pallas_src>

<mosaic_0001>
module attributes {stable_mosaic.version = 11 : i64} {
  func.func @_model_kernel(%arg0: memref<2x8x32xf32, #tpu.memory_space<vmem>>, %arg1: memref<2x1x8xf32, #tpu.memory_space<vmem>>, %arg2: memref<1x32xf32, #tpu.memory_space<vmem>>, %arg3: memref<1x32xf32, #tpu.memory_space<vmem>>, %arg4: memref<4x32x96xbf16, #tpu.memory_space<vmem>>, %arg5: memref<4x1x96xf32, #tpu.memory_space<vmem>>, %arg6: memref<4x32x32xbf16, #tpu.memory_space<vmem>>, %arg7: memref<4x1x32xf32, #tpu.memory_space<vmem>>, %arg8: memref<4x1x32xf32, #tpu.memory_space<vmem>>, %arg9: memref<4x1x32xf32, #tpu.memory_space<vmem>>, %arg10: memref<4x32x64xbf16, #tpu.memory_space<vmem>>, %arg11: memref<4x1x64xf32, #tpu.memory_space<vmem>>, %arg12: memref<4x64x32xbf16, #tpu.memory_space<vmem>>, %arg13: memref<4x1x32xf32, #tpu.memory_space<vmem>>, %arg14: memref<4x1x32xf32, #tpu.memory_space<vmem>>, %arg15: memref<4x1x32xf32, #tpu.memory_space<vmem>>, %arg16: memref<128x128xbf16, #tpu.memory_space<vmem>>, %arg17: memref<1x128xf32, #tpu.memory_space<vmem>>, %arg18: memref<2x128xf32, #tpu.memory_space<vmem>>, %arg19: memref<2x8x32xf32, #tpu.memory_space<vmem>>, %arg20: memref<2x128xf32, #tpu.memory_space<vmem>>) attributes {dimension_semantics = [], scalar_prefetch = 0 : i64, scratch_operands = 2 : i64, tpu.core_type = #tpu.core_type<tc>} {
    %c0 = arith.constant 0 : index
    %c0_0 = arith.constant 0 : index
    %c0_1 = arith.constant 0 : index
    %0 = vector.load %arg1[%c0, %c0_0, %c0_1] : memref<2x1x8xf32, #tpu.memory_space<vmem>>, vector<2x1x8xf32>
    %cst = arith.constant 0.000000e+00 : f32
    %1 = vector.broadcast %cst : f32 to vector<2x128xf32>
    %c0_2 = arith.constant 0 : index
    %c0_3 = arith.constant 0 : index
    %2 = vector.load %arg20[%c0_2, %c0_3] : memref<2x128xf32, #tpu.memory_space<vmem>>, vector<2x128xf32>
    tpu.vector_store %arg20[%c0_2, %c0_3], %1 {strides = array<i32>} : memref<2x128xf32, #tpu.memory_space<vmem>>, vector<2x128xf32>,
    %c0_4 = arith.constant 0 : index
    %c0_5 = arith.constant 0 : index
    %c0_6 = arith.constant 0 : index
    %3 = vector.load %arg0[%c0_4, %c0_5, %c0_6] : memref<2x8x32xf32, #tpu.memory_space<vmem>>, vector<2x8x32xf32>
    %c0_7 = arith.constant 0 : index
    %c0_8 = arith.constant 0 : index
    %4 = vector.load %arg2[%c0_7, %c0_8] : memref<1x32xf32, #tpu.memory_space<vmem>>, vector<1x32xf32>
    %c0_9 = arith.constant 0 : index
    %c0_10 = arith.constant 0 : index
    %5 = vector.load %arg3[%c0_9, %c0_10] : memref<1x32xf32, #tpu.memory_space<vmem>>, vector<1x32xf32>
    %cst_11 = arith.constant dense<0.000000e+00> : vector<2x8xf32>
    %6 = vector.multi_reduction <add>, %3, %cst_11 [2] : vector<2x8x32xf32> to vector<2x8xf32>
    %7 = vector.shape_cast %6 : vector<2x8xf32> to vector<2x8x1xf32>
    %cst_12 = arith.constant 3.200000e+01 : f32
    %8 = vector.broadcast %cst_12 : f32 to vector<2x8x1xf32>
    %9 = arith.divf %7, %8 : vector<2x8x1xf32>
    %10 = vector.broadcast %9 : vector<2x8x1xf32> to vector<2x8x32xf32>
    %11 = arith.subf %3, %10 : vector<2x8x32xf32>
    %12 = arith.mulf %11, %11 : vector<2x8x32xf32>
    %cst_13 = arith.constant dense<0.000000e+00> : vector<2x8xf32>
    %13 = vector.multi_reduction <add>, %12, %cst_13 [2] : vector<2x8x32xf32> to vector<2x8xf32>
    %14 = vector.shape_cast %13 : vector<2x8xf32> to vector<2x8x1xf32>
    %cst_14 = arith.constant 3.200000e+01 : f32
    %15 = vector.broadcast %cst_14 : f32 to vector<2x8x1xf32>
    %16 = arith.divf %14, %15 : vector<2x8x1xf32>
    %17 = vector.broadcast %9 : vector<2x8x1xf32> to vector<2x8x32xf32>
    %18 = arith.subf %3, %17 : vector<2x8x32xf32>
    %cst_15 = arith.constant 9.99999974E-6 : f32
    %19 = vector.broadcast %cst_15 : f32 to vector<2x8x1xf32>
    %20 = arith.addf %16, %19 : vector<2x8x1xf32>
    %21 = math.rsqrt %20 : vector<2x8x1xf32>
    %22 = vector.broadcast %21 : vector<2x8x1xf32> to vector<2x8x32xf32>
    %23 = arith.mulf %18, %22 : vector<2x8x32xf32>
    %24 = vector.shape_cast %4 : vector<1x32xf32> to vector<1x1x32xf32>
    %25 = vector.broadcast %24 : vector<1x1x32xf32> to vector<2x8x32xf32>
    %26 = arith.mulf %23, %25 : vector<2x8x32xf32>
    %27 = vector.shape_cast %5 : vector<1x32xf32> to vector<1x1x32xf32>
    %28 = vector.broadcast %27 : vector<1x1x32xf32> to vector<2x8x32xf32>
    %29 = arith.addf %26, %28 : vector<2x8x32xf32>
    %c0_16 = arith.constant 0 : index
    %c0_17 = arith.constant 0 : index
    %c0_18 = arith.constant 0 : index
    %30 = vector.load %arg4[%c0_16, %c0_17, %c0_18] : memref<4x32x96xbf16, #tpu.memory_space<vmem>>, vector<1x32x96xbf16>
    %31 = vector.shape_cast %30 : vector<1x32x96xbf16> to vector<32x96xbf16>
    %32 = arith.truncf %29 : vector<2x8x32xf32> to vector<2x8x32xbf16>
    %cst_19 = arith.constant dense<0.000000e+00> : vector<2x8x96xf32>
    %33 = tpu.matmul %32, %31, %cst_19 {dimension_numbers = #tpu.dot_dimension_numbers<[2], [0], [0, 1], [1], [0, 0, 0, 1, 1, 1], [], []>} : vector<2x8x32xbf16>, vector<32x96xbf16>, vector<2x8x96xf32> -> vector<2x8x96xf32>
    %c0_20 = arith.constant 0 : index
    %c0_21 = arith.constant 0 : index
    %c0_22 = arith.constant 0 : index
    %34 = vector.load %arg5[%c0_20, %c0_21, %c0_22] : memref<4x1x96xf32, #tpu.memory_space<vmem>>, vector<1x1x96xf32>
    %35 = vector.shape_cast %34 : vector<1x1x96xf32> to vector<1x96xf32>
    %36 = vector.shape_cast %35 : vector<1x96xf32> to vector<1x1x96xf32>
    %37 = vector.broadcast %36 : vector<1x1x96xf32> to vector<2x8x96xf32>
    %38 = arith.addf %33, %37 : vector<2x8x96xf32>
    %39 = vector.extract_strided_slice %38 {offsets = [0, 0, 0], sizes = [2, 8, 16], strides = [1, 1, 1]} : vector<2x8x96xf32> to vector<2x8x16xf32>
    %40 = arith.truncf %39 : vector<2x8x16xf32> to vector<2x8x16xbf16>
    %41 = vector.extract_strided_slice %38 {offsets = [0, 0, 32], sizes = [2, 8, 16], strides = [1, 1, 1]} : vector<2x8x96xf32> to vector<2x8x16xf32>
    %42 = arith.truncf %41 : vector<2x8x16xf32> to vector<2x8x16xbf16>
    %43 = vector.extract_strided_slice %38 {offsets = [0, 0, 64], sizes = [2, 8, 16], strides = [1, 1, 1]} : vector<2x8x96xf32> to vector<2x8x16xf32>
    %44 = arith.truncf %43 : vector<2x8x16xf32> to vector<2x8x16xbf16>
    %cst_23 = arith.constant dense<0.000000e+00> : vector<2x8x8xf32>
    %45 = tpu.matmul %40, %42, %cst_23 {dimension_numbers = #tpu.dot_dimension_numbers<[2], [2], [1], [1], [0, 0, 0, 1, 1, 1], [0], [0]>} : vector<2x8x16xbf16>, vector<2x8x16xbf16>, vector<2x8x8xf32> -> vector<2x8x8xf32>
    %cst_24 = arith.constant 2.500000e-01 : f32
    %46 = vector.broadcast %cst_24 : f32 to vector<2x8x8xf32>
    %47 = arith.mulf %45, %46 : vector<2x8x8xf32>
    %48 = vector.broadcast %0 : vector<2x1x8xf32> to vector<2x8x8xf32>
    %49 = arith.addf %47, %48 : vector<2x8x8xf32>
    %cst_25 = arith.constant dense<0xFF800000> : vector<2x8xf32>
    %50 = vector.multi_reduction <maximumf>, %49, %cst_25 [2] : vector<2x8x8xf32> to vector<2x8xf32>
    %51 = vector.shape_cast %50 : vector<2x8xf32> to vector<2x8x1xf32>
    %52 = vector.broadcast %51 : vector<2x8x1xf32> to vector<2x8x8xf32>
    %53 = arith.subf %49, %52 : vector<2x8x8xf32>
    %54 = math.exp %53 : vector<2x8x8xf32>
    %cst_26 = arith.constant dense<0.000000e+00> : vector<2x8xf32>
    %55 = vector.multi_reduction <add>, %54, %cst_26 [2] : vector<2x8x8xf32> to vector<2x8xf32>
    %56 = vector.shape_cast %55 : vector<2x8xf32> to vector<2x8x1xf32>
    %57 = vector.broadcast %56 : vector<2x8x1xf32> to vector<2x8x8xf32>
    %58 = arith.divf %54, %57 : vector<2x8x8xf32>
    %59 = arith.truncf %58 : vector<2x8x8xf32> to vector<2x8x8xbf16>
    %cst_27 = arith.constant dense<0.000000e+00> : vector<2x8x16xf32>
    %60 = tpu.matmul %59, %44, %cst_27 {dimension_numbers = #tpu.dot_dimension_numbers<[2], [1], [1], [2], [0, 0, 0, 1, 1, 2], [0], [0]>} : vector<2x8x8xbf16>, vector<2x8x16xbf16>, vector<2x8x16xf32> -> vector<2x8x16xf32>
    %c0_28 = arith.constant 0 : index
    %c0_29 = arith.constant 0 : index
    %c0_30 = arith.constant 0 : index
    %61 = vector.load %arg19[%c0_28, %c0_29, %c0_30] : memref<2x8x32xf32, #tpu.memory_space<vmem>>, vector<2x8x16xf32>
    tpu.vector_store %arg19[%c0_28, %c0_29, %c0_30], %60 {strides = array<i32>} : memref<2x8x32xf32, #tpu.memory_space<vmem>>, vector<2x8x16xf32>,
    %62 = vector.extract_strided_slice %38 {offsets = [0, 0, 16], sizes = [2, 8, 16], strides = [1, 1, 1]} : vector<2x8x96xf32> to vector<2x8x16xf32>
    %63 = arith.truncf %62 : vector<2x8x16xf32> to vector<2x8x16xbf16>
    %64 = vector.extract_strided_slice %38 {offsets = [0, 0, 48], sizes = [2, 8, 16], strides = [1, 1, 1]} : vector<2x8x96xf32> to vector<2x8x16xf32>
    %65 = arith.truncf %64 : vector<2x8x16xf32> to vector<2x8x16xbf16>
    %66 = vector.extract_strided_slice %38 {offsets = [0, 0, 80], sizes = [2, 8, 16], strides = [1, 1, 1]} : vector<2x8x96xf32> to vector<2x8x16xf32>
    %67 = arith.truncf %66 : vector<2x8x16xf32> to vector<2x8x16xbf16>
    %cst_31 = arith.constant dense<0.000000e+00> : vector<2x8x8xf32>
    %68 = tpu.matmul %63, %65, %cst_31 {dimension_numbers = #tpu.dot_dimension_numbers<[2], [2], [1], [1], [0, 0, 0, 1, 1, 1], [0], [0]>} : vector<2x8x16xbf16>, vector<2x8x16xbf16>, vector<2x8x8xf32> -> vector<2x8x8xf32>
    %cst_32 = arith.constant 2.500000e-01 : f32
    %69 = vector.broadcast %cst_32 : f32 to vector<2x8x8xf32>
    %70 = arith.mulf %68, %69 : vector<2x8x8xf32>
    %71 = vector.broadcast %0 : vector<2x1x8xf32> to vector<2x8x8xf32>
    %72 = arith.addf %70, %71 : vector<2x8x8xf32>
    %cst_33 = arith.constant dense<0xFF800000> : vector<2x8xf32>
    %73 = vector.multi_reduction <maximumf>, %72, %cst_33 [2] : vector<2x8x8xf32> to vector<2x8xf32>
    %74 = vector.shape_cast %73 : vector<2x8xf32> to vector<2x8x1xf32>
    %75 = vector.broadcast %74 : vector<2x8x1xf32> to vector<2x8x8xf32>
    %76 = arith.subf %72, %75 : vector<2x8x8xf32>
    %77 = math.exp %76 : vector<2x8x8xf32>
    %cst_34 = arith.constant dense<0.000000e+00> : vector<2x8xf32>
    %78 = vector.multi_reduction <add>, %77, %cst_34 [2] : vector<2x8x8xf32> to vector<2x8xf32>
    %79 = vector.shape_cast %78 : vector<2x8xf32> to vector<2x8x1xf32>
    %80 = vector.broadcast %79 : vector<2x8x1xf32> to vector<2x8x8xf32>
    %81 = arith.divf %77, %80 : vector<2x8x8xf32>
    %82 = arith.truncf %81 : vector<2x8x8xf32> to vector<2x8x8xbf16>
    %cst_35 = arith.constant dense<0.000000e+00> : vector<2x8x16xf32>
    %83 = tpu.matmul %82, %67, %cst_35 {dimension_numbers = #tpu.dot_dimension_numbers<[2], [1], [1], [2], [0, 0, 0, 1, 1, 2], [0], [0]>} : vector<2x8x8xbf16>, vector<2x8x16xbf16>, vector<2x8x16xf32> -> vector<2x8x16xf32>
    %c0_36 = arith.constant 0 : index
    %c0_37 = arith.constant 0 : index
    %c16 = arith.constant 16 : index
    %84 = vector.load %arg19[%c0_36, %c0_37, %c16] : memref<2x8x32xf32, #tpu.memory_space<vmem>>, vector<2x8x16xf32>
    tpu.vector_store %arg19[%c0_36, %c0_37, %c16], %83 {strides = array<i32>} : memref<2x8x32xf32, #tpu.memory_space<vmem>>, vector<2x8x16xf32>,
    %c0_38 = arith.constant 0 : index
    %c0_39 = arith.constant 0 : index
    %c0_40 = arith.constant 0 : index
    %85 = vector.load %arg19[%c0_38, %c0_39, %c0_40] : memref<2x8x32xf32, #tpu.memory_space<vmem>>, vector<2x8x32xf32>
    %c0_41 = arith.constant 0 : index
    %c0_42 = arith.constant 0 : index
    %c0_43 = arith.constant 0 : index
    %86 = vector.load %arg6[%c0_41, %c0_42, %c0_43] : memref<4x32x32xbf16, #tpu.memory_space<vmem>>, vector<1x32x32xbf16>
    %87 = vector.shape_cast %86 : vector<1x32x32xbf16> to vector<32x32xbf16>
    %88 = arith.truncf %85 : vector<2x8x32xf32> to vector<2x8x32xbf16>
    %cst_44 = arith.constant dense<0.000000e+00> : vector<2x8x32xf32>
    %89 = tpu.matmul %88, %87, %cst_44 {dimension_numbers = #tpu.dot_dimension_numbers<[2], [0], [0, 1], [1], [0, 0, 0, 1, 1, 1], [], []>} : vector<2x8x32xbf16>, vector<32x32xbf16>, vector<2x8x32xf32> -> vector<2x8x32xf32>
    %c0_45 = arith.constant 0 : index
    %c0_46 = arith.constant 0 : index
    %c0_47 = arith.constant 0 : index
    %90 = vector.load %arg7[%c0_45, %c0_46, %c0_47] : memref<4x1x32xf32, #tpu.memory_space<vmem>>, vector<1x1x32xf32>
    %91 = vector.shape_cast %90 : vector<1x1x32xf32> to vector<1x32xf32>
    %92 = vector.shape_cast %91 : vector<1x32xf32> to vector<1x1x32xf32>
    %93 = vector.broadcast %92 : vector<1x1x32xf32> to vector<2x8x32xf32>
    %94 = arith.addf %89, %93 : vector<2x8x32xf32>
    %95 = arith.addf %94, %29 : vector<2x8x32xf32>
    %c0_48 = arith.constant 0 : index
    %c0_49 = arith.constant 0 : index
    %c0_50 = arith.constant 0 : index
    %96 = vector.load %arg8[%c0_48, %c0_49, %c0_50] : memref<4x1x32xf32, #tpu.memory_space<vmem>>, vector<1x1x32xf32>
    %97 = vector.shape_cast %96 : vector<1x1x32xf32> to vector<1x32xf32>
    %c0_51 = arith.constant 0 : index
    %c0_52 = arith.constant 0 : index
    %c0_53 = arith.constant 0 : index
    %98 = vector.load %arg9[%c0_51, %c0_52, %c0_53] : memref<4x1x32xf32, #tpu.memory_space<vmem>>, vector<1x1x32xf32>
    %99 = vector.shape_cast %98 : vector<1x1x32xf32> to vector<1x32xf32>
    %cst_54 = arith.constant dense<0.000000e+00> : vector<2x8xf32>
    %100 = vector.multi_reduction <add>, %95, %cst_54 [2] : vector<2x8x32xf32> to vector<2x8xf32>
    %101 = vector.shape_cast %100 : vector<2x8xf32> to vector<2x8x1xf32>
    %cst_55 = arith.constant 3.200000e+01 : f32
    %102 = vector.broadcast %cst_55 : f32 to vector<2x8x1xf32>
    %103 = arith.divf %101, %102 : vector<2x8x1xf32>
    %104 = vector.broadcast %103 : vector<2x8x1xf32> to vector<2x8x32xf32>
    %105 = arith.subf %95, %104 : vector<2x8x32xf32>
    %106 = arith.mulf %105, %105 : vector<2x8x32xf32>
    %cst_56 = arith.constant dense<0.000000e+00> : vector<2x8xf32>
    %107 = vector.multi_reduction <add>, %106, %cst_56 [2] : vector<2x8x32xf32> to vector<2x8xf32>
    %108 = vector.shape_cast %107 : vector<2x8xf32> to vector<2x8x1xf32>
    %cst_57 = arith.constant 3.200000e+01 : f32
    %109 = vector.broadcast %cst_57 : f32 to vector<2x8x1xf32>
    %110 = arith.divf %108, %109 : vector<2x8x1xf32>
    %111 = vector.broadcast %103 : vector<2x8x1xf32> to vector<2x8x32xf32>
    %112 = arith.subf %95, %111 : vector<2x8x32xf32>
    %cst_58 = arith.constant 9.99999974E-6 : f32
    %113 = vector.broadcast %cst_58 : f32 to vector<2x8x1xf32>
    %114 = arith.addf %110, %113 : vector<2x8x1xf32>
    %115 = math.rsqrt %114 : vector<2x8x1xf32>
    %116 = vector.broadcast %115 : vector<2x8x1xf32> to vector<2x8x32xf32>
    %117 = arith.mulf %112, %116 : vector<2x8x32xf32>
    %118 = vector.shape_cast %97 : vector<1x32xf32> to vector<1x1x32xf32>
    %119 = vector.broadcast %118 : vector<1x1x32xf32> to vector<2x8x32xf32>
    %120 = arith.mulf %117, %119 : vector<2x8x32xf32>
    %121 = vector.shape_cast %99 : vector<1x32xf32> to vector<1x1x32xf32>
    %122 = vector.broadcast %121 : vector<1x1x32xf32> to vector<2x8x32xf32>
    %123 = arith.addf %120, %122 : vector<2x8x32xf32>
    %c0_59 = arith.constant 0 : index
    %c0_60 = arith.constant 0 : index
    %c0_61 = arith.constant 0 : index
    %124 = vector.load %arg10[%c0_59, %c0_60, %c0_61] : memref<4x32x64xbf16, #tpu.memory_space<vmem>>, vector<1x32x64xbf16>
    %125 = vector.shape_cast %124 : vector<1x32x64xbf16> to vector<32x64xbf16>
    %126 = arith.truncf %123 : vector<2x8x32xf32> to vector<2x8x32xbf16>
    %cst_62 = arith.constant dense<0.000000e+00> : vector<2x8x64xf32>
    %127 = tpu.matmul %126, %125, %cst_62 {dimension_numbers = #tpu.dot_dimension_numbers<[2], [0], [0, 1], [1], [0, 0, 0, 1, 1, 1], [], []>} : vector<2x8x32xbf16>, vector<32x64xbf16>, vector<2x8x64xf32> -> vector<2x8x64xf32>
    %c0_63 = arith.constant 0 : index
    %c0_64 = arith.constant 0 : index
    %c0_65 = arith.constant 0 : index
    %128 = vector.load %arg11[%c0_63, %c0_64, %c0_65] : memref<4x1x64xf32, #tpu.memory_space<vmem>>, vector<1x1x64xf32>
    %129 = vector.shape_cast %128 : vector<1x1x64xf32> to vector<1x64xf32>
    %130 = vector.shape_cast %129 : vector<1x64xf32> to vector<1x1x64xf32>
    %131 = vector.broadcast %130 : vector<1x1x64xf32> to vector<2x8x64xf32>
    %132 = arith.addf %127, %131 : vector<2x8x64xf32>
    %133 = arith.mulf %132, %132 : vector<2x8x64xf32>
    %134 = arith.mulf %132, %133 : vector<2x8x64xf32>
    %cst_66 = arith.constant 4.471500e-02 : f32
    %135 = vector.broadcast %cst_66 : f32 to vector<2x8x64xf32>
    %136 = arith.mulf %135, %134 : vector<2x8x64xf32>
    %137 = arith.addf %132, %136 : vector<2x8x64xf32>
    %cst_67 = arith.constant 0.797884583 : f32
    %138 = vector.broadcast %cst_67 : f32 to vector<2x8x64xf32>
    %139 = arith.mulf %138, %137 : vector<2x8x64xf32>
    %140 = math.tanh %139 : vector<2x8x64xf32>
    %cst_68 = arith.constant 1.000000e+00 : f32
    %141 = vector.broadcast %cst_68 : f32 to vector<2x8x64xf32>
    %142 = arith.addf %141, %140 : vector<2x8x64xf32>
    %cst_69 = arith.constant 5.000000e-01 : f32
    %143 = vector.broadcast %cst_69 : f32 to vector<2x8x64xf32>
    %144 = arith.mulf %143, %142 : vector<2x8x64xf32>
    %145 = arith.mulf %132, %144 : vector<2x8x64xf32>
    %c0_70 = arith.constant 0 : index
    %c0_71 = arith.constant 0 : index
    %c0_72 = arith.constant 0 : index
    %146 = vector.load %arg12[%c0_70, %c0_71, %c0_72] : memref<4x64x32xbf16, #tpu.memory_space<vmem>>, vector<1x64x32xbf16>
    %147 = vector.shape_cast %146 : vector<1x64x32xbf16> to vector<64x32xbf16>
    %148 = arith.truncf %145 : vector<2x8x64xf32> to vector<2x8x64xbf16>
    %cst_73 = arith.constant dense<0.000000e+00> : vector<2x8x32xf32>
    %149 = tpu.matmul %148, %147, %cst_73 {dimension_numbers = #tpu.dot_dimension_numbers<[2], [0], [0, 1], [1], [0, 0, 0, 1, 1, 1], [], []>} : vector<2x8x64xbf16>, vector<64x32xbf16>, vector<2x8x32xf32> -> vector<2x8x32xf32>
    %c0_74 = arith.constant 0 : index
    %c0_75 = arith.constant 0 : index
    %c0_76 = arith.constant 0 : index
    %150 = vector.load %arg13[%c0_74, %c0_75, %c0_76] : memref<4x1x32xf32, #tpu.memory_space<vmem>>, vector<1x1x32xf32>
    %151 = vector.shape_cast %150 : vector<1x1x32xf32> to vector<1x32xf32>
    %152 = vector.shape_cast %151 : vector<1x32xf32> to vector<1x1x32xf32>
    %153 = vector.broadcast %152 : vector<1x1x32xf32> to vector<2x8x32xf32>
    %154 = arith.addf %149, %153 : vector<2x8x32xf32>
    %155 = arith.addf %154, %123 : vector<2x8x32xf32>
    %c0_77 = arith.constant 0 : index
    %c0_78 = arith.constant 0 : index
    %c0_79 = arith.constant 0 : index
    %156 = vector.load %arg14[%c0_77, %c0_78, %c0_79] : memref<4x1x32xf32, #tpu.memory_space<vmem>>, vector<1x1x32xf32>
    %157 = vector.shape_cast %156 : vector<1x1x32xf32> to vector<1x32xf32>
    %c0_80 = arith.constant 0 : index
    %c0_81 = arith.constant 0 : index
    %c0_82 = arith.constant 0 : index
    %158 = vector.load %arg15[%c0_80, %c0_81, %c0_82] : memref<4x1x32xf32, #tpu.memory_space<vmem>>, vector<1x1x32xf32>
    %159 = vector.shape_cast %158 : vector<1x1x32xf32> to vector<1x32xf32>
    %cst_83 = arith.constant dense<0.000000e+00> : vector<2x8xf32>
    %160 = vector.multi_reduction <add>, %155, %cst_83 [2] : vector<2x8x32xf32> to vector<2x8xf32>
    %161 = vector.shape_cast %160 : vector<2x8xf32> to vector<2x8x1xf32>
    %cst_84 = arith.constant 3.200000e+01 : f32
    %162 = vector.broadcast %cst_84 : f32 to vector<2x8x1xf32>
    %163 = arith.divf %161, %162 : vector<2x8x1xf32>
    %164 = vector.broadcast %163 : vector<2x8x1xf32> to vector<2x8x32xf32>
    %165 = arith.subf %155, %164 : vector<2x8x32xf32>
    %166 = arith.mulf %165, %165 : vector<2x8x32xf32>
    %cst_85 = arith.constant dense<0.000000e+00> : vector<2x8xf32>
    %167 = vector.multi_reduction <add>, %166, %cst_85 [2] : vector<2x8x32xf32> to vector<2x8xf32>
    %168 = vector.shape_cast %167 : vector<2x8xf32> to vector<2x8x1xf32>
    %cst_86 = arith.constant 3.200000e+01 : f32
    %169 = vector.broadcast %cst_86 : f32 to vector<2x8x1xf32>
    %170 = arith.divf %168, %169 : vector<2x8x1xf32>
    %171 = vector.broadcast %163 : vector<2x8x1xf32> to vector<2x8x32xf32>
    %172 = arith.subf %155, %171 : vector<2x8x32xf32>
    %cst_87 = arith.constant 9.99999974E-6 : f32
    %173 = vector.broadcast %cst_87 : f32 to vector<2x8x1xf32>
    %174 = arith.addf %170, %173 : vector<2x8x1xf32>
    %175 = math.rsqrt %174 : vector<2x8x1xf32>
    %176 = vector.broadcast %175 : vector<2x8x1xf32> to vector<2x8x32xf32>
    %177 = arith.mulf %172, %176 : vector<2x8x32xf32>
    %178 = vector.shape_cast %157 : vector<1x32xf32> to vector<1x1x32xf32>
    %179 = vector.broadcast %178 : vector<1x1x32xf32> to vector<2x8x32xf32>
    %180 = arith.mulf %177, %179 : vector<2x8x32xf32>
    %181 = vector.shape_cast %159 : vector<1x32xf32> to vector<1x1x32xf32>
    %182 = vector.broadcast %181 : vector<1x1x32xf32> to vector<2x8x32xf32>
    %183 = arith.addf %180, %182 : vector<2x8x32xf32>
    %184 = vector.extract_strided_slice %183 {offsets = [0, 0, 0], sizes = [2, 1, 32], strides = [1, 1, 1]} : vector<2x8x32xf32> to vector<2x1x32xf32>
    %185 = vector.shape_cast %184 : vector<2x1x32xf32> to vector<2x32xf32>
    %c0_88 = arith.constant 0 : index
    %c96 = arith.constant 96 : index
    %186 = vector.load %arg20[%c0_88, %c96] : memref<2x128xf32, #tpu.memory_space<vmem>>, vector<2x32xf32>
    tpu.vector_store %arg20[%c0_88, %c96], %185 {strides = array<i32>} : memref<2x128xf32, #tpu.memory_space<vmem>>, vector<2x32xf32>,
    %c1 = arith.constant 1 : index
    %c0_89 = arith.constant 0 : index
    %c0_90 = arith.constant 0 : index
    %187 = vector.load %arg4[%c1, %c0_89, %c0_90] : memref<4x32x96xbf16, #tpu.memory_space<vmem>>, vector<1x32x96xbf16>
    %188 = vector.shape_cast %187 : vector<1x32x96xbf16> to vector<32x96xbf16>
    %189 = arith.truncf %183 : vector<2x8x32xf32> to vector<2x8x32xbf16>
    %cst_91 = arith.constant dense<0.000000e+00> : vector<2x8x96xf32>
    %190 = tpu.matmul %189, %188, %cst_91 {dimension_numbers = #tpu.dot_dimension_numbers<[2], [0], [0, 1], [1], [0, 0, 0, 1, 1, 1], [], []>} : vector<2x8x32xbf16>, vector<32x96xbf16>, vector<2x8x96xf32> -> vector<2x8x96xf32>
    %c1_92 = arith.constant 1 : index
    %c0_93 = arith.constant 0 : index
    %c0_94 = arith.constant 0 : index
    %191 = vector.load %arg5[%c1_92, %c0_93, %c0_94] : memref<4x1x96xf32, #tpu.memory_space<vmem>>, vector<1x1x96xf32>
    %192 = vector.shape_cast %191 : vector<1x1x96xf32> to vector<1x96xf32>
    %193 = vector.shape_cast %192 : vector<1x96xf32> to vector<1x1x96xf32>
    %194 = vector.broadcast %193 : vector<1x1x96xf32> to vector<2x8x96xf32>
    %195 = arith.addf %190, %194 : vector<2x8x96xf32>
    %196 = vector.extract_strided_slice %195 {offsets = [0, 0, 0], sizes = [2, 8, 16], strides = [1, 1, 1]} : vector<2x8x96xf32> to vector<2x8x16xf32>
    %197 = arith.truncf %196 : vector<2x8x16xf32> to vector<2x8x16xbf16>
    %198 = vector.extract_strided_slice %195 {offsets = [0, 0, 32], sizes = [2, 8, 16], strides = [1, 1, 1]} : vector<2x8x96xf32> to vector<2x8x16xf32>
    %199 = arith.truncf %198 : vector<2x8x16xf32> to vector<2x8x16xbf16>
    %200 = vector.extract_strided_slice %195 {offsets = [0, 0, 64], sizes = [2, 8, 16], strides = [1, 1, 1]} : vector<2x8x96xf32> to vector<2x8x16xf32>
    %201 = arith.truncf %200 : vector<2x8x16xf32> to vector<2x8x16xbf16>
    %cst_95 = arith.constant dense<0.000000e+00> : vector<2x8x8xf32>
    %202 = tpu.matmul %197, %199, %cst_95 {dimension_numbers = #tpu.dot_dimension_numbers<[2], [2], [1], [1], [0, 0, 0, 1, 1, 1], [0], [0]>} : vector<2x8x16xbf16>, vector<2x8x16xbf16>, vector<2x8x8xf32> -> vector<2x8x8xf32>
    %cst_96 = arith.constant 2.500000e-01 : f32
    %203 = vector.broadcast %cst_96 : f32 to vector<2x8x8xf32>
    %204 = arith.mulf %202, %203 : vector<2x8x8xf32>
    %205 = vector.broadcast %0 : vector<2x1x8xf32> to vector<2x8x8xf32>
    %206 = arith.addf %204, %205 : vector<2x8x8xf32>
    %cst_97 = arith.constant dense<0xFF800000> : vector<2x8xf32>
    %207 = vector.multi_reduction <maximumf>, %206, %cst_97 [2] : vector<2x8x8xf32> to vector<2x8xf32>
    %208 = vector.shape_cast %207 : vector<2x8xf32> to vector<2x8x1xf32>
    %209 = vector.broadcast %208 : vector<2x8x1xf32> to vector<2x8x8xf32>
    %210 = arith.subf %206, %209 : vector<2x8x8xf32>
    %211 = math.exp %210 : vector<2x8x8xf32>
    %cst_98 = arith.constant dense<0.000000e+00> : vector<2x8xf32>
    %212 = vector.multi_reduction <add>, %211, %cst_98 [2] : vector<2x8x8xf32> to vector<2x8xf32>
    %213 = vector.shape_cast %212 : vector<2x8xf32> to vector<2x8x1xf32>
    %214 = vector.broadcast %213 : vector<2x8x1xf32> to vector<2x8x8xf32>
    %215 = arith.divf %211, %214 : vector<2x8x8xf32>
    %216 = arith.truncf %215 : vector<2x8x8xf32> to vector<2x8x8xbf16>
    %cst_99 = arith.constant dense<0.000000e+00> : vector<2x8x16xf32>
    %217 = tpu.matmul %216, %201, %cst_99 {dimension_numbers = #tpu.dot_dimension_numbers<[2], [1], [1], [2], [0, 0, 0, 1, 1, 2], [0], [0]>} : vector<2x8x8xbf16>, vector<2x8x16xbf16>, vector<2x8x16xf32> -> vector<2x8x16xf32>
    %c0_100 = arith.constant 0 : index
    %c0_101 = arith.constant 0 : index
    %c0_102 = arith.constant 0 : index
    %218 = vector.load %arg19[%c0_100, %c0_101, %c0_102] : memref<2x8x32xf32, #tpu.memory_space<vmem>>, vector<2x8x16xf32>
    tpu.vector_store %arg19[%c0_100, %c0_101, %c0_102], %217 {strides = array<i32>} : memref<2x8x32xf32, #tpu.memory_space<vmem>>, vector<2x8x16xf32>,
    %219 = vector.extract_strided_slice %195 {offsets = [0, 0, 16], sizes = [2, 8, 16], strides = [1, 1, 1]} : vector<2x8x96xf32> to vector<2x8x16xf32>
    %220 = arith.truncf %219 : vector<2x8x16xf32> to vector<2x8x16xbf16>
    %221 = vector.extract_strided_slice %195 {offsets = [0, 0, 48], sizes = [2, 8, 16], strides = [1, 1, 1]} : vector<2x8x96xf32> to vector<2x8x16xf32>
    %222 = arith.truncf %221 : vector<2x8x16xf32> to vector<2x8x16xbf16>
    %223 = vector.extract_strided_slice %195 {offsets = [0, 0, 80], sizes = [2, 8, 16], strides = [1, 1, 1]} : vector<2x8x96xf32> to vector<2x8x16xf32>
    %224 = arith.truncf %223 : vector<2x8x16xf32> to vector<2x8x16xbf16>
    %cst_103 = arith.constant dense<0.000000e+00> : vector<2x8x8xf32>
    %225 = tpu.matmul %220, %222, %cst_103 {dimension_numbers = #tpu.dot_dimension_numbers<[2], [2], [1], [1], [0, 0, 0, 1, 1, 1], [0], [0]>} : vector<2x8x16xbf16>, vector<2x8x16xbf16>, vector<2x8x8xf32> -> vector<2x8x8xf32>
    %cst_104 = arith.constant 2.500000e-01 : f32
    %226 = vector.broadcast %cst_104 : f32 to vector<2x8x8xf32>
    %227 = arith.mulf %225, %226 : vector<2x8x8xf32>
    %228 = vector.broadcast %0 : vector<2x1x8xf32> to vector<2x8x8xf32>
    %229 = arith.addf %227, %228 : vector<2x8x8xf32>
    %cst_105 = arith.constant dense<0xFF800000> : vector<2x8xf32>
    %230 = vector.multi_reduction <maximumf>, %229, %cst_105 [2] : vector<2x8x8xf32> to vector<2x8xf32>
    %231 = vector.shape_cast %230 : vector<2x8xf32> to vector<2x8x1xf32>
    %232 = vector.broadcast %231 : vector<2x8x1xf32> to vector<2x8x8xf32>
    %233 = arith.subf %229, %232 : vector<2x8x8xf32>
    %234 = math.exp %233 : vector<2x8x8xf32>
    %cst_106 = arith.constant dense<0.000000e+00> : vector<2x8xf32>
    %235 = vector.multi_reduction <add>, %234, %cst_106 [2] : vector<2x8x8xf32> to vector<2x8xf32>
    %236 = vector.shape_cast %235 : vector<2x8xf32> to vector<2x8x1xf32>
    %237 = vector.broadcast %236 : vector<2x8x1xf32> to vector<2x8x8xf32>
    %238 = arith.divf %234, %237 : vector<2x8x8xf32>
    %239 = arith.truncf %238 : vector<2x8x8xf32> to vector<2x8x8xbf16>
    %cst_107 = arith.constant dense<0.000000e+00> : vector<2x8x16xf32>
    %240 = tpu.matmul %239, %224, %cst_107 {dimension_numbers = #tpu.dot_dimension_numbers<[2], [1], [1], [2], [0, 0, 0, 1, 1, 2], [0], [0]>} : vector<2x8x8xbf16>, vector<2x8x16xbf16>, vector<2x8x16xf32> -> vector<2x8x16xf32>
    %c0_108 = arith.constant 0 : index
    %c0_109 = arith.constant 0 : index
    %c16_110 = arith.constant 16 : index
    %241 = vector.load %arg19[%c0_108, %c0_109, %c16_110] : memref<2x8x32xf32, #tpu.memory_space<vmem>>, vector<2x8x16xf32>
    tpu.vector_store %arg19[%c0_108, %c0_109, %c16_110], %240 {strides = array<i32>} : memref<2x8x32xf32, #tpu.memory_space<vmem>>, vector<2x8x16xf32>,
    %c0_111 = arith.constant 0 : index
    %c0_112 = arith.constant 0 : index
    %c0_113 = arith.constant 0 : index
    %242 = vector.load %arg19[%c0_111, %c0_112, %c0_113] : memref<2x8x32xf32, #tpu.memory_space<vmem>>, vector<2x8x32xf32>
    %c1_114 = arith.constant 1 : index
    %c0_115 = arith.constant 0 : index
    %c0_116 = arith.constant 0 : index
    %243 = vector.load %arg6[%c1_114, %c0_115, %c0_116] : memref<4x32x32xbf16, #tpu.memory_space<vmem>>, vector<1x32x32xbf16>
    %244 = vector.shape_cast %243 : vector<1x32x32xbf16> to vector<32x32xbf16>
    %245 = arith.truncf %242 : vector<2x8x32xf32> to vector<2x8x32xbf16>
    %cst_117 = arith.constant dense<0.000000e+00> : vector<2x8x32xf32>
    %246 = tpu.matmul %245, %244, %cst_117 {dimension_numbers = #tpu.dot_dimension_numbers<[2], [0], [0, 1], [1], [0, 0, 0, 1, 1, 1], [], []>} : vector<2x8x32xbf16>, vector<32x32xbf16>, vector<2x8x32xf32> -> vector<2x8x32xf32>
    %c1_118 = arith.constant 1 : index
    %c0_119 = arith.constant 0 : index
    %c0_120 = arith.constant 0 : index
    %247 = vector.load %arg7[%c1_118, %c0_119, %c0_120] : memref<4x1x32xf32, #tpu.memory_space<vmem>>, vector<1x1x32xf32>
    %248 = vector.shape_cast %247 : vector<1x1x32xf32> to vector<1x32xf32>
    %249 = vector.shape_cast %248 : vector<1x32xf32> to vector<1x1x32xf32>
    %250 = vector.broadcast %249 : vector<1x1x32xf32> to vector<2x8x32xf32>
    %251 = arith.addf %246, %250 : vector<2x8x32xf32>
    %252 = arith.addf %251, %183 : vector<2x8x32xf32>
    %c1_121 = arith.constant 1 : index
    %c0_122 = arith.constant 0 : index
    %c0_123 = arith.constant 0 : index
    %253 = vector.load %arg8[%c1_121, %c0_122, %c0_123] : memref<4x1x32xf32, #tpu.memory_space<vmem>>, vector<1x1x32xf32>
    %254 = vector.shape_cast %253 : vector<1x1x32xf32> to vector<1x32xf32>
    %c1_124 = arith.constant 1 : index
    %c0_125 = arith.constant 0 : index
    %c0_126 = arith.constant 0 : index
    %255 = vector.load %arg9[%c1_124, %c0_125, %c0_126] : memref<4x1x32xf32, #tpu.memory_space<vmem>>, vector<1x1x32xf32>
    %256 = vector.shape_cast %255 : vector<1x1x32xf32> to vector<1x32xf32>
    %cst_127 = arith.constant dense<0.000000e+00> : vector<2x8xf32>
    %257 = vector.multi_reduction <add>, %252, %cst_127 [2] : vector<2x8x32xf32> to vector<2x8xf32>
    %258 = vector.shape_cast %257 : vector<2x8xf32> to vector<2x8x1xf32>
    %cst_128 = arith.constant 3.200000e+01 : f32
    %259 = vector.broadcast %cst_128 : f32 to vector<2x8x1xf32>
    %260 = arith.divf %258, %259 : vector<2x8x1xf32>
    %261 = vector.broadcast %260 : vector<2x8x1xf32> to vector<2x8x32xf32>
    %262 = arith.subf %252, %261 : vector<2x8x32xf32>
    %263 = arith.mulf %262, %262 : vector<2x8x32xf32>
    %cst_129 = arith.constant dense<0.000000e+00> : vector<2x8xf32>
    %264 = vector.multi_reduction <add>, %263, %cst_129 [2] : vector<2x8x32xf32> to vector<2x8xf32>
    %265 = vector.shape_cast %264 : vector<2x8xf32> to vector<2x8x1xf32>
    %cst_130 = arith.constant 3.200000e+01 : f32
    %266 = vector.broadcast %cst_130 : f32 to vector<2x8x1xf32>
    %267 = arith.divf %265, %266 : vector<2x8x1xf32>
    %268 = vector.broadcast %260 : vector<2x8x1xf32> to vector<2x8x32xf32>
    %269 = arith.subf %252, %268 : vector<2x8x32xf32>
    %cst_131 = arith.constant 9.99999974E-6 : f32
    %270 = vector.broadcast %cst_131 : f32 to vector<2x8x1xf32>
    %271 = arith.addf %267, %270 : vector<2x8x1xf32>
    %272 = math.rsqrt %271 : vector<2x8x1xf32>
    %273 = vector.broadcast %272 : vector<2x8x1xf32> to vector<2x8x32xf32>
    %274 = arith.mulf %269, %273 : vector<2x8x32xf32>
    %275 = vector.shape_cast %254 : vector<1x32xf32> to vector<1x1x32xf32>
    %276 = vector.broadcast %275 : vector<1x1x32xf32> to vector<2x8x32xf32>
    %277 = arith.mulf %274, %276 : vector<2x8x32xf32>
    %278 = vector.shape_cast %256 : vector<1x32xf32> to vector<1x1x32xf32>
    %279 = vector.broadcast %278 : vector<1x1x32xf32> to vector<2x8x32xf32>
    %280 = arith.addf %277, %279 : vector<2x8x32xf32>
    %c1_132 = arith.constant 1 : index
    %c0_133 = arith.constant 0 : index
    %c0_134 = arith.constant 0 : index
    %281 = vector.load %arg10[%c1_132, %c0_133, %c0_134] : memref<4x32x64xbf16, #tpu.memory_space<vmem>>, vector<1x32x64xbf16>
    %282 = vector.shape_cast %281 : vector<1x32x64xbf16> to vector<32x64xbf16>
    %283 = arith.truncf %280 : vector<2x8x32xf32> to vector<2x8x32xbf16>
    %cst_135 = arith.constant dense<0.000000e+00> : vector<2x8x64xf32>
    %284 = tpu.matmul %283, %282, %cst_135 {dimension_numbers = #tpu.dot_dimension_numbers<[2], [0], [0, 1], [1], [0, 0, 0, 1, 1, 1], [], []>} : vector<2x8x32xbf16>, vector<32x64xbf16>, vector<2x8x64xf32> -> vector<2x8x64xf32>
    %c1_136 = arith.constant 1 : index
    %c0_137 = arith.constant 0 : index
    %c0_138 = arith.constant 0 : index
    %285 = vector.load %arg11[%c1_136, %c0_137, %c0_138] : memref<4x1x64xf32, #tpu.memory_space<vmem>>, vector<1x1x64xf32>
    %286 = vector.shape_cast %285 : vector<1x1x64xf32> to vector<1x64xf32>
    %287 = vector.shape_cast %286 : vector<1x64xf32> to vector<1x1x64xf32>
    %288 = vector.broadcast %287 : vector<1x1x64xf32> to vector<2x8x64xf32>
    %289 = arith.addf %284, %288 : vector<2x8x64xf32>
    %290 = arith.mulf %289, %289 : vector<2x8x64xf32>
    %291 = arith.mulf %289, %290 : vector<2x8x64xf32>
    %cst_139 = arith.constant 4.471500e-02 : f32
    %292 = vector.broadcast %cst_139 : f32 to vector<2x8x64xf32>
    %293 = arith.mulf %292, %291 : vector<2x8x64xf32>
    %294 = arith.addf %289, %293 : vector<2x8x64xf32>
    %cst_140 = arith.constant 0.797884583 : f32
    %295 = vector.broadcast %cst_140 : f32 to vector<2x8x64xf32>
    %296 = arith.mulf %295, %294 : vector<2x8x64xf32>
    %297 = math.tanh %296 : vector<2x8x64xf32>
    %cst_141 = arith.constant 1.000000e+00 : f32
    %298 = vector.broadcast %cst_141 : f32 to vector<2x8x64xf32>
    %299 = arith.addf %298, %297 : vector<2x8x64xf32>
    %cst_142 = arith.constant 5.000000e-01 : f32
    %300 = vector.broadcast %cst_142 : f32 to vector<2x8x64xf32>
    %301 = arith.mulf %300, %299 : vector<2x8x64xf32>
    %302 = arith.mulf %289, %301 : vector<2x8x64xf32>
    %c1_143 = arith.constant 1 : index
    %c0_144 = arith.constant 0 : index
    %c0_145 = arith.constant 0 : index
    %303 = vector.load %arg12[%c1_143, %c0_144, %c0_145] : memref<4x64x32xbf16, #tpu.memory_space<vmem>>, vector<1x64x32xbf16>
    %304 = vector.shape_cast %303 : vector<1x64x32xbf16> to vector<64x32xbf16>
    %305 = arith.truncf %302 : vector<2x8x64xf32> to vector<2x8x64xbf16>
    %cst_146 = arith.constant dense<0.000000e+00> : vector<2x8x32xf32>
    %306 = tpu.matmul %305, %304, %cst_146 {dimension_numbers = #tpu.dot_dimension_numbers<[2], [0], [0, 1], [1], [0, 0, 0, 1, 1, 1], [], []>} : vector<2x8x64xbf16>, vector<64x32xbf16>, vector<2x8x32xf32> -> vector<2x8x32xf32>
    %c1_147 = arith.constant 1 : index
    %c0_148 = arith.constant 0 : index
    %c0_149 = arith.constant 0 : index
    %307 = vector.load %arg13[%c1_147, %c0_148, %c0_149] : memref<4x1x32xf32, #tpu.memory_space<vmem>>, vector<1x1x32xf32>
    %308 = vector.shape_cast %307 : vector<1x1x32xf32> to vector<1x32xf32>
    %309 = vector.shape_cast %308 : vector<1x32xf32> to vector<1x1x32xf32>
    %310 = vector.broadcast %309 : vector<1x1x32xf32> to vector<2x8x32xf32>
    %311 = arith.addf %306, %310 : vector<2x8x32xf32>
    %312 = arith.addf %311, %280 : vector<2x8x32xf32>
    %c1_150 = arith.constant 1 : index
    %c0_151 = arith.constant 0 : index
    %c0_152 = arith.constant 0 : index
    %313 = vector.load %arg14[%c1_150, %c0_151, %c0_152] : memref<4x1x32xf32, #tpu.memory_space<vmem>>, vector<1x1x32xf32>
    %314 = vector.shape_cast %313 : vector<1x1x32xf32> to vector<1x32xf32>
    %c1_153 = arith.constant 1 : index
    %c0_154 = arith.constant 0 : index
    %c0_155 = arith.constant 0 : index
    %315 = vector.load %arg15[%c1_153, %c0_154, %c0_155] : memref<4x1x32xf32, #tpu.memory_space<vmem>>, vector<1x1x32xf32>
    %316 = vector.shape_cast %315 : vector<1x1x32xf32> to vector<1x32xf32>
    %cst_156 = arith.constant dense<0.000000e+00> : vector<2x8xf32>
    %317 = vector.multi_reduction <add>, %312, %cst_156 [2] : vector<2x8x32xf32> to vector<2x8xf32>
    %318 = vector.shape_cast %317 : vector<2x8xf32> to vector<2x8x1xf32>
    %cst_157 = arith.constant 3.200000e+01 : f32
    %319 = vector.broadcast %cst_157 : f32 to vector<2x8x1xf32>
    %320 = arith.divf %318, %319 : vector<2x8x1xf32>
    %321 = vector.broadcast %320 : vector<2x8x1xf32> to vector<2x8x32xf32>
    %322 = arith.subf %312, %321 : vector<2x8x32xf32>
    %323 = arith.mulf %322, %322 : vector<2x8x32xf32>
    %cst_158 = arith.constant dense<0.000000e+00> : vector<2x8xf32>
    %324 = vector.multi_reduction <add>, %323, %cst_158 [2] : vector<2x8x32xf32> to vector<2x8xf32>
    %325 = vector.shape_cast %324 : vector<2x8xf32> to vector<2x8x1xf32>
    %cst_159 = arith.constant 3.200000e+01 : f32
    %326 = vector.broadcast %cst_159 : f32 to vector<2x8x1xf32>
    %327 = arith.divf %325, %326 : vector<2x8x1xf32>
    %328 = vector.broadcast %320 : vector<2x8x1xf32> to vector<2x8x32xf32>
    %329 = arith.subf %312, %328 : vector<2x8x32xf32>
    %cst_160 = arith.constant 9.99999974E-6 : f32
    %330 = vector.broadcast %cst_160 : f32 to vector<2x8x1xf32>
    %331 = arith.addf %327, %330 : vector<2x8x1xf32>
    %332 = math.rsqrt %331 : vector<2x8x1xf32>
    %333 = vector.broadcast %332 : vector<2x8x1xf32> to vector<2x8x32xf32>
    %334 = arith.mulf %329, %333 : vector<2x8x32xf32>
    %335 = vector.shape_cast %314 : vector<1x32xf32> to vector<1x1x32xf32>
    %336 = vector.broadcast %335 : vector<1x1x32xf32> to vector<2x8x32xf32>
    %337 = arith.mulf %334, %336 : vector<2x8x32xf32>
    %338 = vector.shape_cast %316 : vector<1x32xf32> to vector<1x1x32xf32>
    %339 = vector.broadcast %338 : vector<1x1x32xf32> to vector<2x8x32xf32>
    %340 = arith.addf %337, %339 : vector<2x8x32xf32>
    %341 = vector.extract_strided_slice %340 {offsets = [0, 0, 0], sizes = [2, 1, 32], strides = [1, 1, 1]} : vector<2x8x32xf32> to vector<2x1x32xf32>
    %342 = vector.shape_cast %341 : vector<2x1x32xf32> to vector<2x32xf32>
    %c0_161 = arith.constant 0 : index
    %c64 = arith.constant 64 : index
    %343 = vector.load %arg20[%c0_161, %c64] : memref<2x128xf32, #tpu.memory_space<vmem>>, vector<2x32xf32>
    tpu.vector_store %arg20[%c0_161, %c64], %342 {strides = array<i32>} : memref<2x128xf32, #tpu.memory_space<vmem>>, vector<2x32xf32>,
    %c2 = arith.constant 2 : index
    %c0_162 = arith.constant 0 : index
    %c0_163 = arith.constant 0 : index
    %344 = vector.load %arg4[%c2, %c0_162, %c0_163] : memref<4x32x96xbf16, #tpu.memory_space<vmem>>, vector<1x32x96xbf16>
    %345 = vector.shape_cast %344 : vector<1x32x96xbf16> to vector<32x96xbf16>
    %346 = arith.truncf %340 : vector<2x8x32xf32> to vector<2x8x32xbf16>
    %cst_164 = arith.constant dense<0.000000e+00> : vector<2x8x96xf32>
    %347 = tpu.matmul %346, %345, %cst_164 {dimension_numbers = #tpu.dot_dimension_numbers<[2], [0], [0, 1], [1], [0, 0, 0, 1, 1, 1], [], []>} : vector<2x8x32xbf16>, vector<32x96xbf16>, vector<2x8x96xf32> -> vector<2x8x96xf32>
    %c2_165 = arith.constant 2 : index
    %c0_166 = arith.constant 0 : index
    %c0_167 = arith.constant 0 : index
    %348 = vector.load %arg5[%c2_165, %c0_166, %c0_167] : memref<4x1x96xf32, #tpu.memory_space<vmem>>, vector<1x1x96xf32>
    %349 = vector.shape_cast %348 : vector<1x1x96xf32> to vector<1x96xf32>
    %350 = vector.shape_cast %349 : vector<1x96xf32> to vector<1x1x96xf32>
    %351 = vector.broadcast %350 : vector<1x1x96xf32> to vector<2x8x96xf32>
    %352 = arith.addf %347, %351 : vector<2x8x96xf32>
    %353 = vector.extract_strided_slice %352 {offsets = [0, 0, 0], sizes = [2, 8, 16], strides = [1, 1, 1]} : vector<2x8x96xf32> to vector<2x8x16xf32>
    %354 = arith.truncf %353 : vector<2x8x16xf32> to vector<2x8x16xbf16>
    %355 = vector.extract_strided_slice %352 {offsets = [0, 0, 32], sizes = [2, 8, 16], strides = [1, 1, 1]} : vector<2x8x96xf32> to vector<2x8x16xf32>
    %356 = arith.truncf %355 : vector<2x8x16xf32> to vector<2x8x16xbf16>
    %357 = vector.extract_strided_slice %352 {offsets = [0, 0, 64], sizes = [2, 8, 16], strides = [1, 1, 1]} : vector<2x8x96xf32> to vector<2x8x16xf32>
    %358 = arith.truncf %357 : vector<2x8x16xf32> to vector<2x8x16xbf16>
    %cst_168 = arith.constant dense<0.000000e+00> : vector<2x8x8xf32>
    %359 = tpu.matmul %354, %356, %cst_168 {dimension_numbers = #tpu.dot_dimension_numbers<[2], [2], [1], [1], [0, 0, 0, 1, 1, 1], [0], [0]>} : vector<2x8x16xbf16>, vector<2x8x16xbf16>, vector<2x8x8xf32> -> vector<2x8x8xf32>
    %cst_169 = arith.constant 2.500000e-01 : f32
    %360 = vector.broadcast %cst_169 : f32 to vector<2x8x8xf32>
    %361 = arith.mulf %359, %360 : vector<2x8x8xf32>
    %362 = vector.broadcast %0 : vector<2x1x8xf32> to vector<2x8x8xf32>
    %363 = arith.addf %361, %362 : vector<2x8x8xf32>
    %cst_170 = arith.constant dense<0xFF800000> : vector<2x8xf32>
    %364 = vector.multi_reduction <maximumf>, %363, %cst_170 [2] : vector<2x8x8xf32> to vector<2x8xf32>
    %365 = vector.shape_cast %364 : vector<2x8xf32> to vector<2x8x1xf32>
    %366 = vector.broadcast %365 : vector<2x8x1xf32> to vector<2x8x8xf32>
    %367 = arith.subf %363, %366 : vector<2x8x8xf32>
    %368 = math.exp %367 : vector<2x8x8xf32>
    %cst_171 = arith.constant dense<0.000000e+00> : vector<2x8xf32>
    %369 = vector.multi_reduction <add>, %368, %cst_171 [2] : vector<2x8x8xf32> to vector<2x8xf32>
    %370 = vector.shape_cast %369 : vector<2x8xf32> to vector<2x8x1xf32>
    %371 = vector.broadcast %370 : vector<2x8x1xf32> to vector<2x8x8xf32>
    %372 = arith.divf %368, %371 : vector<2x8x8xf32>
    %373 = arith.truncf %372 : vector<2x8x8xf32> to vector<2x8x8xbf16>
    %cst_172 = arith.constant dense<0.000000e+00> : vector<2x8x16xf32>
    %374 = tpu.matmul %373, %358, %cst_172 {dimension_numbers = #tpu.dot_dimension_numbers<[2], [1], [1], [2], [0, 0, 0, 1, 1, 2], [0], [0]>} : vector<2x8x8xbf16>, vector<2x8x16xbf16>, vector<2x8x16xf32> -> vector<2x8x16xf32>
    %c0_173 = arith.constant 0 : index
    %c0_174 = arith.constant 0 : index
    %c0_175 = arith.constant 0 : index
    %375 = vector.load %arg19[%c0_173, %c0_174, %c0_175] : memref<2x8x32xf32, #tpu.memory_space<vmem>>, vector<2x8x16xf32>
    tpu.vector_store %arg19[%c0_173, %c0_174, %c0_175], %374 {strides = array<i32>} : memref<2x8x32xf32, #tpu.memory_space<vmem>>, vector<2x8x16xf32>,
    %376 = vector.extract_strided_slice %352 {offsets = [0, 0, 16], sizes = [2, 8, 16], strides = [1, 1, 1]} : vector<2x8x96xf32> to vector<2x8x16xf32>
    %377 = arith.truncf %376 : vector<2x8x16xf32> to vector<2x8x16xbf16>
    %378 = vector.extract_strided_slice %352 {offsets = [0, 0, 48], sizes = [2, 8, 16], strides = [1, 1, 1]} : vector<2x8x96xf32> to vector<2x8x16xf32>
    %379 = arith.truncf %378 : vector<2x8x16xf32> to vector<2x8x16xbf16>
    %380 = vector.extract_strided_slice %352 {offsets = [0, 0, 80], sizes = [2, 8, 16], strides = [1, 1, 1]} : vector<2x8x96xf32> to vector<2x8x16xf32>
    %381 = arith.truncf %380 : vector<2x8x16xf32> to vector<2x8x16xbf16>
    %cst_176 = arith.constant dense<0.000000e+00> : vector<2x8x8xf32>
    %382 = tpu.matmul %377, %379, %cst_176 {dimension_numbers = #tpu.dot_dimension_numbers<[2], [2], [1], [1], [0, 0, 0, 1, 1, 1], [0], [0]>} : vector<2x8x16xbf16>, vector<2x8x16xbf16>, vector<2x8x8xf32> -> vector<2x8x8xf32>
    %cst_177 = arith.constant 2.500000e-01 : f32
    %383 = vector.broadcast %cst_177 : f32 to vector<2x8x8xf32>
    %384 = arith.mulf %382, %383 : vector<2x8x8xf32>
    %385 = vector.broadcast %0 : vector<2x1x8xf32> to vector<2x8x8xf32>
    %386 = arith.addf %384, %385 : vector<2x8x8xf32>
    %cst_178 = arith.constant dense<0xFF800000> : vector<2x8xf32>
    %387 = vector.multi_reduction <maximumf>, %386, %cst_178 [2] : vector<2x8x8xf32> to vector<2x8xf32>
    %388 = vector.shape_cast %387 : vector<2x8xf32> to vector<2x8x1xf32>
    %389 = vector.broadcast %388 : vector<2x8x1xf32> to vector<2x8x8xf32>
    %390 = arith.subf %386, %389 : vector<2x8x8xf32>
    %391 = math.exp %390 : vector<2x8x8xf32>
    %cst_179 = arith.constant dense<0.000000e+00> : vector<2x8xf32>
    %392 = vector.multi_reduction <add>, %391, %cst_179 [2] : vector<2x8x8xf32> to vector<2x8xf32>
    %393 = vector.shape_cast %392 : vector<2x8xf32> to vector<2x8x1xf32>
    %394 = vector.broadcast %393 : vector<2x8x1xf32> to vector<2x8x8xf32>
    %395 = arith.divf %391, %394 : vector<2x8x8xf32>
    %396 = arith.truncf %395 : vector<2x8x8xf32> to vector<2x8x8xbf16>
    %cst_180 = arith.constant dense<0.000000e+00> : vector<2x8x16xf32>
    %397 = tpu.matmul %396, %381, %cst_180 {dimension_numbers = #tpu.dot_dimension_numbers<[2], [1], [1], [2], [0, 0, 0, 1, 1, 2], [0], [0]>} : vector<2x8x8xbf16>, vector<2x8x16xbf16>, vector<2x8x16xf32> -> vector<2x8x16xf32>
    %c0_181 = arith.constant 0 : index
    %c0_182 = arith.constant 0 : index
    %c16_183 = arith.constant 16 : index
    %398 = vector.load %arg19[%c0_181, %c0_182, %c16_183] : memref<2x8x32xf32, #tpu.memory_space<vmem>>, vector<2x8x16xf32>
    tpu.vector_store %arg19[%c0_181, %c0_182, %c16_183], %397 {strides = array<i32>} : memref<2x8x32xf32, #tpu.memory_space<vmem>>, vector<2x8x16xf32>,
    %c0_184 = arith.constant 0 : index
    %c0_185 = arith.constant 0 : index
    %c0_186 = arith.constant 0 : index
    %399 = vector.load %arg19[%c0_184, %c0_185, %c0_186] : memref<2x8x32xf32, #tpu.memory_space<vmem>>, vector<2x8x32xf32>
    %c2_187 = arith.constant 2 : index
    %c0_188 = arith.constant 0 : index
    %c0_189 = arith.constant 0 : index
    %400 = vector.load %arg6[%c2_187, %c0_188, %c0_189] : memref<4x32x32xbf16, #tpu.memory_space<vmem>>, vector<1x32x32xbf16>
    %401 = vector.shape_cast %400 : vector<1x32x32xbf16> to vector<32x32xbf16>
    %402 = arith.truncf %399 : vector<2x8x32xf32> to vector<2x8x32xbf16>
    %cst_190 = arith.constant dense<0.000000e+00> : vector<2x8x32xf32>
    %403 = tpu.matmul %402, %401, %cst_190 {dimension_numbers = #tpu.dot_dimension_numbers<[2], [0], [0, 1], [1], [0, 0, 0, 1, 1, 1], [], []>} : vector<2x8x32xbf16>, vector<32x32xbf16>, vector<2x8x32xf32> -> vector<2x8x32xf32>
    %c2_191 = arith.constant 2 : index
    %c0_192 = arith.constant 0 : index
    %c0_193 = arith.constant 0 : index
    %404 = vector.load %arg7[%c2_191, %c0_192, %c0_193] : memref<4x1x32xf32, #tpu.memory_space<vmem>>, vector<1x1x32xf32>
    %405 = vector.shape_cast %404 : vector<1x1x32xf32> to vector<1x32xf32>
    %406 = vector.shape_cast %405 : vector<1x32xf32> to vector<1x1x32xf32>
    %407 = vector.broadcast %406 : vector<1x1x32xf32> to vector<2x8x32xf32>
    %408 = arith.addf %403, %407 : vector<2x8x32xf32>
    %409 = arith.addf %408, %340 : vector<2x8x32xf32>
    %c2_194 = arith.constant 2 : index
    %c0_195 = arith.constant 0 : index
    %c0_196 = arith.constant 0 : index
    %410 = vector.load %arg8[%c2_194, %c0_195, %c0_196] : memref<4x1x32xf32, #tpu.memory_space<vmem>>, vector<1x1x32xf32>
    %411 = vector.shape_cast %410 : vector<1x1x32xf32> to vector<1x32xf32>
    %c2_197 = arith.constant 2 : index
    %c0_198 = arith.constant 0 : index
    %c0_199 = arith.constant 0 : index
    %412 = vector.load %arg9[%c2_197, %c0_198, %c0_199] : memref<4x1x32xf32, #tpu.memory_space<vmem>>, vector<1x1x32xf32>
    %413 = vector.shape_cast %412 : vector<1x1x32xf32> to vector<1x32xf32>
    %cst_200 = arith.constant dense<0.000000e+00> : vector<2x8xf32>
    %414 = vector.multi_reduction <add>, %409, %cst_200 [2] : vector<2x8x32xf32> to vector<2x8xf32>
    %415 = vector.shape_cast %414 : vector<2x8xf32> to vector<2x8x1xf32>
    %cst_201 = arith.constant 3.200000e+01 : f32
    %416 = vector.broadcast %cst_201 : f32 to vector<2x8x1xf32>
    %417 = arith.divf %415, %416 : vector<2x8x1xf32>
    %418 = vector.broadcast %417 : vector<2x8x1xf32> to vector<2x8x32xf32>
    %419 = arith.subf %409, %418 : vector<2x8x32xf32>
    %420 = arith.mulf %419, %419 : vector<2x8x32xf32>
    %cst_202 = arith.constant dense<0.000000e+00> : vector<2x8xf32>
    %421 = vector.multi_reduction <add>, %420, %cst_202 [2] : vector<2x8x32xf32> to vector<2x8xf32>
    %422 = vector.shape_cast %421 : vector<2x8xf32> to vector<2x8x1xf32>
    %cst_203 = arith.constant 3.200000e+01 : f32
    %423 = vector.broadcast %cst_203 : f32 to vector<2x8x1xf32>
    %424 = arith.divf %422, %423 : vector<2x8x1xf32>
    %425 = vector.broadcast %417 : vector<2x8x1xf32> to vector<2x8x32xf32>
    %426 = arith.subf %409, %425 : vector<2x8x32xf32>
    %cst_204 = arith.constant 9.99999974E-6 : f32
    %427 = vector.broadcast %cst_204 : f32 to vector<2x8x1xf32>
    %428 = arith.addf %424, %427 : vector<2x8x1xf32>
    %429 = math.rsqrt %428 : vector<2x8x1xf32>
    %430 = vector.broadcast %429 : vector<2x8x1xf32> to vector<2x8x32xf32>
    %431 = arith.mulf %426, %430 : vector<2x8x32xf32>
    %432 = vector.shape_cast %411 : vector<1x32xf32> to vector<1x1x32xf32>
    %433 = vector.broadcast %432 : vector<1x1x32xf32> to vector<2x8x32xf32>
    %434 = arith.mulf %431, %433 : vector<2x8x32xf32>
    %435 = vector.shape_cast %413 : vector<1x32xf32> to vector<1x1x32xf32>
    %436 = vector.broadcast %435 : vector<1x1x32xf32> to vector<2x8x32xf32>
    %437 = arith.addf %434, %436 : vector<2x8x32xf32>
    %c2_205 = arith.constant 2 : index
    %c0_206 = arith.constant 0 : index
    %c0_207 = arith.constant 0 : index
    %438 = vector.load %arg10[%c2_205, %c0_206, %c0_207] : memref<4x32x64xbf16, #tpu.memory_space<vmem>>, vector<1x32x64xbf16>
    %439 = vector.shape_cast %438 : vector<1x32x64xbf16> to vector<32x64xbf16>
    %440 = arith.truncf %437 : vector<2x8x32xf32> to vector<2x8x32xbf16>
    %cst_208 = arith.constant dense<0.000000e+00> : vector<2x8x64xf32>
    %441 = tpu.matmul %440, %439, %cst_208 {dimension_numbers = #tpu.dot_dimension_numbers<[2], [0], [0, 1], [1], [0, 0, 0, 1, 1, 1], [], []>} : vector<2x8x32xbf16>, vector<32x64xbf16>, vector<2x8x64xf32> -> vector<2x8x64xf32>
    %c2_209 = arith.constant 2 : index
    %c0_210 = arith.constant 0 : index
    %c0_211 = arith.constant 0 : index
    %442 = vector.load %arg11[%c2_209, %c0_210, %c0_211] : memref<4x1x64xf32, #tpu.memory_space<vmem>>, vector<1x1x64xf32>
    %443 = vector.shape_cast %442 : vector<1x1x64xf32> to vector<1x64xf32>
    %444 = vector.shape_cast %443 : vector<1x64xf32> to vector<1x1x64xf32>
    %445 = vector.broadcast %444 : vector<1x1x64xf32> to vector<2x8x64xf32>
    %446 = arith.addf %441, %445 : vector<2x8x64xf32>
    %447 = arith.mulf %446, %446 : vector<2x8x64xf32>
    %448 = arith.mulf %446, %447 : vector<2x8x64xf32>
    %cst_212 = arith.constant 4.471500e-02 : f32
    %449 = vector.broadcast %cst_212 : f32 to vector<2x8x64xf32>
    %450 = arith.mulf %449, %448 : vector<2x8x64xf32>
    %451 = arith.addf %446, %450 : vector<2x8x64xf32>
    %cst_213 = arith.constant 0.797884583 : f32
    %452 = vector.broadcast %cst_213 : f32 to vector<2x8x64xf32>
    %453 = arith.mulf %452, %451 : vector<2x8x64xf32>
    %454 = math.tanh %453 : vector<2x8x64xf32>
    %cst_214 = arith.constant 1.000000e+00 : f32
    %455 = vector.broadcast %cst_214 : f32 to vector<2x8x64xf32>
    %456 = arith.addf %455, %454 : vector<2x8x64xf32>
    %cst_215 = arith.constant 5.000000e-01 : f32
    %457 = vector.broadcast %cst_215 : f32 to vector<2x8x64xf32>
    %458 = arith.mulf %457, %456 : vector<2x8x64xf32>
    %459 = arith.mulf %446, %458 : vector<2x8x64xf32>
    %c2_216 = arith.constant 2 : index
    %c0_217 = arith.constant 0 : index
    %c0_218 = arith.constant 0 : index
    %460 = vector.load %arg12[%c2_216, %c0_217, %c0_218] : memref<4x64x32xbf16, #tpu.memory_space<vmem>>, vector<1x64x32xbf16>
    %461 = vector.shape_cast %460 : vector<1x64x32xbf16> to vector<64x32xbf16>
    %462 = arith.truncf %459 : vector<2x8x64xf32> to vector<2x8x64xbf16>
    %cst_219 = arith.constant dense<0.000000e+00> : vector<2x8x32xf32>
    %463 = tpu.matmul %462, %461, %cst_219 {dimension_numbers = #tpu.dot_dimension_numbers<[2], [0], [0, 1], [1], [0, 0, 0, 1, 1, 1], [], []>} : vector<2x8x64xbf16>, vector<64x32xbf16>, vector<2x8x32xf32> -> vector<2x8x32xf32>
    %c2_220 = arith.constant 2 : index
    %c0_221 = arith.constant 0 : index
    %c0_222 = arith.constant 0 : index
    %464 = vector.load %arg13[%c2_220, %c0_221, %c0_222] : memref<4x1x32xf32, #tpu.memory_space<vmem>>, vector<1x1x32xf32>
    %465 = vector.shape_cast %464 : vector<1x1x32xf32> to vector<1x32xf32>
    %466 = vector.shape_cast %465 : vector<1x32xf32> to vector<1x1x32xf32>
    %467 = vector.broadcast %466 : vector<1x1x32xf32> to vector<2x8x32xf32>
    %468 = arith.addf %463, %467 : vector<2x8x32xf32>
    %469 = arith.addf %468, %437 : vector<2x8x32xf32>
    %c2_223 = arith.constant 2 : index
    %c0_224 = arith.constant 0 : index
    %c0_225 = arith.constant 0 : index
    %470 = vector.load %arg14[%c2_223, %c0_224, %c0_225] : memref<4x1x32xf32, #tpu.memory_space<vmem>>, vector<1x1x32xf32>
    %471 = vector.shape_cast %470 : vector<1x1x32xf32> to vector<1x32xf32>
    %c2_226 = arith.constant 2 : index
    %c0_227 = arith.constant 0 : index
    %c0_228 = arith.constant 0 : index
    %472 = vector.load %arg15[%c2_226, %c0_227, %c0_228] : memref<4x1x32xf32, #tpu.memory_space<vmem>>, vector<1x1x32xf32>
    %473 = vector.shape_cast %472 : vector<1x1x32xf32> to vector<1x32xf32>
    %cst_229 = arith.constant dense<0.000000e+00> : vector<2x8xf32>
    %474 = vector.multi_reduction <add>, %469, %cst_229 [2] : vector<2x8x32xf32> to vector<2x8xf32>
    %475 = vector.shape_cast %474 : vector<2x8xf32> to vector<2x8x1xf32>
    %cst_230 = arith.constant 3.200000e+01 : f32
    %476 = vector.broadcast %cst_230 : f32 to vector<2x8x1xf32>
    %477 = arith.divf %475, %476 : vector<2x8x1xf32>
    %478 = vector.broadcast %477 : vector<2x8x1xf32> to vector<2x8x32xf32>
    %479 = arith.subf %469, %478 : vector<2x8x32xf32>
    %480 = arith.mulf %479, %479 : vector<2x8x32xf32>
    %cst_231 = arith.constant dense<0.000000e+00> : vector<2x8xf32>
    %481 = vector.multi_reduction <add>, %480, %cst_231 [2] : vector<2x8x32xf32> to vector<2x8xf32>
    %482 = vector.shape_cast %481 : vector<2x8xf32> to vector<2x8x1xf32>
    %cst_232 = arith.constant 3.200000e+01 : f32
    %483 = vector.broadcast %cst_232 : f32 to vector<2x8x1xf32>
    %484 = arith.divf %482, %483 : vector<2x8x1xf32>
    %485 = vector.broadcast %477 : vector<2x8x1xf32> to vector<2x8x32xf32>
    %486 = arith.subf %469, %485 : vector<2x8x32xf32>
    %cst_233 = arith.constant 9.99999974E-6 : f32
    %487 = vector.broadcast %cst_233 : f32 to vector<2x8x1xf32>
    %488 = arith.addf %484, %487 : vector<2x8x1xf32>
    %489 = math.rsqrt %488 : vector<2x8x1xf32>
    %490 = vector.broadcast %489 : vector<2x8x1xf32> to vector<2x8x32xf32>
    %491 = arith.mulf %486, %490 : vector<2x8x32xf32>
    %492 = vector.shape_cast %471 : vector<1x32xf32> to vector<1x1x32xf32>
    %493 = vector.broadcast %492 : vector<1x1x32xf32> to vector<2x8x32xf32>
    %494 = arith.mulf %491, %493 : vector<2x8x32xf32>
    %495 = vector.shape_cast %473 : vector<1x32xf32> to vector<1x1x32xf32>
    %496 = vector.broadcast %495 : vector<1x1x32xf32> to vector<2x8x32xf32>
    %497 = arith.addf %494, %496 : vector<2x8x32xf32>
    %498 = vector.extract_strided_slice %497 {offsets = [0, 0, 0], sizes = [2, 1, 32], strides = [1, 1, 1]} : vector<2x8x32xf32> to vector<2x1x32xf32>
    %499 = vector.shape_cast %498 : vector<2x1x32xf32> to vector<2x32xf32>
    %c0_234 = arith.constant 0 : index
    %c32 = arith.constant 32 : index
    %500 = vector.load %arg20[%c0_234, %c32] : memref<2x128xf32, #tpu.memory_space<vmem>>, vector<2x32xf32>
    tpu.vector_store %arg20[%c0_234, %c32], %499 {strides = array<i32>} : memref<2x128xf32, #tpu.memory_space<vmem>>, vector<2x32xf32>,
    %c3 = arith.constant 3 : index
    %c0_235 = arith.constant 0 : index
    %c0_236 = arith.constant 0 : index
    %501 = vector.load %arg4[%c3, %c0_235, %c0_236] : memref<4x32x96xbf16, #tpu.memory_space<vmem>>, vector<1x32x96xbf16>
    %502 = vector.shape_cast %501 : vector<1x32x96xbf16> to vector<32x96xbf16>
    %503 = arith.truncf %497 : vector<2x8x32xf32> to vector<2x8x32xbf16>
    %cst_237 = arith.constant dense<0.000000e+00> : vector<2x8x96xf32>
    %504 = tpu.matmul %503, %502, %cst_237 {dimension_numbers = #tpu.dot_dimension_numbers<[2], [0], [0, 1], [1], [0, 0, 0, 1, 1, 1], [], []>} : vector<2x8x32xbf16>, vector<32x96xbf16>, vector<2x8x96xf32> -> vector<2x8x96xf32>
    %c3_238 = arith.constant 3 : index
    %c0_239 = arith.constant 0 : index
    %c0_240 = arith.constant 0 : index
    %505 = vector.load %arg5[%c3_238, %c0_239, %c0_240] : memref<4x1x96xf32, #tpu.memory_space<vmem>>, vector<1x1x96xf32>
    %506 = vector.shape_cast %505 : vector<1x1x96xf32> to vector<1x96xf32>
    %507 = vector.shape_cast %506 : vector<1x96xf32> to vector<1x1x96xf32>
    %508 = vector.broadcast %507 : vector<1x1x96xf32> to vector<2x8x96xf32>
    %509 = arith.addf %504, %508 : vector<2x8x96xf32>
    %510 = vector.extract_strided_slice %509 {offsets = [0, 0, 0], sizes = [2, 8, 16], strides = [1, 1, 1]} : vector<2x8x96xf32> to vector<2x8x16xf32>
    %511 = arith.truncf %510 : vector<2x8x16xf32> to vector<2x8x16xbf16>
    %512 = vector.extract_strided_slice %509 {offsets = [0, 0, 32], sizes = [2, 8, 16], strides = [1, 1, 1]} : vector<2x8x96xf32> to vector<2x8x16xf32>
    %513 = arith.truncf %512 : vector<2x8x16xf32> to vector<2x8x16xbf16>
    %514 = vector.extract_strided_slice %509 {offsets = [0, 0, 64], sizes = [2, 8, 16], strides = [1, 1, 1]} : vector<2x8x96xf32> to vector<2x8x16xf32>
    %515 = arith.truncf %514 : vector<2x8x16xf32> to vector<2x8x16xbf16>
    %cst_241 = arith.constant dense<0.000000e+00> : vector<2x8x8xf32>
    %516 = tpu.matmul %511, %513, %cst_241 {dimension_numbers = #tpu.dot_dimension_numbers<[2], [2], [1], [1], [0, 0, 0, 1, 1, 1], [0], [0]>} : vector<2x8x16xbf16>, vector<2x8x16xbf16>, vector<2x8x8xf32> -> vector<2x8x8xf32>
    %cst_242 = arith.constant 2.500000e-01 : f32
    %517 = vector.broadcast %cst_242 : f32 to vector<2x8x8xf32>
    %518 = arith.mulf %516, %517 : vector<2x8x8xf32>
    %519 = vector.broadcast %0 : vector<2x1x8xf32> to vector<2x8x8xf32>
    %520 = arith.addf %518, %519 : vector<2x8x8xf32>
    %cst_243 = arith.constant dense<0xFF800000> : vector<2x8xf32>
    %521 = vector.multi_reduction <maximumf>, %520, %cst_243 [2] : vector<2x8x8xf32> to vector<2x8xf32>
    %522 = vector.shape_cast %521 : vector<2x8xf32> to vector<2x8x1xf32>
    %523 = vector.broadcast %522 : vector<2x8x1xf32> to vector<2x8x8xf32>
    %524 = arith.subf %520, %523 : vector<2x8x8xf32>
    %525 = math.exp %524 : vector<2x8x8xf32>
    %cst_244 = arith.constant dense<0.000000e+00> : vector<2x8xf32>
    %526 = vector.multi_reduction <add>, %525, %cst_244 [2] : vector<2x8x8xf32> to vector<2x8xf32>
    %527 = vector.shape_cast %526 : vector<2x8xf32> to vector<2x8x1xf32>
    %528 = vector.broadcast %527 : vector<2x8x1xf32> to vector<2x8x8xf32>
    %529 = arith.divf %525, %528 : vector<2x8x8xf32>
    %530 = arith.truncf %529 : vector<2x8x8xf32> to vector<2x8x8xbf16>
    %cst_245 = arith.constant dense<0.000000e+00> : vector<2x8x16xf32>
    %531 = tpu.matmul %530, %515, %cst_245 {dimension_numbers = #tpu.dot_dimension_numbers<[2], [1], [1], [2], [0, 0, 0, 1, 1, 2], [0], [0]>} : vector<2x8x8xbf16>, vector<2x8x16xbf16>, vector<2x8x16xf32> -> vector<2x8x16xf32>
    %c0_246 = arith.constant 0 : index
    %c0_247 = arith.constant 0 : index
    %c0_248 = arith.constant 0 : index
    %532 = vector.load %arg19[%c0_246, %c0_247, %c0_248] : memref<2x8x32xf32, #tpu.memory_space<vmem>>, vector<2x8x16xf32>
    tpu.vector_store %arg19[%c0_246, %c0_247, %c0_248], %531 {strides = array<i32>} : memref<2x8x32xf32, #tpu.memory_space<vmem>>, vector<2x8x16xf32>,
    %533 = vector.extract_strided_slice %509 {offsets = [0, 0, 16], sizes = [2, 8, 16], strides = [1, 1, 1]} : vector<2x8x96xf32> to vector<2x8x16xf32>
    %534 = arith.truncf %533 : vector<2x8x16xf32> to vector<2x8x16xbf16>
    %535 = vector.extract_strided_slice %509 {offsets = [0, 0, 48], sizes = [2, 8, 16], strides = [1, 1, 1]} : vector<2x8x96xf32> to vector<2x8x16xf32>
    %536 = arith.truncf %535 : vector<2x8x16xf32> to vector<2x8x16xbf16>
    %537 = vector.extract_strided_slice %509 {offsets = [0, 0, 80], sizes = [2, 8, 16], strides = [1, 1, 1]} : vector<2x8x96xf32> to vector<2x8x16xf32>
    %538 = arith.truncf %537 : vector<2x8x16xf32> to vector<2x8x16xbf16>
    %cst_249 = arith.constant dense<0.000000e+00> : vector<2x8x8xf32>
    %539 = tpu.matmul %534, %536, %cst_249 {dimension_numbers = #tpu.dot_dimension_numbers<[2], [2], [1], [1], [0, 0, 0, 1, 1, 1], [0], [0]>} : vector<2x8x16xbf16>, vector<2x8x16xbf16>, vector<2x8x8xf32> -> vector<2x8x8xf32>
    %cst_250 = arith.constant 2.500000e-01 : f32
    %540 = vector.broadcast %cst_250 : f32 to vector<2x8x8xf32>
    %541 = arith.mulf %539, %540 : vector<2x8x8xf32>
    %542 = vector.broadcast %0 : vector<2x1x8xf32> to vector<2x8x8xf32>
    %543 = arith.addf %541, %542 : vector<2x8x8xf32>
    %cst_251 = arith.constant dense<0xFF800000> : vector<2x8xf32>
    %544 = vector.multi_reduction <maximumf>, %543, %cst_251 [2] : vector<2x8x8xf32> to vector<2x8xf32>
    %545 = vector.shape_cast %544 : vector<2x8xf32> to vector<2x8x1xf32>
    %546 = vector.broadcast %545 : vector<2x8x1xf32> to vector<2x8x8xf32>
    %547 = arith.subf %543, %546 : vector<2x8x8xf32>
    %548 = math.exp %547 : vector<2x8x8xf32>
    %cst_252 = arith.constant dense<0.000000e+00> : vector<2x8xf32>
    %549 = vector.multi_reduction <add>, %548, %cst_252 [2] : vector<2x8x8xf32> to vector<2x8xf32>
    %550 = vector.shape_cast %549 : vector<2x8xf32> to vector<2x8x1xf32>
    %551 = vector.broadcast %550 : vector<2x8x1xf32> to vector<2x8x8xf32>
    %552 = arith.divf %548, %551 : vector<2x8x8xf32>
    %553 = arith.truncf %552 : vector<2x8x8xf32> to vector<2x8x8xbf16>
    %cst_253 = arith.constant dense<0.000000e+00> : vector<2x8x16xf32>
    %554 = tpu.matmul %553, %538, %cst_253 {dimension_numbers = #tpu.dot_dimension_numbers<[2], [1], [1], [2], [0, 0, 0, 1, 1, 2], [0], [0]>} : vector<2x8x8xbf16>, vector<2x8x16xbf16>, vector<2x8x16xf32> -> vector<2x8x16xf32>
    %c0_254 = arith.constant 0 : index
    %c0_255 = arith.constant 0 : index
    %c16_256 = arith.constant 16 : index
    %555 = vector.load %arg19[%c0_254, %c0_255, %c16_256] : memref<2x8x32xf32, #tpu.memory_space<vmem>>, vector<2x8x16xf32>
    tpu.vector_store %arg19[%c0_254, %c0_255, %c16_256], %554 {strides = array<i32>} : memref<2x8x32xf32, #tpu.memory_space<vmem>>, vector<2x8x16xf32>,
    %c0_257 = arith.constant 0 : index
    %c0_258 = arith.constant 0 : index
    %c0_259 = arith.constant 0 : index
    %556 = vector.load %arg19[%c0_257, %c0_258, %c0_259] : memref<2x8x32xf32, #tpu.memory_space<vmem>>, vector<2x8x32xf32>
    %c3_260 = arith.constant 3 : index
    %c0_261 = arith.constant 0 : index
    %c0_262 = arith.constant 0 : index
    %557 = vector.load %arg6[%c3_260, %c0_261, %c0_262] : memref<4x32x32xbf16, #tpu.memory_space<vmem>>, vector<1x32x32xbf16>
    %558 = vector.shape_cast %557 : vector<1x32x32xbf16> to vector<32x32xbf16>
    %559 = arith.truncf %556 : vector<2x8x32xf32> to vector<2x8x32xbf16>
    %cst_263 = arith.constant dense<0.000000e+00> : vector<2x8x32xf32>
    %560 = tpu.matmul %559, %558, %cst_263 {dimension_numbers = #tpu.dot_dimension_numbers<[2], [0], [0, 1], [1], [0, 0, 0, 1, 1, 1], [], []>} : vector<2x8x32xbf16>, vector<32x32xbf16>, vector<2x8x32xf32> -> vector<2x8x32xf32>
    %c3_264 = arith.constant 3 : index
    %c0_265 = arith.constant 0 : index
    %c0_266 = arith.constant 0 : index
    %561 = vector.load %arg7[%c3_264, %c0_265, %c0_266] : memref<4x1x32xf32, #tpu.memory_space<vmem>>, vector<1x1x32xf32>
    %562 = vector.shape_cast %561 : vector<1x1x32xf32> to vector<1x32xf32>
    %563 = vector.shape_cast %562 : vector<1x32xf32> to vector<1x1x32xf32>
    %564 = vector.broadcast %563 : vector<1x1x32xf32> to vector<2x8x32xf32>
    %565 = arith.addf %560, %564 : vector<2x8x32xf32>
    %566 = arith.addf %565, %497 : vector<2x8x32xf32>
    %c3_267 = arith.constant 3 : index
    %c0_268 = arith.constant 0 : index
    %c0_269 = arith.constant 0 : index
    %567 = vector.load %arg8[%c3_267, %c0_268, %c0_269] : memref<4x1x32xf32, #tpu.memory_space<vmem>>, vector<1x1x32xf32>
    %568 = vector.shape_cast %567 : vector<1x1x32xf32> to vector<1x32xf32>
    %c3_270 = arith.constant 3 : index
    %c0_271 = arith.constant 0 : index
    %c0_272 = arith.constant 0 : index
    %569 = vector.load %arg9[%c3_270, %c0_271, %c0_272] : memref<4x1x32xf32, #tpu.memory_space<vmem>>, vector<1x1x32xf32>
    %570 = vector.shape_cast %569 : vector<1x1x32xf32> to vector<1x32xf32>
    %cst_273 = arith.constant dense<0.000000e+00> : vector<2x8xf32>
    %571 = vector.multi_reduction <add>, %566, %cst_273 [2] : vector<2x8x32xf32> to vector<2x8xf32>
    %572 = vector.shape_cast %571 : vector<2x8xf32> to vector<2x8x1xf32>
    %cst_274 = arith.constant 3.200000e+01 : f32
    %573 = vector.broadcast %cst_274 : f32 to vector<2x8x1xf32>
    %574 = arith.divf %572, %573 : vector<2x8x1xf32>
    %575 = vector.broadcast %574 : vector<2x8x1xf32> to vector<2x8x32xf32>
    %576 = arith.subf %566, %575 : vector<2x8x32xf32>
    %577 = arith.mulf %576, %576 : vector<2x8x32xf32>
    %cst_275 = arith.constant dense<0.000000e+00> : vector<2x8xf32>
    %578 = vector.multi_reduction <add>, %577, %cst_275 [2] : vector<2x8x32xf32> to vector<2x8xf32>
    %579 = vector.shape_cast %578 : vector<2x8xf32> to vector<2x8x1xf32>
    %cst_276 = arith.constant 3.200000e+01 : f32
    %580 = vector.broadcast %cst_276 : f32 to vector<2x8x1xf32>
    %581 = arith.divf %579, %580 : vector<2x8x1xf32>
    %582 = vector.broadcast %574 : vector<2x8x1xf32> to vector<2x8x32xf32>
    %583 = arith.subf %566, %582 : vector<2x8x32xf32>
    %cst_277 = arith.constant 9.99999974E-6 : f32
    %584 = vector.broadcast %cst_277 : f32 to vector<2x8x1xf32>
    %585 = arith.addf %581, %584 : vector<2x8x1xf32>
    %586 = math.rsqrt %585 : vector<2x8x1xf32>
    %587 = vector.broadcast %586 : vector<2x8x1xf32> to vector<2x8x32xf32>
    %588 = arith.mulf %583, %587 : vector<2x8x32xf32>
    %589 = vector.shape_cast %568 : vector<1x32xf32> to vector<1x1x32xf32>
    %590 = vector.broadcast %589 : vector<1x1x32xf32> to vector<2x8x32xf32>
    %591 = arith.mulf %588, %590 : vector<2x8x32xf32>
    %592 = vector.shape_cast %570 : vector<1x32xf32> to vector<1x1x32xf32>
    %593 = vector.broadcast %592 : vector<1x1x32xf32> to vector<2x8x32xf32>
    %594 = arith.addf %591, %593 : vector<2x8x32xf32>
    %c3_278 = arith.constant 3 : index
    %c0_279 = arith.constant 0 : index
    %c0_280 = arith.constant 0 : index
    %595 = vector.load %arg10[%c3_278, %c0_279, %c0_280] : memref<4x32x64xbf16, #tpu.memory_space<vmem>>, vector<1x32x64xbf16>
    %596 = vector.shape_cast %595 : vector<1x32x64xbf16> to vector<32x64xbf16>
    %597 = arith.truncf %594 : vector<2x8x32xf32> to vector<2x8x32xbf16>
    %cst_281 = arith.constant dense<0.000000e+00> : vector<2x8x64xf32>
    %598 = tpu.matmul %597, %596, %cst_281 {dimension_numbers = #tpu.dot_dimension_numbers<[2], [0], [0, 1], [1], [0, 0, 0, 1, 1, 1], [], []>} : vector<2x8x32xbf16>, vector<32x64xbf16>, vector<2x8x64xf32> -> vector<2x8x64xf32>
    %c3_282 = arith.constant 3 : index
    %c0_283 = arith.constant 0 : index
    %c0_284 = arith.constant 0 : index
    %599 = vector.load %arg11[%c3_282, %c0_283, %c0_284] : memref<4x1x64xf32, #tpu.memory_space<vmem>>, vector<1x1x64xf32>
    %600 = vector.shape_cast %599 : vector<1x1x64xf32> to vector<1x64xf32>
    %601 = vector.shape_cast %600 : vector<1x64xf32> to vector<1x1x64xf32>
    %602 = vector.broadcast %601 : vector<1x1x64xf32> to vector<2x8x64xf32>
    %603 = arith.addf %598, %602 : vector<2x8x64xf32>
    %604 = arith.mulf %603, %603 : vector<2x8x64xf32>
    %605 = arith.mulf %603, %604 : vector<2x8x64xf32>
    %cst_285 = arith.constant 4.471500e-02 : f32
    %606 = vector.broadcast %cst_285 : f32 to vector<2x8x64xf32>
    %607 = arith.mulf %606, %605 : vector<2x8x64xf32>
    %608 = arith.addf %603, %607 : vector<2x8x64xf32>
    %cst_286 = arith.constant 0.797884583 : f32
    %609 = vector.broadcast %cst_286 : f32 to vector<2x8x64xf32>
    %610 = arith.mulf %609, %608 : vector<2x8x64xf32>
    %611 = math.tanh %610 : vector<2x8x64xf32>
    %cst_287 = arith.constant 1.000000e+00 : f32
    %612 = vector.broadcast %cst_287 : f32 to vector<2x8x64xf32>
    %613 = arith.addf %612, %611 : vector<2x8x64xf32>
    %cst_288 = arith.constant 5.000000e-01 : f32
    %614 = vector.broadcast %cst_288 : f32 to vector<2x8x64xf32>
    %615 = arith.mulf %614, %613 : vector<2x8x64xf32>
    %616 = arith.mulf %603, %615 : vector<2x8x64xf32>
    %c3_289 = arith.constant 3 : index
    %c0_290 = arith.constant 0 : index
    %c0_291 = arith.constant 0 : index
    %617 = vector.load %arg12[%c3_289, %c0_290, %c0_291] : memref<4x64x32xbf16, #tpu.memory_space<vmem>>, vector<1x64x32xbf16>
    %618 = vector.shape_cast %617 : vector<1x64x32xbf16> to vector<64x32xbf16>
    %619 = arith.truncf %616 : vector<2x8x64xf32> to vector<2x8x64xbf16>
    %cst_292 = arith.constant dense<0.000000e+00> : vector<2x8x32xf32>
    %620 = tpu.matmul %619, %618, %cst_292 {dimension_numbers = #tpu.dot_dimension_numbers<[2], [0], [0, 1], [1], [0, 0, 0, 1, 1, 1], [], []>} : vector<2x8x64xbf16>, vector<64x32xbf16>, vector<2x8x32xf32> -> vector<2x8x32xf32>
    %c3_293 = arith.constant 3 : index
    %c0_294 = arith.constant 0 : index
    %c0_295 = arith.constant 0 : index
    %621 = vector.load %arg13[%c3_293, %c0_294, %c0_295] : memref<4x1x32xf32, #tpu.memory_space<vmem>>, vector<1x1x32xf32>
    %622 = vector.shape_cast %621 : vector<1x1x32xf32> to vector<1x32xf32>
    %623 = vector.shape_cast %622 : vector<1x32xf32> to vector<1x1x32xf32>
    %624 = vector.broadcast %623 : vector<1x1x32xf32> to vector<2x8x32xf32>
    %625 = arith.addf %620, %624 : vector<2x8x32xf32>
    %626 = arith.addf %625, %594 : vector<2x8x32xf32>
    %c3_296 = arith.constant 3 : index
    %c0_297 = arith.constant 0 : index
    %c0_298 = arith.constant 0 : index
    %627 = vector.load %arg14[%c3_296, %c0_297, %c0_298] : memref<4x1x32xf32, #tpu.memory_space<vmem>>, vector<1x1x32xf32>
    %628 = vector.shape_cast %627 : vector<1x1x32xf32> to vector<1x32xf32>
    %c3_299 = arith.constant 3 : index
    %c0_300 = arith.constant 0 : index
    %c0_301 = arith.constant 0 : index
    %629 = vector.load %arg15[%c3_299, %c0_300, %c0_301] : memref<4x1x32xf32, #tpu.memory_space<vmem>>, vector<1x1x32xf32>
    %630 = vector.shape_cast %629 : vector<1x1x32xf32> to vector<1x32xf32>
    %cst_302 = arith.constant dense<0.000000e+00> : vector<2x8xf32>
    %631 = vector.multi_reduction <add>, %626, %cst_302 [2] : vector<2x8x32xf32> to vector<2x8xf32>
    %632 = vector.shape_cast %631 : vector<2x8xf32> to vector<2x8x1xf32>
    %cst_303 = arith.constant 3.200000e+01 : f32
    %633 = vector.broadcast %cst_303 : f32 to vector<2x8x1xf32>
    %634 = arith.divf %632, %633 : vector<2x8x1xf32>
    %635 = vector.broadcast %634 : vector<2x8x1xf32> to vector<2x8x32xf32>
    %636 = arith.subf %626, %635 : vector<2x8x32xf32>
    %637 = arith.mulf %636, %636 : vector<2x8x32xf32>
    %cst_304 = arith.constant dense<0.000000e+00> : vector<2x8xf32>
    %638 = vector.multi_reduction <add>, %637, %cst_304 [2] : vector<2x8x32xf32> to vector<2x8xf32>
    %639 = vector.shape_cast %638 : vector<2x8xf32> to vector<2x8x1xf32>
    %cst_305 = arith.constant 3.200000e+01 : f32
    %640 = vector.broadcast %cst_305 : f32 to vector<2x8x1xf32>
    %641 = arith.divf %639, %640 : vector<2x8x1xf32>
    %642 = vector.broadcast %634 : vector<2x8x1xf32> to vector<2x8x32xf32>
    %643 = arith.subf %626, %642 : vector<2x8x32xf32>
    %cst_306 = arith.constant 9.99999974E-6 : f32
    %644 = vector.broadcast %cst_306 : f32 to vector<2x8x1xf32>
    %645 = arith.addf %641, %644 : vector<2x8x1xf32>
    %646 = math.rsqrt %645 : vector<2x8x1xf32>
    %647 = vector.broadcast %646 : vector<2x8x1xf32> to vector<2x8x32xf32>
    %648 = arith.mulf %643, %647 : vector<2x8x32xf32>
    %649 = vector.shape_cast %628 : vector<1x32xf32> to vector<1x1x32xf32>
    %650 = vector.broadcast %649 : vector<1x1x32xf32> to vector<2x8x32xf32>
    %651 = arith.mulf %648, %650 : vector<2x8x32xf32>
    %652 = vector.shape_cast %630 : vector<1x32xf32> to vector<1x1x32xf32>
    %653 = vector.broadcast %652 : vector<1x1x32xf32> to vector<2x8x32xf32>
    %654 = arith.addf %651, %653 : vector<2x8x32xf32>
    %655 = vector.extract_strided_slice %654 {offsets = [0, 0, 0], sizes = [2, 1, 32], strides = [1, 1, 1]} : vector<2x8x32xf32> to vector<2x1x32xf32>
    %656 = vector.shape_cast %655 : vector<2x1x32xf32> to vector<2x32xf32>
    %c0_307 = arith.constant 0 : index
    %c0_308 = arith.constant 0 : index
    %657 = vector.load %arg20[%c0_307, %c0_308] : memref<2x128xf32, #tpu.memory_space<vmem>>, vector<2x32xf32>
    tpu.vector_store %arg20[%c0_307, %c0_308], %656 {strides = array<i32>} : memref<2x128xf32, #tpu.memory_space<vmem>>, vector<2x32xf32>,
    %c0_309 = arith.constant 0 : index
    %c0_310 = arith.constant 0 : index
    %658 = vector.load %arg20[%c0_309, %c0_310] : memref<2x128xf32, #tpu.memory_space<vmem>>, vector<2x128xf32>
    %c0_311 = arith.constant 0 : index
    %c0_312 = arith.constant 0 : index
    %659 = vector.load %arg16[%c0_311, %c0_312] : memref<128x128xbf16, #tpu.memory_space<vmem>>, vector<128x128xbf16>
    %660 = arith.truncf %658 : vector<2x128xf32> to vector<2x128xbf16>
    %cst_313 = arith.constant dense<0.000000e+00> : vector<2x128xf32>
    %661 = tpu.matmul %660, %659, %cst_313 {dimension_numbers = #tpu.dot_dimension_numbers<[1], [0], [0], [1], [0, 0, 1, 1], [], []>} : vector<2x128xbf16>, vector<128x128xbf16>, vector<2x128xf32> -> vector<2x128xf32>
    %c0_314 = arith.constant 0 : index
    %c0_315 = arith.constant 0 : index
    %662 = vector.load %arg17[%c0_314, %c0_315] : memref<1x128xf32, #tpu.memory_space<vmem>>, vector<1x128xf32>
    %663 = vector.broadcast %662 : vector<1x128xf32> to vector<2x128xf32>
    %664 = arith.addf %661, %663 : vector<2x128xf32>
    %c0_316 = arith.constant 0 : index
    %c0_317 = arith.constant 0 : index
    %665 = vector.load %arg18[%c0_316, %c0_317] : memref<2x128xf32, #tpu.memory_space<vmem>>, vector<2x128xf32>
    tpu.vector_store %arg18[%c0_316, %c0_317], %664 {strides = array<i32>} : memref<2x128xf32, #tpu.memory_space<vmem>>, vector<2x128xf32>,
    return
  }
}

</mosaic_0001>

<llo_original>
// kernel: forward.1
$region0: #{forward.1}
  #allocation0 [shape = 'u32[]', space=smem, size = 0x4, offset = 0x4, fixed_abs, tag = 'smem constant byte address 0x4 - core index']
  #allocation1 [shape = 'u32[72,128]{1,0:T(1,128)}', space=vmem, size = 0x9000, scoped, tag = 'internal scratch']
  #allocation2 [shape = 'f32[2,8,32]{2,1,0:T(8,128)}', space=vmem, size = 0x2000, scoped, tag = 'scratch operand']
  #allocation3 [shape = 'f32[2,128]{1,0:T(2,128)}', space=vmem, size = 0x400, scoped, tag = 'scratch operand']
  %s0 = inlined_call_operand.vmem [shape: f32[2,8,32], index: 0, kind: input, shape index: {}]
  %s1 = inlined_call_operand.vmem [shape: f32[2,1,8], index: 1, kind: input, shape index: {}]
  %s2 = inlined_call_operand.vmem [shape: f32[1,32], index: 2, kind: input, shape index: {}]
  %s3 = inlined_call_operand.vmem [shape: f32[1,32], index: 3, kind: input, shape index: {}]
  %s4 = inlined_call_operand.vmem [shape: bf16[4,32,96], index: 4, kind: input, shape index: {}]
  %s5 = inlined_call_operand.vmem [shape: f32[4,1,96], index: 5, kind: input, shape index: {}]
  %s6 = inlined_call_operand.vmem [shape: bf16[4,32,32], index: 6, kind: input, shape index: {}]
  %s7 = inlined_call_operand.vmem [shape: f32[4,1,32], index: 7, kind: input, shape index: {}]
  %s8 = inlined_call_operand.vmem [shape: f32[4,1,32], index: 8, kind: input, shape index: {}]
  %s9 = inlined_call_operand.vmem [shape: f32[4,1,32], index: 9, kind: input, shape index: {}]
  %s10 = inlined_call_operand.vmem [shape: bf16[4,32,64], index: 10, kind: input, shape index: {}]
  %s11 = inlined_call_operand.vmem [shape: f32[4,1,64], index: 11, kind: input, shape index: {}]
  %s12 = inlined_call_operand.vmem [shape: bf16[4,64,32], index: 12, kind: input, shape index: {}]
  %s13 = inlined_call_operand.vmem [shape: f32[4,1,32], index: 13, kind: input, shape index: {}]
  %s14 = inlined_call_operand.vmem [shape: f32[4,1,32], index: 14, kind: input, shape index: {}]
  %s15 = inlined_call_operand.vmem [shape: f32[4,1,32], index: 15, kind: input, shape index: {}]
  %s16 = inlined_call_operand.vmem [shape: bf16[128,128], index: 16, kind: input, shape index: {}]
  %s17 = inlined_call_operand.vmem [shape: f32[1,128], index: 17, kind: input, shape index: {}]
  %s18 = inlined_call_operand.hbm [shape: f32[2,128], index: 18, kind: output, shape index: {}]
  %s19 = sld [smem:[#allocation0]]
  $region82: #{forward.1} parent=0
    _
  %s21 = ssub.s32 1, %s19
  %s22 = scalar_select 0, %s21, %s19
  $region1: #{forward.1} parent=0
    #allocation4 [shape = 'u8[1024]{0}', space=vmem, size = 0x400, scoped, tag = 'output window, operand 0, single buffered']
    #allocation5 [shape = 's32[1]{0}', space=sflag, size = 0x4, scoped, tag = 'scoped memory for forward.1']
    %23 = vsyncpa [#allocation5], 0
    // Predicated region
    $region2: #{forward.1} parent=1 // pred_check
      _
    $region3: #{forward.1} parent=1 // pred_check_branch
      %25 = sbr.rel (0) target = $region5
    $region4: #{forward.1} parent=1 // pred_region
      _
    $region5: #{forward.1} parent=1 // pred_fallthru
      _
    // Predicated region
    $region6: #{forward.1} parent=1 // pred_check
      _
    $region7: #{forward.1} parent=1 // pred_check_branch
      %27 = sbr.rel (0) target = $region9
    $region8: #{forward.1} parent=1 // pred_region
      _
    $region9: #{forward.1} parent=1 // pred_fallthru
      _
    // Predicated region
    $region10: #{forward.1} parent=1 // pred_check
      _
    $region11: #{forward.1} parent=1 // pred_check_branch
      %29 = sbr.rel (0) target = $region13
    $region12: #{forward.1} parent=1 // pred_region
      _
    $region13: #{forward.1} parent=1 // pred_fallthru
      _
    // Predicated region
    $region14: #{forward.1} parent=1 // pred_check
      _
    $region15: #{forward.1} parent=1 // pred_check_branch
      %31 = sbr.rel (0) target = $region17
    $region16: #{forward.1} parent=1 // pred_region
      _
    $region17: #{forward.1} parent=1 // pred_fallthru
      _
    // Predicated region
    $region18: #{forward.1} parent=1 // pred_check
      _
    $region19: #{forward.1} parent=1 // pred_check_branch
      %33 = sbr.rel (0) target = $region21
    $region20: #{forward.1} parent=1 // pred_region
      _
    $region21: #{forward.1} parent=1 // pred_fallthru
      _
    // Predicated region
    $region22: #{forward.1} parent=1 // pred_check
      _
    $region23: #{forward.1} parent=1 // pred_check_branch
      %35 = sbr.rel (0) target = $region25
    $region24: #{forward.1} parent=1 // pred_region
      _
    $region25: #{forward.1} parent=1 // pred_fallthru
      _
    // Predicated region
    $region26: #{forward.1} parent=1 // pred_check
      _
    $region27: #{forward.1} parent=1 // pred_check_branch
      %37 = sbr.rel (0) target = $region29
    $region28: #{forward.1} parent=1 // pred_region
      _
    $region29: #{forward.1} parent=1 // pred_fallthru
      _
    // Predicated region
    $region30: #{forward.1} parent=1 // pred_check
      _
    $region31: #{forward.1} parent=1 // pred_check_branch
      %39 = sbr.rel (0) target = $region33
    $region32: #{forward.1} parent=1 // pred_region
      _
    $region33: #{forward.1} parent=1 // pred_fallthru
      _
    // Predicated region
    $region34: #{forward.1} parent=1 // pred_check
      _
    $region35: #{forward.1} parent=1 // pred_check_branch
      %41 = sbr.rel (0) target = $region37
    $region36: #{forward.1} parent=1 // pred_region
      _
    $region37: #{forward.1} parent=1 // pred_fallthru
      _
    // Predicated region
    $region38: #{forward.1} parent=1 // pred_check
      _
    $region39: #{forward.1} parent=1 // pred_check_branch
      %43 = sbr.rel (0) target = $region41
    $region40: #{forward.1} parent=1 // pred_region
      _
    $region41: #{forward.1} parent=1 // pred_fallthru
      _
    // Predicated region
    $region42: #{forward.1} parent=1 // pred_check
      _
    $region43: #{forward.1} parent=1 // pred_check_branch
      %45 = sbr.rel (0) target = $region45
    $region44: #{forward.1} parent=1 // pred_region
      _
    $region45: #{forward.1} parent=1 // pred_fallthru
      _
    // Predicated region
    $region46: #{forward.1} parent=1 // pred_check
      _
    $region47: #{forward.1} parent=1 // pred_check_branch
      %47 = sbr.rel (0) target = $region49
    $region48: #{forward.1} parent=1 // pred_region
      _
    $region49: #{forward.1} parent=1 // pred_fallthru
      _
    // Predicated region
    $region50: #{forward.1} parent=1 // pred_check
      _
    $region51: #{forward.1} parent=1 // pred_check_branch
      %49 = sbr.rel (0) target = $region53
    $region52: #{forward.1} parent=1 // pred_region
      _
    $region53: #{forward.1} parent=1 // pred_fallthru
      _
    // Predicated region
    $region54: #{forward.1} parent=1 // pred_check
      _
    $region55: #{forward.1} parent=1 // pred_check_branch
      %51 = sbr.rel (0) target = $region57
    $region56: #{forward.1} parent=1 // pred_region
      _
    $region57: #{forward.1} parent=1 // pred_fallthru
      _
    // Predicated region
    $region58: #{forward.1} parent=1 // pred_check
      _
    $region59: #{forward.1} parent=1 // pred_check_branch
      %53 = sbr.rel (0) target = $region61
    $region60: #{forward.1} parent=1 // pred_region
      _
    $region61: #{forward.1} parent=1 // pred_fallthru
      _
    // Predicated region
    $region62: #{forward.1} parent=1 // pred_check
      _
    $region63: #{forward.1} parent=1 // pred_check_branch
      %55 = sbr.rel (0) target = $region65
    $region64: #{forward.1} parent=1 // pred_region
      _
    $region65: #{forward.1} parent=1 // pred_fallthru
      _
    // Predicated region
    $region66: #{forward.1} parent=1 // pred_check
      _
    $region67: #{forward.1} parent=1 // pred_check_branch
      %57 = sbr.rel (0) target = $region69
    $region68: #{forward.1} parent=1 // pred_region
      _
    $region69: #{forward.1} parent=1 // pred_fallthru
      _
    // Predicated region
    $region70: #{forward.1} parent=1 // pred_check
      _
    $region71: #{forward.1} parent=1 // pred_check_branch
      %59 = sbr.rel (0) target = $region73
    $region72: #{forward.1} parent=1 // pred_region
      _
    $region73: #{forward.1} parent=1 // pred_fallthru
      _
    %v61 = vld [vmem:[%s1] sm:$0x1]
    %v62 = vld [vmem:[%s1 + $0x1] sm:$0x1]
    %63 = vst [vmem:[#allocation3] sm:$0x3] 0.0
    %v64 = vld [vmem:[%s0] sm:$0xff]
    %v65 = vld [vmem:[%s0 + $0x8] sm:$0xff]
    %v66 = vld [vmem:[%s2] sm:$0x1]
    %v67 = vld [vmem:[%s3] sm:$0x1]
    %vm68 = vcmask 261120
    %v69 = vsel %vm68, %v64, 0.0
    %70 = vadd.xlane.f32.xlu0 %v69
    %v71 = vpop.xlane.xlu0 %70
    %v72 = vsel %vm68, %v65, 0.0
    %73 = vadd.xlane.f32.xlu0 %v72
    %v74 = vpop.xlane.xlu0 %73
    %v75 = vrcp.pop 32.0
    %v76 = vmul.f32 32.0, %v75
    %v77 = vsub.f32 1.0, %v76
    %v78 = vmul.f32 %v75, %v77
    %v79 = vadd.f32 %v75, %v78
    %vm80 = vweird.f32 %v75
    %v81 = vsel %vm80, %v75, %v79
    %v82 = vmul.f32 %v71, %v81
    %v83 = vmul.f32 %v74, %v81
    %v84 = vsub.f32 %v64, %v82
    %v85 = vsub.f32 %v65, %v83
    %v86 = vmul.f32 %v84, %v84
    %v87 = vmul.f32 %v85, %v85
    %v88 = vsel %vm68, %v86, 0.0
    %89 = vadd.xlane.f32.xlu0 %v88
    %v90 = vpop.xlane.xlu0 %89
    %v91 = vsel %vm68, %v87, 0.0
    %92 = vadd.xlane.f32.xlu0 %v91
    %v93 = vpop.xlane.xlu0 %92
    %v94 = vmul.f32 %v90, %v81
    %v95 = vmul.f32 %v93, %v81
    %v96 = vadd.f32 %v94, 1e-05
    %v97 = vadd.f32 %v95, 1e-05
    %v98 = vrsqrt.pop %v96
    %v99 = vmul.f32 %v98, %v96
    %v100 = vmul.f32 %v99, %v98
    %v101 = vmul.f32 0.5, %v100
    %v102 = vsub.f32 1.5, %v101
    %v103 = vmul.f32 %v98, %v102
    %vm104 = vweird.f32 %v96
    %vm105 = vweird.f32 %v98
    %vm106 = vmor %vm104, %vm105
    %v107 = vsel %vm106, %v98, %v103
    %v108 = vrsqrt.pop %v97
    %v109 = vmul.f32 %v108, %v97
    %v110 = vmul.f32 %v109, %v108
    %v111 = vmul.f32 0.5, %v110
    %v112 = vsub.f32 1.5, %v111
    %v113 = vmul.f32 %v108, %v112
    %vm114 = vweird.f32 %v97
    %vm115 = vweird.f32 %v108
    %vm116 = vmor %vm114, %vm115
    %v117 = vsel %vm116, %v108, %v113
    %v118 = vmul.f32 %v84, %v107
    %v119 = vmul.f32 %v85, %v117
    %v121 = vperm.slane %v66, 0
    %v123 = vmul.f32 %v118, %v121
    %v124 = vmul.f32 %v119, %v121
    %v126 = vperm.slane %v67, 0
    %v128 = vadd.f32 %v123, %v126
    %v129 = vadd.f32 %v124, %v126
    %v130 = vld [vmem:[%s4] sm:$0xf]
    %v131 = vld [vmem:[%s4 + $0x4] sm:$0xf]
    %v132 = vld [vmem:[%s4 + $0x8] sm:$0xf]
    %v133 = vld [vmem:[%s4 + $0xc] sm:$0xf]
    %v134 = vpack.c.bf16 %v128, %v128
    %v135 = vpack.c.bf16 %v129, %v129
    %v136 = vld [vmem:[%s5] sm:$0x1]
    %v138 = vperm.slane %v136, 0
    %v142 = vunpack.c.l.b16 %v134
    %v143 = vunpack.c.l.b16 %v135
    %v144 = vpack.c.b16 %v143, %v142
    %v149 = vunpack.c.l.b16 %v130
    %v150 = vunpack.c.l.b16 %v131
    %v151 = vunpack.c.l.b16 %v132
    %v152 = vunpack.c.l.b16 %v133
    %v153 = vpack.c.b16 %v150, %v149
    %v154 = vpack.c.b16 %v152, %v151
    %v158 = vsel %vm68, %v144, 0
    %160 = vmatpush.bf16.msra.mxu0 0
    %161 = vmatpush.bf16.msra.mxu0 0
    %162 = vmatpush.bf16.msra.mxu0 0
    %163 = vmatpush.bf16.msra.mxu0 0
    %164 = vmatpush.bf16.msra.mxu0 0
    %165 = vmatpush.bf16.msra.mxu0 0
    %166 = vmatpush.bf16.msra.mxu0 %v154
    %167 = vmatpush.bf16.msra.mxu0 %v153
    %168 = vmatmul.bf16.gmra.mxu0 %v158
    %v169 = vpop.f32.mrf.mxu0
    %v170 = vadd.f32 %v138, %v169
    %v171 = vpop.f32.mrf.mxu0
    %v172 = vadd.f32 %v138, %v171
    %173 = vdwg.mxu0
    %v174 = vpack.c.bf16 %v170, %v170
    %v175 = vpack.c.bf16 %v172, %v172
    %v177 = vunpack.c.l.b16 %v174
    %v178 = vpack.c.b16 %v177, %v177
    %179 = vrot.lane.b32.xlu0 %v178, 96
    %v180 = vpop.permute.xlu0 %179
    %vm181 = vcmask 130048
    %v183 = vsel %vm181, %v174, 0
    %v186 = vsel %vm181, %v180, 0
    %188 = vmatpush.bf16.xpose.msra.mxu0 0
    %189 = vmatpush.bf16.xpose.msra.mxu0 0
    %190 = vmatpush.bf16.xpose.msra.mxu0 0
    %191 = vmatpush.bf16.xpose.msra.mxu0 0
    %192 = vmatpush.bf16.xpose.msra.mxu0 0
    %193 = vmatpush.bf16.xpose.msra.mxu0 0
    %194 = vmatpush.bf16.xpose.msra.mxu0 0
    %195 = vmatpush.bf16.xpose.msra.mxu0 %v186
    %196 = vmatmul.bf16.gmra.mxu0 %v183
    %v197 = vpop.f32.mrf.mxu0
    %v198 = vadd.f32 0.0, %v197
    %v199 = vpop.f32.mrf.mxu0
    %200 = vdwg.mxu0
    %v202 = vunpack.c.l.b16 %v175
    %v203 = vpack.c.b16 %v202, %v202
    %204 = vrot.lane.b32.xlu0 %v203, 96
    %v205 = vpop.permute.xlu0 %204
    %v207 = vsel %vm181, %v175, 0
    %v210 = vsel %vm181, %v205, 0
    %212 = vmatpush.bf16.xpose.msra.mxu0 0
    %213 = vmatpush.bf16.xpose.msra.mxu0 0
    %214 = vmatpush.bf16.xpose.msra.mxu0 0
    %215 = vmatpush.bf16.xpose.msra.mxu0 0
    %216 = vmatpush.bf16.xpose.msra.mxu0 0
    %217 = vmatpush.bf16.xpose.msra.mxu0 0
    %218 = vmatpush.bf16.xpose.msra.mxu0 0
    %219 = vmatpush.bf16.xpose.msra.mxu0 %v210
    %220 = vmatmul.bf16.gmra.mxu0 %v207
    %v221 = vpop.f32.mrf.mxu0
    %v222 = vadd.f32 0.0, %v221
    %v223 = vpop.f32.mrf.mxu0
    %224 = vdwg.mxu0
    %v225 = vmul.f32 %v198, 0.25
    %v226 = vmul.f32 %v222, 0.25
    %v229 = vperm.slane %v61, 0
    %v230 = vperm.slane %v62, 0
    %v233 = vadd.f32 %v225, %v229
    %v234 = vadd.f32 %v226, %v230
    %vm235 = vcmask 64512
    %v236 = vsel %vm235, %v233, -inf
    %237 = vmax.xlane.f32.xlu0 %v236
    %v238 = vpop.xlane.xlu0 %237
    %v239 = vsel %vm235, %v234, -inf
    %240 = vmax.xlane.f32.xlu0 %v239
    %v241 = vpop.xlane.xlu0 %240
    %v242 = vsub.f32 %v233, %v238
    %v243 = vsub.f32 %v234, %v241
    %v244 = vmul.f32 %v242, 1.442695
    %v245 = vpow.pop %v244
    %v246 = vmul.f32 %v243, 1.442695
    %v247 = vpow.pop %v246
    %v248 = vsel %vm235, %v245, 0.0
    %249 = vadd.xlane.f32.xlu0 %v248
    %v250 = vpop.xlane.xlu0 %249
    %v251 = vsel %vm235, %v247, 0.0
    %252 = vadd.xlane.f32.xlu0 %v251
    %v253 = vpop.xlane.xlu0 %252
    %v254 = vrcp.pop %v250
    %v255 = vmul.f32 %v250, %v254
    %v256 = vsub.f32 1.0, %v255
    %v257 = vmul.f32 %v254, %v256
    %v258 = vadd.f32 %v254, %v257
    %vm259 = vweird.f32 %v250
    %vm260 = vweird.f32 %v254
    %vm261 = vmor %vm259, %vm260
    %v262 = vsel %vm261, %v254, %v258
    %v263 = vand.u32 2147483647, %v250
    %vm264 = vcmp.eq.f32.partialorder %v263, 8.507059e+37
    %v265 = vand.u32 %v250, 2147483648
    %v266 = vor.u32 1.1754944e-38, %v265
    %v267 = vsel %vm264, %v266, %v262
    %v268 = vmul.f32 %v245, %v267
    %v269 = vrcp.pop %v253
    %v270 = vmul.f32 %v253, %v269
    %v271 = vsub.f32 1.0, %v270
    %v272 = vmul.f32 %v269, %v271
    %v273 = vadd.f32 %v269, %v272
    %vm274 = vweird.f32 %v253
    %vm275 = vweird.f32 %v269
    %vm276 = vmor %vm274, %vm275
    %v277 = vsel %vm276, %v269, %v273
    %v278 = vand.u32 2147483647, %v253
    %vm279 = vcmp.eq.f32.partialorder %v278, 8.507059e+37
    %v280 = vand.u32 %v253, 2147483648
    %v281 = vor.u32 1.1754944e-38, %v280
    %v282 = vsel %vm279, %v281, %v277
    %v283 = vmul.f32 %v247, %v282
    %v284 = vpack.c.bf16 %v268, %v268
    %v285 = vpack.c.bf16 %v283, %v283
    %286 = vrot.lane.b32.xlu0 %v178, 64
    %v287 = vpop.permute.xlu0 %286
    %v289 = vsel %vm235, %v284, 0
    %vm291 = vcmask 1043456
    %v293 = vsel %vm291, %v287, 0
    %295 = vmatpush.bf16.msra.mxu0 0
    %296 = vmatpush.bf16.msra.mxu0 0
    %297 = vmatpush.bf16.msra.mxu0 0
    %298 = vmatpush.bf16.msra.mxu0 0
    %299 = vmatpush.bf16.msra.mxu0 0
    %300 = vmatpush.bf16.msra.mxu0 0
    %301 = vmatpush.bf16.msra.mxu0 0
    %302 = vmatpush.bf16.msra.mxu0 %v293
    %303 = vmatmul.bf16.gmra.mxu0 %v289
    %v304 = vpop.f32.mrf.mxu0
    %v305 = vadd.f32 0.0, %v304
    %v306 = vpop.f32.mrf.mxu0
    %307 = vdwg.mxu0
    %308 = vrot.lane.b32.xlu0 %v203, 64
    %v309 = vpop.permute.xlu0 %308
    %v311 = vsel %vm235, %v285, 0
    %v314 = vsel %vm291, %v309, 0
    %316 = vmatpush.bf16.msra.mxu0 0
    %317 = vmatpush.bf16.msra.mxu0 0
    %318 = vmatpush.bf16.msra.mxu0 0
    %319 = vmatpush.bf16.msra.mxu0 0
    %320 = vmatpush.bf16.msra.mxu0 0
    %321 = vmatpush.bf16.msra.mxu0 0
    %322 = vmatpush.bf16.msra.mxu0 0
    %323 = vmatpush.bf16.msra.mxu0 %v314
    %324 = vmatmul.bf16.gmra.mxu0 %v311
    %v325 = vpop.f32.mrf.mxu0
    %v326 = vadd.f32 0.0, %v325
    %v327 = vpop.f32.mrf.mxu0
    %328 = vdwg.mxu0
    %329 = vst.msk [vmem:[#allocation2] sm:$0xff] %vm181, %v305
    %330 = vst.msk [vmem:[#allocation2 + $0x8] sm:$0xff] %vm181, %v326
    %331 = vrot.lane.b32.xlu0 %v178, 112
    %v332 = vpop.permute.xlu0 %331
    %333 = vrot.lane.b32.xlu0 %v178, 80
    %v334 = vpop.permute.xlu0 %333
    %v336 = vsel %vm181, %v332, 0
    %v339 = vsel %vm181, %v334, 0
    %341 = vmatpush.bf16.xpose.msra.mxu0 0
    %342 = vmatpush.bf16.xpose.msra.mxu0 0
    %343 = vmatpush.bf16.xpose.msra.mxu0 0
    %344 = vmatpush.bf16.xpose.msra.mxu0 0
    %345 = vmatpush.bf16.xpose.msra.mxu0 0
    %346 = vmatpush.bf16.xpose.msra.mxu0 0
    %347 = vmatpush.bf16.xpose.msra.mxu0 0
    %348 = vmatpush.bf16.xpose.msra.mxu0 %v339
    %349 = vmatmul.bf16.gmra.mxu0 %v336
    %v350 = vpop.f32.mrf.mxu0
    %v351 = vadd.f32 0.0, %v350
    %v352 = vpop.f32.mrf.mxu0
    %353 = vdwg.mxu0
    %354 = vrot.lane.b32.xlu0 %v203, 112
    %v355 = vpop.permute.xlu0 %354
    %356 = vrot.lane.b32.xlu0 %v203, 80
    %v357 = vpop.permute.xlu0 %356
    %v359 = vsel %vm181, %v355, 0
    %v362 = vsel %vm181, %v357, 0
    %364 = vmatpush.bf16.xpose.msra.mxu0 0
    %365 = vmatpush.bf16.xpose.msra.mxu0 0
    %366 = vmatpush.bf16.xpose.msra.mxu0 0
    %367 = vmatpush.bf16.xpose.msra.mxu0 0
    %368 = vmatpush.bf16.xpose.msra.mxu0 0
    %369 = vmatpush.bf16.xpose.msra.mxu0 0
    %370 = vmatpush.bf16.xpose.msra.mxu0 0
    %371 = vmatpush.bf16.xpose.msra.mxu0 %v362
    %372 = vmatmul.bf16.gmra.mxu0 %v359
    %v373 = vpop.f32.mrf.mxu0
    %v374 = vadd.f32 0.0, %v373
    %v375 = vpop.f32.mrf.mxu0
    %376 = vdwg.mxu0
    %v377 = vmul.f32 %v351, 0.25
    %v378 = vmul.f32 %v374, 0.25
    %v379 = vadd.f32 %v377, %v229
    %v380 = vadd.f32 %v378, %v230
    %v381 = vsel %vm235, %v379, -inf
    %382 = vmax.xlane.f32.xlu0 %v381
    %v383 = vpop.xlane.xlu0 %382
    %v384 = vsel %vm235, %v380, -inf
    %385 = vmax.xlane.f32.xlu0 %v384
    %v386 = vpop.xlane.xlu0 %385
    %v387 = vsub.f32 %v379, %v383
    %v388 = vsub.f32 %v380, %v386
    %v389 = vmul.f32 %v387, 1.442695
    %v390 = vpow.pop %v389
    %v391 = vmul.f32 %v388, 1.442695
    %v392 = vpow.pop %v391
    %v393 = vsel %vm235, %v390, 0.0
    %394 = vadd.xlane.f32.xlu0 %v393
    %v395 = vpop.xlane.xlu0 %394
    %v396 = vsel %vm235, %v392, 0.0
    %397 = vadd.xlane.f32.xlu0 %v396
    %v398 = vpop.xlane.xlu0 %397
    %v399 = vrcp.pop %v395
    %v400 = vmul.f32 %v395, %v399
    %v401 = vsub.f32 1.0, %v400
    %v402 = vmul.f32 %v399, %v401
    %v403 = vadd.f32 %v399, %v402
    %vm404 = vweird.f32 %v395
    %vm405 = vweird.f32 %v399
    %vm406 = vmor %vm404, %vm405
    %v407 = vsel %vm406, %v399, %v403
    %v408 = vand.u32 2147483647, %v395
    %vm409 = vcmp.eq.f32.partialorder %v408, 8.507059e+37
    %v410 = vand.u32 %v395, 2147483648
    %v411 = vor.u32 1.1754944e-38, %v410
    %v412 = vsel %vm409, %v411, %v407
    %v413 = vmul.f32 %v390, %v412
    %v414 = vrcp.pop %v398
    %v415 = vmul.f32 %v398, %v414
    %v416 = vsub.f32 1.0, %v415
    %v417 = vmul.f32 %v414, %v416
    %v418 = vadd.f32 %v414, %v417
    %vm419 = vweird.f32 %v398
    %vm420 = vweird.f32 %v414
    %vm421 = vmor %vm419, %vm420
    %v422 = vsel %vm421, %v414, %v418
    %v423 = vand.u32 2147483647, %v398
    %vm424 = vcmp.eq.f32.partialorder %v423, 8.507059e+37
    %v425 = vand.u32 %v398, 2147483648
    %v426 = vor.u32 1.1754944e-38, %v425
    %v427 = vsel %vm424, %v426, %v422
    %v428 = vmul.f32 %v392, %v427
    %v429 = vpack.c.bf16 %v413, %v413
    %v430 = vpack.c.bf16 %v428, %v428
    %431 = vrot.lane.b32.xlu0 %v178, 48
    %v432 = vpop.permute.xlu0 %431
    %v434 = vsel %vm235, %v429, 0
    %v437 = vsel %vm291, %v432, 0
    %439 = vmatpush.bf16.msra.mxu0 0
    %440 = vmatpush.bf16.msra.mxu0 0
    %441 = vmatpush.bf16.msra.mxu0 0
    %442 = vmatpush.bf16.msra.mxu0 0
    %443 = vmatpush.bf16.msra.mxu0 0
    %444 = vmatpush.bf16.msra.mxu0 0
    %445 = vmatpush.bf16.msra.mxu0 0
    %446 = vmatpush.bf16.msra.mxu0 %v437
    %447 = vmatmul.bf16.gmra.mxu0 %v434
    %v448 = vpop.f32.mrf.mxu0
    %v449 = vadd.f32 0.0, %v448
    %v450 = vpop.f32.mrf.mxu0
    %451 = vdwg.mxu0
    %452 = vrot.lane.b32.xlu0 %v203, 48
    %v453 = vpop.permute.xlu0 %452
    %v455 = vsel %vm235, %v430, 0
    %v458 = vsel %vm291, %v453, 0
    %460 = vmatpush.bf16.msra.mxu0 0
    %461 = vmatpush.bf16.msra.mxu0 0
    %462 = vmatpush.bf16.msra.mxu0 0
    %463 = vmatpush.bf16.msra.mxu0 0
    %464 = vmatpush.bf16.msra.mxu0 0
    %465 = vmatpush.bf16.msra.mxu0 0
    %466 = vmatpush.bf16.msra.mxu0 0
    %467 = vmatpush.bf16.msra.mxu0 %v458
    %468 = vmatmul.bf16.gmra.mxu0 %v455
    %v469 = vpop.f32.mrf.mxu0
    %v470 = vadd.f32 0.0, %v469
    %v471 = vpop.f32.mrf.mxu0
    %472 = vdwg.mxu0
    %475 = vrot.lane.b32.xlu0 %v449, 16
    %v476 = vpop.permute.xlu0 %475
    %477 = vrot.lane.b32.xlu0 %v470, 16
    %v478 = vpop.permute.xlu0 %477
    %vm481 = vcmask 261248
    %482 = vst.msk [vmem:[#allocation2] sm:$0xff] %vm481, %v476
    %483 = vst.msk [vmem:[#allocation2 + $0x8] sm:$0xff] %vm481, %v478
    %v484 = vld [vmem:[#allocation2] sm:$0xff]
    %v485 = vld [vmem:[#allocation2 + $0x8] sm:$0xff]
    %v486 = vld [vmem:[%s6] sm:$0xf]
    %v487 = vld [vmem:[%s6 + $0x4] sm:$0xf]
    %v488 = vld [vmem:[%s6 + $0x8] sm:$0xf]
    %v489 = vld [vmem:[%s6 + $0xc] sm:$0xf]
    %v490 = vpack.c.bf16 %v484, %v484
    %v491 = vpack.c.bf16 %v485, %v485
    %v492 = vld [vmem:[%s7] sm:$0x1]
    %v494 = vperm.slane %v492, 0
    %v498 = vunpack.c.l.b16 %v490
    %v499 = vunpack.c.l.b16 %v491
    %v500 = vpack.c.b16 %v499, %v498
    %v505 = vunpack.c.l.b16 %v486
    %v506 = vunpack.c.l.b16 %v487
    %v507 = vunpack.c.l.b16 %v488
    %v508 = vunpack.c.l.b16 %v489
    %v509 = vpack.c.b16 %v506, %v505
    %v510 = vpack.c.b16 %v508, %v507
    %v514 = vsel %vm68, %v500, 0
    %516 = vmatpush.bf16.msra.mxu0 0
    %517 = vmatpush.bf16.msra.mxu0 0
    %518 = vmatpush.bf16.msra.mxu0 0
    %519 = vmatpush.bf16.msra.mxu0 0
    %520 = vmatpush.bf16.msra.mxu0 0
    %521 = vmatpush.bf16.msra.mxu0 0
    %522 = vmatpush.bf16.msra.mxu0 %v510
    %523 = vmatpush.bf16.msra.mxu0 %v509
    %524 = vmatmul.bf16.gmra.mxu0 %v514
    %v525 = vpop.f32.mrf.mxu0
    %v526 = vadd.f32 %v494, %v525
    %v527 = vpop.f32.mrf.mxu0
    %v528 = vadd.f32 %v494, %v527
    %529 = vdwg.mxu0
    %v530 = vadd.f32 %v526, %v128
    %v531 = vadd.f32 %v528, %v129
    %v532 = vld [vmem:[%s8] sm:$0x1]
    %v533 = vld [vmem:[%s9] sm:$0x1]
    %v534 = vsel %vm68, %v530, 0.0
    %535 = vadd.xlane.f32.xlu0 %v534
    %v536 = vpop.xlane.xlu0 %535
    %v537 = vsel %vm68, %v531, 0.0
    %538 = vadd.xlane.f32.xlu0 %v537
    %v539 = vpop.xlane.xlu0 %538
    %v540 = vmul.f32 %v536, %v81
    %v541 = vmul.f32 %v539, %v81
    %v542 = vsub.f32 %v530, %v540
    %v543 = vsub.f32 %v531, %v541
    %v544 = vmul.f32 %v542, %v542
    %v545 = vmul.f32 %v543, %v543
    %v546 = vsel %vm68, %v544, 0.0
    %547 = vadd.xlane.f32.xlu0 %v546
    %v548 = vpop.xlane.xlu0 %547
    %v549 = vsel %vm68, %v545, 0.0
    %550 = vadd.xlane.f32.xlu0 %v549
    %v551 = vpop.xlane.xlu0 %550
    %v552 = vmul.f32 %v548, %v81
    %v553 = vmul.f32 %v551, %v81
    %v554 = vadd.f32 %v552, 1e-05
    %v555 = vadd.f32 %v553, 1e-05
    %v556 = vrsqrt.pop %v554
    %v557 = vmul.f32 %v556, %v554
    %v558 = vmul.f32 %v557, %v556
    %v559 = vmul.f32 0.5, %v558
    %v560 = vsub.f32 1.5, %v559
    %v561 = vmul.f32 %v556, %v560
    %vm562 = vweird.f32 %v554
    %vm563 = vweird.f32 %v556
    %vm564 = vmor %vm562, %vm563
    %v565 = vsel %vm564, %v556, %v561
    %v566 = vrsqrt.pop %v555
    %v567 = vmul.f32 %v566, %v555
    %v568 = vmul.f32 %v567, %v566
    %v569 = vmul.f32 0.5, %v568
    %v570 = vsub.f32 1.5, %v569
    %v571 = vmul.f32 %v566, %v570
    %vm572 = vweird.f32 %v555
    %vm573 = vweird.f32 %v566
    %vm574 = vmor %vm572, %vm573
    %v575 = vsel %vm574, %v566, %v571
    %v576 = vmul.f32 %v542, %v565
    %v577 = vmul.f32 %v543, %v575
    %v579 = vperm.slane %v532, 0
    %v581 = vmul.f32 %v576, %v579
    %v582 = vmul.f32 %v577, %v579
    %v584 = vperm.slane %v533, 0
    %v586 = vadd.f32 %v581, %v584
    %v587 = vadd.f32 %v582, %v584
    %v588 = vld [vmem:[%s10] sm:$0xf]
    %v589 = vld [vmem:[%s10 + $0x4] sm:$0xf]
    %v590 = vld [vmem:[%s10 + $0x8] sm:$0xf]
    %v591 = vld [vmem:[%s10 + $0xc] sm:$0xf]
    %v592 = vpack.c.bf16 %v586, %v586
    %v593 = vpack.c.bf16 %v587, %v587
    %v594 = vld [vmem:[%s11] sm:$0x1]
    %v596 = vperm.slane %v594, 0
    %v600 = vunpack.c.l.b16 %v592
    %v601 = vunpack.c.l.b16 %v593
    %v602 = vpack.c.b16 %v601, %v600
    %v607 = vunpack.c.l.b16 %v588
    %v608 = vunpack.c.l.b16 %v589
    %v609 = vunpack.c.l.b16 %v590
    %v610 = vunpack.c.l.b16 %v591
    %v611 = vpack.c.b16 %v608, %v607
    %v612 = vpack.c.b16 %v610, %v609
    %v616 = vsel %vm68, %v602, 0
    %618 = vmatpush.bf16.msra.mxu0 0
    %619 = vmatpush.bf16.msra.mxu0 0
    %620 = vmatpush.bf16.msra.mxu0 0
    %621 = vmatpush.bf16.msra.mxu0 0
    %622 = vmatpush.bf16.msra.mxu0 0
    %623 = vmatpush.bf16.msra.mxu0 0
    %624 = vmatpush.bf16.msra.mxu0 %v612
    %625 = vmatpush.bf16.msra.mxu0 %v611
    %626 = vmatmul.bf16.gmra.mxu0 %v616
    %v627 = vpop.f32.mrf.mxu0
    %v628 = vadd.f32 %v596, %v627
    %v629 = vpop.f32.mrf.mxu0
    %v630 = vadd.f32 %v596, %v629
    %631 = vdwg.mxu0
    %v632 = vmul.f32 %v628, %v628
    %v633 = vmul.f32 %v630, %v630
    %v634 = vmul.f32 %v628, %v632
    %v635 = vmul.f32 %v630, %v633
    %v636 = vmul.f32 %v634, 0.044715
    %v637 = vmul.f32 %v635, 0.044715
    %v638 = vadd.f32 %v628, %v636
    %v639 = vadd.f32 %v630, %v637
    %v640 = vmul.f32 %v638, 0.7978846
    %v641 = vmul.f32 %v639, 0.7978846
    %v642 = vtanh.pop %v640
    %v643 = vtanh.pop %v641
    %v644 = vadd.f32 %v642, 1.0
    %v645 = vadd.f32 %v643, 1.0
    %v646 = vmul.f32 %v644, 0.5
    %v647 = vmul.f32 %v645, 0.5
    %v648 = vmul.f32 %v628, %v646
    %v649 = vmul.f32 %v630, %v647
    %v650 = vld [vmem:[%s12] sm:$0xf]
    %v651 = vld [vmem:[%s12 + $0x4] sm:$0xf]
    %v652 = vld [vmem:[%s12 + $0x8] sm:$0xf]
    %v653 = vld [vmem:[%s12 + $0xc] sm:$0xf]
    %v654 = vld [vmem:[%s12 + $0x10] sm:$0xf]
    %v655 = vld [vmem:[%s12 + $0x14] sm:$0xf]
    %v656 = vld [vmem:[%s12 + $0x18] sm:$0xf]
    %v657 = vld [vmem:[%s12 + $0x1c] sm:$0xf]
    %v658 = vpack.c.bf16 %v648, %v648
    %v659 = vpack.c.bf16 %v649, %v649
    %v660 = vld [vmem:[%s13] sm:$0x1]
    %v662 = vperm.slane %v660, 0
    %v666 = vunpack.c.l.b16 %v658
    %v667 = vunpack.c.l.b16 %v659
    %v668 = vpack.c.b16 %v667, %v666
    %v677 = vunpack.c.l.b16 %v650
    %v678 = vunpack.c.l.b16 %v651
    %v679 = vunpack.c.l.b16 %v652
    %v680 = vunpack.c.l.b16 %v653
    %v681 = vunpack.c.l.b16 %v654
    %v682 = vunpack.c.l.b16 %v655
    %v683 = vunpack.c.l.b16 %v656
    %v684 = vunpack.c.l.b16 %v657
    %v685 = vpack.c.b16 %v678, %v677
    %v686 = vpack.c.b16 %v680, %v679
    %v687 = vpack.c.b16 %v682, %v681
    %v688 = vpack.c.b16 %v684, %v683
    %vm693 = vcmask 523264
    %v695 = vsel %vm693, %v668, 0
    %697 = vmatpush.bf16.msra.mxu0 0
    %698 = vmatpush.bf16.msra.mxu0 0
    %699 = vmatpush.bf16.msra.mxu0 0
    %700 = vmatpush.bf16.msra.mxu0 0
    %701 = vmatpush.bf16.msra.mxu0 %v688
    %702 = vmatpush.bf16.msra.mxu0 %v687
    %703 = vmatpush.bf16.msra.mxu0 %v686
    %704 = vmatpush.bf16.msra.mxu0 %v685
    %705 = vmatmul.bf16.gmra.mxu0 %v695
    %v706 = vpop.f32.mrf.mxu0
    %v707 = vadd.f32 %v662, %v706
    %v708 = vpop.f32.mrf.mxu0
    %v709 = vadd.f32 %v662, %v708
    %710 = vdwg.mxu0
    %v711 = vadd.f32 %v707, %v586
    %v712 = vadd.f32 %v709, %v587
    %v713 = vld [vmem:[%s14] sm:$0x1]
    %v714 = vld [vmem:[%s15] sm:$0x1]
    %v715 = vsel %vm68, %v711, 0.0
    %716 = vadd.xlane.f32.xlu0 %v715
    %v717 = vpop.xlane.xlu0 %716
    %v718 = vsel %vm68, %v712, 0.0
    %719 = vadd.xlane.f32.xlu0 %v718
    %v720 = vpop.xlane.xlu0 %719
    %v721 = vmul.f32 %v717, %v81
    %v722 = vmul.f32 %v720, %v81
    %v723 = vsub.f32 %v711, %v721
    %v724 = vsub.f32 %v712, %v722
    %v725 = vmul.f32 %v723, %v723
    %v726 = vmul.f32 %v724, %v724
    %v727 = vsel %vm68, %v725, 0.0
    %728 = vadd.xlane.f32.xlu0 %v727
    %v729 = vpop.xlane.xlu0 %728
    %v730 = vsel %vm68, %v726, 0.0
    %731 = vadd.xlane.f32.xlu0 %v730
    %v732 = vpop.xlane.xlu0 %731
    %v733 = vmul.f32 %v729, %v81
    %v734 = vmul.f32 %v732, %v81
    %v735 = vadd.f32 %v733, 1e-05
    %v736 = vadd.f32 %v734, 1e-05
    %v737 = vrsqrt.pop %v735
    %v738 = vmul.f32 %v737, %v735
    %v739 = vmul.f32 %v738, %v737
    %v740 = vmul.f32 0.5, %v739
    %v741 = vsub.f32 1.5, %v740
    %v742 = vmul.f32 %v737, %v741
    %vm743 = vweird.f32 %v735
    %vm744 = vweird.f32 %v737
    %vm745 = vmor %vm743, %vm744
    %v746 = vsel %vm745, %v737, %v742
    %v747 = vrsqrt.pop %v736
    %v748 = vmul.f32 %v747, %v736
    %v749 = vmul.f32 %v748, %v747
    %v750 = vmul.f32 0.5, %v749
    %v751 = vsub.f32 1.5, %v750
    %v752 = vmul.f32 %v747, %v751
    %vm753 = vweird.f32 %v736
    %vm754 = vweird.f32 %v747
    %vm755 = vmor %vm753, %vm754
    %v756 = vsel %vm755, %v747, %v752
    %v757 = vmul.f32 %v723, %v746
    %v758 = vmul.f32 %v724, %v756
    %v760 = vperm.slane %v713, 0
    %v762 = vmul.f32 %v757, %v760
    %v763 = vmul.f32 %v758, %v760
    %v765 = vperm.slane %v714, 0
    %v767 = vadd.f32 %v762, %v765
    %v768 = vadd.f32 %v763, %v765
    %v771 = vrot.slane %v768, 7
    %vm772 = vcmask 1041409
    %v773 = vsel %vm772, %v771, %v767
    %774 = vrot.lane.b32.xlu0 %v773, 96
    %v775 = vpop.permute.xlu0 %774
    %vm777 = vcmask 1042176
    %778 = vst.msk [vmem:[#allocation3] sm:$0x3] %vm777, %v775
    %s779 = scalar_lea.vmem %s4, 16
    %v780 = vld [vmem:[%s779] sm:$0xf]
    %v781 = vld [vmem:[%s779 + $0x4] sm:$0xf]
    %v782 = vld [vmem:[%s779 + $0x8] sm:$0xf]
    %v783 = vld [vmem:[%s779 + $0xc] sm:$0xf]
    %v784 = vpack.c.bf16 %v767, %v767
    %v785 = vpack.c.bf16 %v768, %v768
    %s786 = scalar_lea.vmem %s5, 1
    %v787 = vld [vmem:[%s786] sm:$0x1]
    %v789 = vperm.slane %v787, 0
    %v793 = vunpack.c.l.b16 %v784
    %v794 = vunpack.c.l.b16 %v785
    %v795 = vpack.c.b16 %v794, %v793
    %v800 = vunpack.c.l.b16 %v780
    %v801 = vunpack.c.l.b16 %v781
    %v802 = vunpack.c.l.b16 %v782
    %v803 = vunpack.c.l.b16 %v783
    %v804 = vpack.c.b16 %v801, %v800
    %v805 = vpack.c.b16 %v803, %v802
    %v809 = vsel %vm68, %v795, 0
    %811 = vmatpush.bf16.msra.mxu0 0
    %812 = vmatpush.bf16.msra.mxu0 0
    %813 = vmatpush.bf16.msra.mxu0 0
    %814 = vmatpush.bf16.msra.mxu0 0
    %815 = vmatpush.bf16.msra.mxu0 0
    %816 = vmatpush.bf16.msra.mxu0 0
    %817 = vmatpush.bf16.msra.mxu0 %v805
    %818 = vmatpush.bf16.msra.mxu0 %v804
    %819 = vmatmul.bf16.gmra.mxu0 %v809
    %v820 = vpop.f32.mrf.mxu0
    %v821 = vadd.f32 %v789, %v820
    %v822 = vpop.f32.mrf.mxu0
    %v823 = vadd.f32 %v789, %v822
    %824 = vdwg.mxu0
    %v825 = vpack.c.bf16 %v821, %v821
    %v826 = vpack.c.bf16 %v823, %v823
    %v828 = vunpack.c.l.b16 %v825
    %v829 = vpack.c.b16 %v828, %v828
    %830 = vrot.lane.b32.xlu0 %v829, 96
    %v831 = vpop.permute.xlu0 %830
    %v833 = vsel %vm181, %v825, 0
    %v836 = vsel %vm181, %v831, 0
    %838 = vmatpush.bf16.xpose.msra.mxu0 0
    %839 = vmatpush.bf16.xpose.msra.mxu0 0
    %840 = vmatpush.bf16.xpose.msra.mxu0 0
    %841 = vmatpush.bf16.xpose.msra.mxu0 0
    %842 = vmatpush.bf16.xpose.msra.mxu0 0
    %843 = vmatpush.bf16.xpose.msra.mxu0 0
    %844 = vmatpush.bf16.xpose.msra.mxu0 0
    %845 = vmatpush.bf16.xpose.msra.mxu0 %v836
    %846 = vmatmul.bf16.gmra.mxu0 %v833
    %v847 = vpop.f32.mrf.mxu0
    %v848 = vadd.f32 0.0, %v847
    %v849 = vpop.f32.mrf.mxu0
    %850 = vdwg.mxu0
    %v852 = vunpack.c.l.b16 %v826
    %v853 = vpack.c.b16 %v852, %v852
    %854 = vrot.lane.b32.xlu0 %v853, 96
    %v855 = vpop.permute.xlu0 %854
    %v857 = vsel %vm181, %v826, 0
    %v860 = vsel %vm181, %v855, 0
    %862 = vmatpush.bf16.xpose.msra.mxu0 0
    %863 = vmatpush.bf16.xpose.msra.mxu0 0
    %864 = vmatpush.bf16.xpose.msra.mxu0 0
    %865 = vmatpush.bf16.xpose.msra.mxu0 0
    %866 = vmatpush.bf16.xpose.msra.mxu0 0
    %867 = vmatpush.bf16.xpose.msra.mxu0 0
    %868 = vmatpush.bf16.xpose.msra.mxu0 0
    %869 = vmatpush.bf16.xpose.msra.mxu0 %v860
    %870 = vmatmul.bf16.gmra.mxu0 %v857
    %v871 = vpop.f32.mrf.mxu0
    %v872 = vadd.f32 0.0, %v871
    %v873 = vpop.f32.mrf.mxu0
    %874 = vdwg.mxu0
    %v875 = vmul.f32 %v848, 0.25
    %v876 = vmul.f32 %v872, 0.25
    %v877 = vadd.f32 %v875, %v229
    %v878 = vadd.f32 %v876, %v230
    %v879 = vsel %vm235, %v877, -inf
    %880 = vmax.xlane.f32.xlu0 %v879
    %v881 = vpop.xlane.xlu0 %880
    %v882 = vsel %vm235, %v878, -inf
    %883 = vmax.xlane.f32.xlu0 %v882
    %v884 = vpop.xlane.xlu0 %883
    %v885 = vsub.f32 %v877, %v881
    %v886 = vsub.f32 %v878, %v884
    %v887 = vmul.f32 %v885, 1.442695
    %v888 = vpow.pop %v887
    %v889 = vmul.f32 %v886, 1.442695
    %v890 = vpow.pop %v889
    %v891 = vsel %vm235, %v888, 0.0
    %892 = vadd.xlane.f32.xlu0 %v891
    %v893 = vpop.xlane.xlu0 %892
    %v894 = vsel %vm235, %v890, 0.0
    %895 = vadd.xlane.f32.xlu0 %v894
    %v896 = vpop.xlane.xlu0 %895
    %v897 = vrcp.pop %v893
    %v898 = vmul.f32 %v893, %v897
    %v899 = vsub.f32 1.0, %v898
    %v900 = vmul.f32 %v897, %v899
    %v901 = vadd.f32 %v897, %v900
    %vm902 = vweird.f32 %v893
    %vm903 = vweird.f32 %v897
    %vm904 = vmor %vm902, %vm903
    %v905 = vsel %vm904, %v897, %v901
    %v906 = vand.u32 2147483647, %v893
    %vm907 = vcmp.eq.f32.partialorder %v906, 8.507059e+37
    %v908 = vand.u32 %v893, 2147483648
    %v909 = vor.u32 1.1754944e-38, %v908
    %v910 = vsel %vm907, %v909, %v905
    %v911 = vmul.f32 %v888, %v910
    %v912 = vrcp.pop %v896
    %v913 = vmul.f32 %v896, %v912
    %v914 = vsub.f32 1.0, %v913
    %v915 = vmul.f32 %v912, %v914
    %v916 = vadd.f32 %v912, %v915
    %vm917 = vweird.f32 %v896
    %vm918 = vweird.f32 %v912
    %vm919 = vmor %vm917, %vm918
    %v920 = vsel %vm919, %v912, %v916
    %v921 = vand.u32 2147483647, %v896
    %vm922 = vcmp.eq.f32.partialorder %v921, 8.507059e+37
    %v923 = vand.u32 %v896, 2147483648
    %v924 = vor.u32 1.1754944e-38, %v923
    %v925 = vsel %vm922, %v924, %v920
    %v926 = vmul.f32 %v890, %v925
    %v927 = vpack.c.bf16 %v911, %v911
    %v928 = vpack.c.bf16 %v926, %v926
    %929 = vrot.lane.b32.xlu0 %v829, 64
    %v930 = vpop.permute.xlu0 %929
    %v932 = vsel %vm235, %v927, 0
    %v935 = vsel %vm291, %v930, 0
    %937 = vmatpush.bf16.msra.mxu0 0
    %938 = vmatpush.bf16.msra.mxu0 0
    %939 = vmatpush.bf16.msra.mxu0 0
    %940 = vmatpush.bf16.msra.mxu0 0
    %941 = vmatpush.bf16.msra.mxu0 0
    %942 = vmatpush.bf16.msra.mxu0 0
    %943 = vmatpush.bf16.msra.mxu0 0
    %944 = vmatpush.bf16.msra.mxu0 %v935
    %945 = vmatmul.bf16.gmra.mxu0 %v932
    %v946 = vpop.f32.mrf.mxu0
    %v947 = vadd.f32 0.0, %v946
    %v948 = vpop.f32.mrf.mxu0
    %949 = vdwg.mxu0
    %950 = vrot.lane.b32.xlu0 %v853, 64
    %v951 = vpop.permute.xlu0 %950
    %v953 = vsel %vm235, %v928, 0
    %v956 = vsel %vm291, %v951, 0
    %958 = vmatpush.bf16.msra.mxu0 0
    %959 = vmatpush.bf16.msra.mxu0 0
    %960 = vmatpush.bf16.msra.mxu0 0
    %961 = vmatpush.bf16.msra.mxu0 0
    %962 = vmatpush.bf16.msra.mxu0 0
    %963 = vmatpush.bf16.msra.mxu0 0
    %964 = vmatpush.bf16.msra.mxu0 0
    %965 = vmatpush.bf16.msra.mxu0 %v956
    %966 = vmatmul.bf16.gmra.mxu0 %v953
    %v967 = vpop.f32.mrf.mxu0
    %v968 = vadd.f32 0.0, %v967
    %v969 = vpop.f32.mrf.mxu0
    %970 = vdwg.mxu0
    %971 = vst.msk [vmem:[#allocation2] sm:$0xff] %vm181, %v947
    %972 = vst.msk [vmem:[#allocation2 + $0x8] sm:$0xff] %vm181, %v968
    %973 = vrot.lane.b32.xlu0 %v829, 112
    %v974 = vpop.permute.xlu0 %973
    %975 = vrot.lane.b32.xlu0 %v829, 80
    %v976 = vpop.permute.xlu0 %975
    %v978 = vsel %vm181, %v974, 0
    %v981 = vsel %vm181, %v976, 0
    %983 = vmatpush.bf16.xpose.msra.mxu0 0
    %984 = vmatpush.bf16.xpose.msra.mxu0 0
    %985 = vmatpush.bf16.xpose.msra.mxu0 0
    %986 = vmatpush.bf16.xpose.msra.mxu0 0
    %987 = vmatpush.bf16.xpose.msra.mxu0 0
    %988 = vmatpush.bf16.xpose.msra.mxu0 0
    %989 = vmatpush.bf16.xpose.msra.mxu0 0
    %990 = vmatpush.bf16.xpose.msra.mxu0 %v981
    %991 = vmatmul.bf16.gmra.mxu0 %v978
    %v992 = vpop.f32.mrf.mxu0
    %v993 = vadd.f32 0.0, %v992
    %v994 = vpop.f32.mrf.mxu0
    %995 = vdwg.mxu0
    %996 = vrot.lane.b32.xlu0 %v853, 112
    %v997 = vpop.permute.xlu0 %996
    %998 = vrot.lane.b32.xlu0 %v853, 80
    %v999 = vpop.permute.xlu0 %998
    %v1001 = vsel %vm181, %v997, 0
    %v1004 = vsel %vm181, %v999, 0
    %1006 = vmatpush.bf16.xpose.msra.mxu0 0
    %1007 = vmatpush.bf16.xpose.msra.mxu0 0
    %1008 = vmatpush.bf16.xpose.msra.mxu0 0
    %1009 = vmatpush.bf16.xpose.msra.mxu0 0
    %1010 = vmatpush.bf16.xpose.msra.mxu0 0
    %1011 = vmatpush.bf16.xpose.msra.mxu0 0
    %1012 = vmatpush.bf16.xpose.msra.mxu0 0
    %1013 = vmatpush.bf16.xpose.msra.mxu0 %v1004
    %1014 = vmatmul.bf16.gmra.mxu0 %v1001
    %v1015 = vpop.f32.mrf.mxu0
    %v1016 = vadd.f32 0.0, %v1015
    %v1017 = vpop.f32.mrf.mxu0
    %1018 = vdwg.mxu0
    %v1019 = vmul.f32 %v993, 0.25
    %v1020 = vmul.f32 %v1016, 0.25
    %v1021 = vadd.f32 %v1019, %v229
    %v1022 = vadd.f32 %v1020, %v230
    %v1023 = vsel %vm235, %v1021, -inf
    %1024 = vmax.xlane.f32.xlu0 %v1023
    %v1025 = vpop.xlane.xlu0 %1024
    %v1026 = vsel %vm235, %v1022, -inf
    %1027 = vmax.xlane.f32.xlu0 %v1026
    %v1028 = vpop.xlane.xlu0 %1027
    %v1029 = vsub.f32 %v1021, %v1025
    %v1030 = vsub.f32 %v1022, %v1028
    %v1031 = vmul.f32 %v1029, 1.442695
    %v1032 = vpow.pop %v1031
    %v1033 = vmul.f32 %v1030, 1.442695
    %v1034 = vpow.pop %v1033
    %v1035 = vsel %vm235, %v1032, 0.0
    %1036 = vadd.xlane.f32.xlu0 %v1035
    %v1037 = vpop.xlane.xlu0 %1036
    %v1038 = vsel %vm235, %v1034, 0.0
    %1039 = vadd.xlane.f32.xlu0 %v1038
    %v1040 = vpop.xlane.xlu0 %1039
    %v1041 = vrcp.pop %v1037
    %v1042 = vmul.f32 %v1037, %v1041
    %v1043 = vsub.f32 1.0, %v1042
    %v1044 = vmul.f32 %v1041, %v1043
    %v1045 = vadd.f32 %v1041, %v1044
    %vm1046 = vweird.f32 %v1037
    %vm1047 = vweird.f32 %v1041
    %vm1048 = vmor %vm1046, %vm1047
    %v1049 = vsel %vm1048, %v1041, %v1045
    %v1050 = vand.u32 2147483647, %v1037
    %vm1051 = vcmp.eq.f32.partialorder %v1050, 8.507059e+37
    %v1052 = vand.u32 %v1037, 2147483648
    %v1053 = vor.u32 1.1754944e-38, %v1052
    %v1054 = vsel %vm1051, %v1053, %v1049
    %v1055 = vmul.f32 %v1032, %v1054
    %v1056 = vrcp.pop %v1040
    %v1057 = vmul.f32 %v1040, %v1056
    %v1058 = vsub.f32 1.0, %v1057
    %v1059 = vmul.f32 %v1056, %v1058
    %v1060 = vadd.f32 %v1056, %v1059
    %vm1061 = vweird.f32 %v1040
    %vm1062 = vweird.f32 %v1056
    %vm1063 = vmor %vm1061, %vm1062
    %v1064 = vsel %vm1063, %v1056, %v1060
    %v1065 = vand.u32 2147483647, %v1040
    %vm1066 = vcmp.eq.f32.partialorder %v1065, 8.507059e+37
    %v1067 = vand.u32 %v1040, 2147483648
    %v1068 = vor.u32 1.1754944e-38, %v1067
    %v1069 = vsel %vm1066, %v1068, %v1064
    %v1070 = vmul.f32 %v1034, %v1069
    %v1071 = vpack.c.bf16 %v1055, %v1055
    %v1072 = vpack.c.bf16 %v1070, %v1070
    %1073 = vrot.lane.b32.xlu0 %v829, 48
    %v1074 = vpop.permute.xlu0 %1073
    %v1076 = vsel %vm235, %v1071, 0
    %v1079 = vsel %vm291, %v1074, 0
    %1081 = vmatpush.bf16.msra.mxu0 0
    %1082 = vmatpush.bf16.msra.mxu0 0
    %1083 = vmatpush.bf16.msra.mxu0 0
    %1084 = vmatpush.bf16.msra.mxu0 0
    %1085 = vmatpush.bf16.msra.mxu0 0
    %1086 = vmatpush.bf16.msra.mxu0 0
    %1087 = vmatpush.bf16.msra.mxu0 0
    %1088 = vmatpush.bf16.msra.mxu0 %v1079
    %1089 = vmatmul.bf16.gmra.mxu0 %v1076
    %v1090 = vpop.f32.mrf.mxu0
    %v1091 = vadd.f32 0.0, %v1090
    %v1092 = vpop.f32.mrf.mxu0
    %1093 = vdwg.mxu0
    %1094 = vrot.lane.b32.xlu0 %v853, 48
    %v1095 = vpop.permute.xlu0 %1094
    %v1097 = vsel %vm235, %v1072, 0
    %v1100 = vsel %vm291, %v1095, 0
    %1102 = vmatpush.bf16.msra.mxu0 0
    %1103 = vmatpush.bf16.msra.mxu0 0
    %1104 = vmatpush.bf16.msra.mxu0 0
    %1105 = vmatpush.bf16.msra.mxu0 0
    %1106 = vmatpush.bf16.msra.mxu0 0
    %1107 = vmatpush.bf16.msra.mxu0 0
    %1108 = vmatpush.bf16.msra.mxu0 0
    %1109 = vmatpush.bf16.msra.mxu0 %v1100
    %1110 = vmatmul.bf16.gmra.mxu0 %v1097
    %v1111 = vpop.f32.mrf.mxu0
    %v1112 = vadd.f32 0.0, %v1111
    %v1113 = vpop.f32.mrf.mxu0
    %1114 = vdwg.mxu0
    %1117 = vrot.lane.b32.xlu0 %v1091, 16
    %v1118 = vpop.permute.xlu0 %1117
    %1119 = vrot.lane.b32.xlu0 %v1112, 16
    %v1120 = vpop.permute.xlu0 %1119
    %1123 = vst.msk [vmem:[#allocation2] sm:$0xff] %vm481, %v1118
    %1124 = vst.msk [vmem:[#allocation2 + $0x8] sm:$0xff] %vm481, %v1120
    %v1125 = vld [vmem:[#allocation2] sm:$0xff]
    %v1126 = vld [vmem:[#allocation2 + $0x8] sm:$0xff]
    %s1127 = scalar_lea.vmem %s6, 16
    %v1128 = vld [vmem:[%s1127] sm:$0xf]
    %v1129 = vld [vmem:[%s1127 + $0x4] sm:$0xf]
    %v1130 = vld [vmem:[%s1127 + $0x8] sm:$0xf]
    %v1131 = vld [vmem:[%s1127 + $0xc] sm:$0xf]
    %v1132 = vpack.c.bf16 %v1125, %v1125
    %v1133 = vpack.c.bf16 %v1126, %v1126
    %s1134 = scalar_lea.vmem %s7, 1
    %v1135 = vld [vmem:[%s1134] sm:$0x1]
    %v1137 = vperm.slane %v1135, 0
    %v1141 = vunpack.c.l.b16 %v1132
    %v1142 = vunpack.c.l.b16 %v1133
    %v1143 = vpack.c.b16 %v1142, %v1141
    %v1148 = vunpack.c.l.b16 %v1128
    %v1149 = vunpack.c.l.b16 %v1129
    %v1150 = vunpack.c.l.b16 %v1130
    %v1151 = vunpack.c.l.b16 %v1131
    %v1152 = vpack.c.b16 %v1149, %v1148
    %v1153 = vpack.c.b16 %v1151, %v1150
    %v1157 = vsel %vm68, %v1143, 0
    %1159 = vmatpush.bf16.msra.mxu0 0
    %1160 = vmatpush.bf16.msra.mxu0 0
    %1161 = vmatpush.bf16.msra.mxu0 0
    %1162 = vmatpush.bf16.msra.mxu0 0
    %1163 = vmatpush.bf16.msra.mxu0 0
    %1164 = vmatpush.bf16.msra.mxu0 0
    %1165 = vmatpush.bf16.msra.mxu0 %v1153
    %1166 = vmatpush.bf16.msra.mxu0 %v1152
    %1167 = vmatmul.bf16.gmra.mxu0 %v1157
    %v1168 = vpop.f32.mrf.mxu0
    %v1169 = vadd.f32 %v1137, %v1168
    %v1170 = vpop.f32.mrf.mxu0
    %v1171 = vadd.f32 %v1137, %v1170
    %1172 = vdwg.mxu0
    %v1173 = vadd.f32 %v1169, %v767
    %v1174 = vadd.f32 %v1171, %v768
    %s1175 = scalar_lea.vmem %s8, 1
    %v1176 = vld [vmem:[%s1175] sm:$0x1]
    %s1177 = scalar_lea.vmem %s9, 1
    %v1178 = vld [vmem:[%s1177] sm:$0x1]
    %v1179 = vsel %vm68, %v1173, 0.0
    %1180 = vadd.xlane.f32.xlu0 %v1179
    %v1181 = vpop.xlane.xlu0 %1180
    %v1182 = vsel %vm68, %v1174, 0.0
    %1183 = vadd.xlane.f32.xlu0 %v1182
    %v1184 = vpop.xlane.xlu0 %1183
    %v1185 = vmul.f32 %v1181, %v81
    %v1186 = vmul.f32 %v1184, %v81
    %v1187 = vsub.f32 %v1173, %v1185
    %v1188 = vsub.f32 %v1174, %v1186
    %v1189 = vmul.f32 %v1187, %v1187
    %v1190 = vmul.f32 %v1188, %v1188
    %v1191 = vsel %vm68, %v1189, 0.0
    %1192 = vadd.xlane.f32.xlu0 %v1191
    %v1193 = vpop.xlane.xlu0 %1192
    %v1194 = vsel %vm68, %v1190, 0.0
    %1195 = vadd.xlane.f32.xlu0 %v1194
    %v1196 = vpop.xlane.xlu0 %1195
    %v1197 = vmul.f32 %v1193, %v81
    %v1198 = vmul.f32 %v1196, %v81
    %v1199 = vadd.f32 %v1197, 1e-05
    %v1200 = vadd.f32 %v1198, 1e-05
    %v1201 = vrsqrt.pop %v1199
    %v1202 = vmul.f32 %v1201, %v1199
    %v1203 = vmul.f32 %v1202, %v1201
    %v1204 = vmul.f32 0.5, %v1203
    %v1205 = vsub.f32 1.5, %v1204
    %v1206 = vmul.f32 %v1201, %v1205
    %vm1207 = vweird.f32 %v1199
    %vm1208 = vweird.f32 %v1201
    %vm1209 = vmor %vm1207, %vm1208
    %v1210 = vsel %vm1209, %v1201, %v1206
    %v1211 = vrsqrt.pop %v1200
    %v1212 = vmul.f32 %v1211, %v1200
    %v1213 = vmul.f32 %v1212, %v1211
    %v1214 = vmul.f32 0.5, %v1213
    %v1215 = vsub.f32 1.5, %v1214
    %v1216 = vmul.f32 %v1211, %v1215
    %vm1217 = vweird.f32 %v1200
    %vm1218 = vweird.f32 %v1211
    %vm1219 = vmor %vm1217, %vm1218
    %v1220 = vsel %vm1219, %v1211, %v1216
    %v1221 = vmul.f32 %v1187, %v1210
    %v1222 = vmul.f32 %v1188, %v1220
    %v1224 = vperm.slane %v1176, 0
    %v1226 = vmul.f32 %v1221, %v1224
    %v1227 = vmul.f32 %v1222, %v1224
    %v1229 = vperm.slane %v1178, 0
    %v1231 = vadd.f32 %v1226, %v1229
    %v1232 = vadd.f32 %v1227, %v1229
    %s1233 = scalar_lea.vmem %s10, 16
    %v1234 = vld [vmem:[%s1233] sm:$0xf]
    %v1235 = vld [vmem:[%s1233 + $0x4] sm:$0xf]
    %v1236 = vld [vmem:[%s1233 + $0x8] sm:$0xf]
    %v1237 = vld [vmem:[%s1233 + $0xc] sm:$0xf]
    %v1238 = vpack.c.bf16 %v1231, %v1231
    %v1239 = vpack.c.bf16 %v1232, %v1232
    %s1240 = scalar_lea.vmem %s11, 1
    %v1241 = vld [vmem:[%s1240] sm:$0x1]
    %v1243 = vperm.slane %v1241, 0
    %v1247 = vunpack.c.l.b16 %v1238
    %v1248 = vunpack.c.l.b16 %v1239
    %v1249 = vpack.c.b16 %v1248, %v1247
    %v1254 = vunpack.c.l.b16 %v1234
    %v1255 = vunpack.c.l.b16 %v1235
    %v1256 = vunpack.c.l.b16 %v1236
    %v1257 = vunpack.c.l.b16 %v1237
    %v1258 = vpack.c.b16 %v1255, %v1254
    %v1259 = vpack.c.b16 %v1257, %v1256
    %v1263 = vsel %vm68, %v1249, 0
    %1265 = vmatpush.bf16.msra.mxu0 0
    %1266 = vmatpush.bf16.msra.mxu0 0
    %1267 = vmatpush.bf16.msra.mxu0 0
    %1268 = vmatpush.bf16.msra.mxu0 0
    %1269 = vmatpush.bf16.msra.mxu0 0
    %1270 = vmatpush.bf16.msra.mxu0 0
    %1271 = vmatpush.bf16.msra.mxu0 %v1259
    %1272 = vmatpush.bf16.msra.mxu0 %v1258
    %1273 = vmatmul.bf16.gmra.mxu0 %v1263
    %v1274 = vpop.f32.mrf.mxu0
    %v1275 = vadd.f32 %v1243, %v1274
    %v1276 = vpop.f32.mrf.mxu0
    %v1277 = vadd.f32 %v1243, %v1276
    %1278 = vdwg.mxu0
    %v1279 = vmul.f32 %v1275, %v1275
    %v1280 = vmul.f32 %v1277, %v1277
    %v1281 = vmul.f32 %v1275, %v1279
    %v1282 = vmul.f32 %v1277, %v1280
    %v1283 = vmul.f32 %v1281, 0.044715
    %v1284 = vmul.f32 %v1282, 0.044715
    %v1285 = vadd.f32 %v1275, %v1283
    %v1286 = vadd.f32 %v1277, %v1284
    %v1287 = vmul.f32 %v1285, 0.7978846
    %v1288 = vmul.f32 %v1286, 0.7978846
    %v1289 = vtanh.pop %v1287
    %v1290 = vtanh.pop %v1288
    %v1291 = vadd.f32 %v1289, 1.0
    %v1292 = vadd.f32 %v1290, 1.0
    %v1293 = vmul.f32 %v1291, 0.5
    %v1294 = vmul.f32 %v1292, 0.5
    %v1295 = vmul.f32 %v1275, %v1293
    %v1296 = vmul.f32 %v1277, %v1294
    %s1297 = scalar_lea.vmem %s12, 32
    %v1298 = vld [vmem:[%s1297] sm:$0xf]
    %v1299 = vld [vmem:[%s1297 + $0x4] sm:$0xf]
    %v1300 = vld [vmem:[%s1297 + $0x8] sm:$0xf]
    %v1301 = vld [vmem:[%s1297 + $0xc] sm:$0xf]
    %v1302 = vld [vmem:[%s1297 + $0x10] sm:$0xf]
    %v1303 = vld [vmem:[%s1297 + $0x14] sm:$0xf]
    %v1304 = vld [vmem:[%s1297 + $0x18] sm:$0xf]
    %v1305 = vld [vmem:[%s1297 + $0x1c] sm:$0xf]
    %v1306 = vpack.c.bf16 %v1295, %v1295
    %v1307 = vpack.c.bf16 %v1296, %v1296
    %s1308 = scalar_lea.vmem %s13, 1
    %v1309 = vld [vmem:[%s1308] sm:$0x1]
    %v1311 = vperm.slane %v1309, 0
    %v1315 = vunpack.c.l.b16 %v1306
    %v1316 = vunpack.c.l.b16 %v1307
    %v1317 = vpack.c.b16 %v1316, %v1315
    %v1326 = vunpack.c.l.b16 %v1298
    %v1327 = vunpack.c.l.b16 %v1299
    %v1328 = vunpack.c.l.b16 %v1300
    %v1329 = vunpack.c.l.b16 %v1301
    %v1330 = vunpack.c.l.b16 %v1302
    %v1331 = vunpack.c.l.b16 %v1303
    %v1332 = vunpack.c.l.b16 %v1304
    %v1333 = vunpack.c.l.b16 %v1305
    %v1334 = vpack.c.b16 %v1327, %v1326
    %v1335 = vpack.c.b16 %v1329, %v1328
    %v1336 = vpack.c.b16 %v1331, %v1330
    %v1337 = vpack.c.b16 %v1333, %v1332
    %v1343 = vsel %vm693, %v1317, 0
    %1345 = vmatpush.bf16.msra.mxu0 0
    %1346 = vmatpush.bf16.msra.mxu0 0
    %1347 = vmatpush.bf16.msra.mxu0 0
    %1348 = vmatpush.bf16.msra.mxu0 0
    %1349 = vmatpush.bf16.msra.mxu0 %v1337
    %1350 = vmatpush.bf16.msra.mxu0 %v1336
    %1351 = vmatpush.bf16.msra.mxu0 %v1335
    %1352 = vmatpush.bf16.msra.mxu0 %v1334
    %1353 = vmatmul.bf16.gmra.mxu0 %v1343
    %v1354 = vpop.f32.mrf.mxu0
    %v1355 = vadd.f32 %v1311, %v1354
    %v1356 = vpop.f32.mrf.mxu0
    %v1357 = vadd.f32 %v1311, %v1356
    %1358 = vdwg.mxu0
    %v1359 = vadd.f32 %v1355, %v1231
    %v1360 = vadd.f32 %v1357, %v1232
    %s1361 = scalar_lea.vmem %s14, 1
    %v1362 = vld [vmem:[%s1361] sm:$0x1]
    %s1363 = scalar_lea.vmem %s15, 1
    %v1364 = vld [vmem:[%s1363] sm:$0x1]
    %v1365 = vsel %vm68, %v1359, 0.0
    %1366 = vadd.xlane.f32.xlu0 %v1365
    %v1367 = vpop.xlane.xlu0 %1366
    %v1368 = vsel %vm68, %v1360, 0.0
    %1369 = vadd.xlane.f32.xlu0 %v1368
    %v1370 = vpop.xlane.xlu0 %1369
    %v1371 = vmul.f32 %v1367, %v81
    %v1372 = vmul.f32 %v1370, %v81
    %v1373 = vsub.f32 %v1359, %v1371
    %v1374 = vsub.f32 %v1360, %v1372
    %v1375 = vmul.f32 %v1373, %v1373
    %v1376 = vmul.f32 %v1374, %v1374
    %v1377 = vsel %vm68, %v1375, 0.0
    %1378 = vadd.xlane.f32.xlu0 %v1377
    %v1379 = vpop.xlane.xlu0 %1378
    %v1380 = vsel %vm68, %v1376, 0.0
    %1381 = vadd.xlane.f32.xlu0 %v1380
    %v1382 = vpop.xlane.xlu0 %1381
    %v1383 = vmul.f32 %v1379, %v81
    %v1384 = vmul.f32 %v1382, %v81
    %v1385 = vadd.f32 %v1383, 1e-05
    %v1386 = vadd.f32 %v1384, 1e-05
    %v1387 = vrsqrt.pop %v1385
    %v1388 = vmul.f32 %v1387, %v1385
    %v1389 = vmul.f32 %v1388, %v1387
    %v1390 = vmul.f32 0.5, %v1389
    %v1391 = vsub.f32 1.5, %v1390
    %v1392 = vmul.f32 %v1387, %v1391
    %vm1393 = vweird.f32 %v1385
    %vm1394 = vweird.f32 %v1387
    %vm1395 = vmor %vm1393, %vm1394
    %v1396 = vsel %vm1395, %v1387, %v1392
    %v1397 = vrsqrt.pop %v1386
    %v1398 = vmul.f32 %v1397, %v1386
    %v1399 = vmul.f32 %v1398, %v1397
    %v1400 = vmul.f32 0.5, %v1399
    %v1401 = vsub.f32 1.5, %v1400
    %v1402 = vmul.f32 %v1397, %v1401
    %vm1403 = vweird.f32 %v1386
    %vm1404 = vweird.f32 %v1397
    %vm1405 = vmor %vm1403, %vm1404
    %v1406 = vsel %vm1405, %v1397, %v1402
    %v1407 = vmul.f32 %v1373, %v1396
    %v1408 = vmul.f32 %v1374, %v1406
    %v1410 = vperm.slane %v1362, 0
    %v1412 = vmul.f32 %v1407, %v1410
    %v1413 = vmul.f32 %v1408, %v1410
    %v1415 = vperm.slane %v1364, 0
    %v1417 = vadd.f32 %v1412, %v1415
    %v1418 = vadd.f32 %v1413, %v1415
    %v1421 = vrot.slane %v1418, 7
    %v1422 = vsel %vm772, %v1421, %v1417
    %1423 = vrot.lane.b32.xlu0 %v1422, 64
    %v1424 = vpop.permute.xlu0 %1423
    %vm1426 = vcmask 779776
    %1427 = vst.msk [vmem:[#allocation3] sm:$0x3] %vm1426, %v1424
    %s1428 = scalar_lea.vmem %s4, 32
    %v1429 = vld [vmem:[%s1428] sm:$0xf]
    %v1430 = vld [vmem:[%s1428 + $0x4] sm:$0xf]
    %v1431 = vld [vmem:[%s1428 + $0x8] sm:$0xf]
    %v1432 = vld [vmem:[%s1428 + $0xc] sm:$0xf]
    %v1433 = vpack.c.bf16 %v1417, %v1417
    %v1434 = vpack.c.bf16 %v1418, %v1418
    %s1435 = scalar_lea.vmem %s5, 2
    %v1436 = vld [vmem:[%s1435] sm:$0x1]
    %v1438 = vperm.slane %v1436, 0
    %v1442 = vunpack.c.l.b16 %v1433
    %v1443 = vunpack.c.l.b16 %v1434
    %v1444 = vpack.c.b16 %v1443, %v1442
    %v1449 = vunpack.c.l.b16 %v1429
    %v1450 = vunpack.c.l.b16 %v1430
    %v1451 = vunpack.c.l.b16 %v1431
    %v1452 = vunpack.c.l.b16 %v1432
    %v1453 = vpack.c.b16 %v1450, %v1449
    %v1454 = vpack.c.b16 %v1452, %v1451
    %v1458 = vsel %vm68, %v1444, 0
    %1460 = vmatpush.bf16.msra.mxu0 0
    %1461 = vmatpush.bf16.msra.mxu0 0
    %1462 = vmatpush.bf16.msra.mxu0 0
    %1463 = vmatpush.bf16.msra.mxu0 0
    %1464 = vmatpush.bf16.msra.mxu0 0
    %1465 = vmatpush.bf16.msra.mxu0 0
    %1466 = vmatpush.bf16.msra.mxu0 %v1454
    %1467 = vmatpush.bf16.msra.mxu0 %v1453
    %1468 = vmatmul.bf16.gmra.mxu0 %v1458
    %v1469 = vpop.f32.mrf.mxu0
    %v1470 = vadd.f32 %v1438, %v1469
    %v1471 = vpop.f32.mrf.mxu0
    %v1472 = vadd.f32 %v1438, %v1471
    %1473 = vdwg.mxu0
    %v1474 = vpack.c.bf16 %v1470, %v1470
    %v1475 = vpack.c.bf16 %v1472, %v1472
    %v1477 = vunpack.c.l.b16 %v1474
    %v1478 = vpack.c.b16 %v1477, %v1477
    %1479 = vrot.lane.b32.xlu0 %v1478, 96
    %v1480 = vpop.permute.xlu0 %1479
    %v1482 = vsel %vm181, %v1474, 0
    %v1485 = vsel %vm181, %v1480, 0
    %1487 = vmatpush.bf16.xpose.msra.mxu0 0
    %1488 = vmatpush.bf16.xpose.msra.mxu0 0
    %1489 = vmatpush.bf16.xpose.msra.mxu0 0
    %1490 = vmatpush.bf16.xpose.msra.mxu0 0
    %1491 = vmatpush.bf16.xpose.msra.mxu0 0
    %1492 = vmatpush.bf16.xpose.msra.mxu0 0
    %1493 = vmatpush.bf16.xpose.msra.mxu0 0
    %1494 = vmatpush.bf16.xpose.msra.mxu0 %v1485
    %1495 = vmatmul.bf16.gmra.mxu0 %v1482
    %v1496 = vpop.f32.mrf.mxu0
    %v1497 = vadd.f32 0.0, %v1496
    %v1498 = vpop.f32.mrf.mxu0
    %1499 = vdwg.mxu0
    %v1501 = vunpack.c.l.b16 %v1475
    %v1502 = vpack.c.b16 %v1501, %v1501
    %1503 = vrot.lane.b32.xlu0 %v1502, 96
    %v1504 = vpop.permute.xlu0 %1503
    %v1506 = vsel %vm181, %v1475, 0
    %v1509 = vsel %vm181, %v1504, 0
    %1511 = vmatpush.bf16.xpose.msra.mxu0 0
    %1512 = vmatpush.bf16.xpose.msra.mxu0 0
    %1513 = vmatpush.bf16.xpose.msra.mxu0 0
    %1514 = vmatpush.bf16.xpose.msra.mxu0 0
    %1515 = vmatpush.bf16.xpose.msra.mxu0 0
    %1516 = vmatpush.bf16.xpose.msra.mxu0 0
    %1517 = vmatpush.bf16.xpose.msra.mxu0 0
    %1518 = vmatpush.bf16.xpose.msra.mxu0 %v1509
    %1519 = vmatmul.bf16.gmra.mxu0 %v1506
    %v1520 = vpop.f32.mrf.mxu0
    %v1521 = vadd.f32 0.0, %v1520
    %v1522 = vpop.f32.mrf.mxu0
    %1523 = vdwg.mxu0
    %v1524 = vmul.f32 %v1497, 0.25
    %v1525 = vmul.f32 %v1521, 0.25
    %v1526 = vadd.f32 %v1524, %v229
    %v1527 = vadd.f32 %v1525, %v230
    %v1528 = vsel %vm235, %v1526, -inf
    %1529 = vmax.xlane.f32.xlu0 %v1528
    %v1530 = vpop.xlane.xlu0 %1529
    %v1531 = vsel %vm235, %v1527, -inf
    %1532 = vmax.xlane.f32.xlu0 %v1531
    %v1533 = vpop.xlane.xlu0 %1532
    %v1534 = vsub.f32 %v1526, %v1530
    %v1535 = vsub.f32 %v1527, %v1533
    %v1536 = vmul.f32 %v1534, 1.442695
    %v1537 = vpow.pop %v1536
    %v1538 = vmul.f32 %v1535, 1.442695
    %v1539 = vpow.pop %v1538
    %v1540 = vsel %vm235, %v1537, 0.0
    %1541 = vadd.xlane.f32.xlu0 %v1540
    %v1542 = vpop.xlane.xlu0 %1541
    %v1543 = vsel %vm235, %v1539, 0.0
    %1544 = vadd.xlane.f32.xlu0 %v1543
    %v1545 = vpop.xlane.xlu0 %1544
    %v1546 = vrcp.pop %v1542
    %v1547 = vmul.f32 %v1542, %v1546
    %v1548 = vsub.f32 1.0, %v1547
    %v1549 = vmul.f32 %v1546, %v1548
    %v1550 = vadd.f32 %v1546, %v1549
    %vm1551 = vweird.f32 %v1542
    %vm1552 = vweird.f32 %v1546
    %vm1553 = vmor %vm1551, %vm1552
    %v1554 = vsel %vm1553, %v1546, %v1550
    %v1555 = vand.u32 2147483647, %v1542
    %vm1556 = vcmp.eq.f32.partialorder %v1555, 8.507059e+37
    %v1557 = vand.u32 %v1542, 2147483648
    %v1558 = vor.u32 1.1754944e-38, %v1557
    %v1559 = vsel %vm1556, %v1558, %v1554
    %v1560 = vmul.f32 %v1537, %v1559
    %v1561 = vrcp.pop %v1545
    %v1562 = vmul.f32 %v1545, %v1561
    %v1563 = vsub.f32 1.0, %v1562
    %v1564 = vmul.f32 %v1561, %v1563
    %v1565 = vadd.f32 %v1561, %v1564
    %vm1566 = vweird.f32 %v1545
    %vm1567 = vweird.f32 %v1561
    %vm1568 = vmor %vm1566, %vm1567
    %v1569 = vsel %vm1568, %v1561, %v1565
    %v1570 = vand.u32 2147483647, %v1545
    %vm1571 = vcmp.eq.f32.partialorder %v1570, 8.507059e+37
    %v1572 = vand.u32 %v1545, 2147483648
    %v1573 = vor.u32 1.1754944e-38, %v1572
    %v1574 = vsel %vm1571, %v1573, %v1569
    %v1575 = vmul.f32 %v1539, %v1574
    %v1576 = vpack.c.bf16 %v1560, %v1560
    %v1577 = vpack.c.bf16 %v1575, %v1575
    %1578 = vrot.lane.b32.xlu0 %v1478, 64
    %v1579 = vpop.permute.xlu0 %1578
    %v1581 = vsel %vm235, %v1576, 0
    %v1584 = vsel %vm291, %v1579, 0
    %1586 = vmatpush.bf16.msra.mxu0 0
    %1587 = vmatpush.bf16.msra.mxu0 0
    %1588 = vmatpush.bf16.msra.mxu0 0
    %1589 = vmatpush.bf16.msra.mxu0 0
    %1590 = vmatpush.bf16.msra.mxu0 0
    %1591 = vmatpush.bf16.msra.mxu0 0
    %1592 = vmatpush.bf16.msra.mxu0 0
    %1593 = vmatpush.bf16.msra.mxu0 %v1584
    %1594 = vmatmul.bf16.gmra.mxu0 %v1581
    %v1595 = vpop.f32.mrf.mxu0
    %v1596 = vadd.f32 0.0, %v1595
    %v1597 = vpop.f32.mrf.mxu0
    %1598 = vdwg.mxu0
    %1599 = vrot.lane.b32.xlu0 %v1502, 64
    %v1600 = vpop.permute.xlu0 %1599
    %v1602 = vsel %vm235, %v1577, 0
    %v1605 = vsel %vm291, %v1600, 0
    %1607 = vmatpush.bf16.msra.mxu0 0
    %1608 = vmatpush.bf16.msra.mxu0 0
    %1609 = vmatpush.bf16.msra.mxu0 0
    %1610 = vmatpush.bf16.msra.mxu0 0
    %1611 = vmatpush.bf16.msra.mxu0 0
    %1612 = vmatpush.bf16.msra.mxu0 0
    %1613 = vmatpush.bf16.msra.mxu0 0
    %1614 = vmatpush.bf16.msra.mxu0 %v1605
    %1615 = vmatmul.bf16.gmra.mxu0 %v1602
    %v1616 = vpop.f32.mrf.mxu0
    %v1617 = vadd.f32 0.0, %v1616
    %v1618 = vpop.f32.mrf.mxu0
    %1619 = vdwg.mxu0
    %1620 = vst.msk [vmem:[#allocation2] sm:$0xff] %vm181, %v1596
    %1621 = vst.msk [vmem:[#allocation2 + $0x8] sm:$0xff] %vm181, %v1617
    %1622 = vrot.lane.b32.xlu0 %v1478, 112
    %v1623 = vpop.permute.xlu0 %1622
    %1624 = vrot.lane.b32.xlu0 %v1478, 80
    %v1625 = vpop.permute.xlu0 %1624
    %v1627 = vsel %vm181, %v1623, 0
    %v1630 = vsel %vm181, %v1625, 0
    %1632 = vmatpush.bf16.xpose.msra.mxu0 0
    %1633 = vmatpush.bf16.xpose.msra.mxu0 0
    %1634 = vmatpush.bf16.xpose.msra.mxu0 0
    %1635 = vmatpush.bf16.xpose.msra.mxu0 0
    %1636 = vmatpush.bf16.xpose.msra.mxu0 0
    %1637 = vmatpush.bf16.xpose.msra.mxu0 0
    %1638 = vmatpush.bf16.xpose.msra.mxu0 0
    %1639 = vmatpush.bf16.xpose.msra.mxu0 %v1630
    %1640 = vmatmul.bf16.gmra.mxu0 %v1627
    %v1641 = vpop.f32.mrf.mxu0
    %v1642 = vadd.f32 0.0, %v1641
    %v1643 = vpop.f32.mrf.mxu0
    %1644 = vdwg.mxu0
    %1645 = vrot.lane.b32.xlu0 %v1502, 112
    %v1646 = vpop.permute.xlu0 %1645
    %1647 = vrot.lane.b32.xlu0 %v1502, 80
    %v1648 = vpop.permute.xlu0 %1647
    %v1650 = vsel %vm181, %v1646, 0
    %v1653 = vsel %vm181, %v1648, 0
    %1655 = vmatpush.bf16.xpose.msra.mxu0 0
    %1656 = vmatpush.bf16.xpose.msra.mxu0 0
    %1657 = vmatpush.bf16.xpose.msra.mxu0 0
    %1658 = vmatpush.bf16.xpose.msra.mxu0 0
    %1659 = vmatpush.bf16.xpose.msra.mxu0 0
    %1660 = vmatpush.bf16.xpose.msra.mxu0 0
    %1661 = vmatpush.bf16.xpose.msra.mxu0 0
    %1662 = vmatpush.bf16.xpose.msra.mxu0 %v1653
    %1663 = vmatmul.bf16.gmra.mxu0 %v1650
    %v1664 = vpop.f32.mrf.mxu0
    %v1665 = vadd.f32 0.0, %v1664
    %v1666 = vpop.f32.mrf.mxu0
    %1667 = vdwg.mxu0
    %v1668 = vmul.f32 %v1642, 0.25
    %v1669 = vmul.f32 %v1665, 0.25
    %v1670 = vadd.f32 %v1668, %v229
    %v1671 = vadd.f32 %v1669, %v230
    %v1672 = vsel %vm235, %v1670, -inf
    %1673 = vmax.xlane.f32.xlu0 %v1672
    %v1674 = vpop.xlane.xlu0 %1673
    %v1675 = vsel %vm235, %v1671, -inf
    %1676 = vmax.xlane.f32.xlu0 %v1675
    %v1677 = vpop.xlane.xlu0 %1676
    %v1678 = vsub.f32 %v1670, %v1674
    %v1679 = vsub.f32 %v1671, %v1677
    %v1680 = vmul.f32 %v1678, 1.442695
    %v1681 = vpow.pop %v1680
    %v1682 = vmul.f32 %v1679, 1.442695
    %v1683 = vpow.pop %v1682
    %v1684 = vsel %vm235, %v1681, 0.0
    %1685 = vadd.xlane.f32.xlu0 %v1684
    %v1686 = vpop.xlane.xlu0 %1685
    %v1687 = vsel %vm235, %v1683, 0.0
    %1688 = vadd.xlane.f32.xlu0 %v1687
    %v1689 = vpop.xlane.xlu0 %1688
    %v1690 = vrcp.pop %v1686
    %v1691 = vmul.f32 %v1686, %v1690
    %v1692 = vsub.f32 1.0, %v1691
    %v1693 = vmul.f32 %v1690, %v1692
    %v1694 = vadd.f32 %v1690, %v1693
    %vm1695 = vweird.f32 %v1686
    %vm1696 = vweird.f32 %v1690
    %vm1697 = vmor %vm1695, %vm1696
    %v1698 = vsel %vm1697, %v1690, %v1694
    %v1699 = vand.u32 2147483647, %v1686
    %vm1700 = vcmp.eq.f32.partialorder %v1699, 8.507059e+37
    %v1701 = vand.u32 %v1686, 2147483648
    %v1702 = vor.u32 1.1754944e-38, %v1701
    %v1703 = vsel %vm1700, %v1702, %v1698
    %v1704 = vmul.f32 %v1681, %v1703
    %v1705 = vrcp.pop %v1689
    %v1706 = vmul.f32 %v1689, %v1705
    %v1707 = vsub.f32 1.0, %v1706
    %v1708 = vmul.f32 %v1705, %v1707
    %v1709 = vadd.f32 %v1705, %v1708
    %vm1710 = vweird.f32 %v1689
    %vm1711 = vweird.f32 %v1705
    %vm1712 = vmor %vm1710, %vm1711
    %v1713 = vsel %vm1712, %v1705, %v1709
    %v1714 = vand.u32 2147483647, %v1689
    %vm1715 = vcmp.eq.f32.partialorder %v1714, 8.507059e+37
    %v1716 = vand.u32 %v1689, 2147483648
    %v1717 = vor.u32 1.1754944e-38, %v1716
    %v1718 = vsel %vm1715, %v1717, %v1713
    %v1719 = vmul.f32 %v1683, %v1718
    %v1720 = vpack.c.bf16 %v1704, %v1704
    %v1721 = vpack.c.bf16 %v1719, %v1719
    %1722 = vrot.lane.b32.xlu0 %v1478, 48
    %v1723 = vpop.permute.xlu0 %1722
    %v1725 = vsel %vm235, %v1720, 0
    %v1728 = vsel %vm291, %v1723, 0
    %1730 = vmatpush.bf16.msra.mxu0 0
    %1731 = vmatpush.bf16.msra.mxu0 0
    %1732 = vmatpush.bf16.msra.mxu0 0
    %1733 = vmatpush.bf16.msra.mxu0 0
    %1734 = vmatpush.bf16.msra.mxu0 0
    %1735 = vmatpush.bf16.msra.mxu0 0
    %1736 = vmatpush.bf16.msra.mxu0 0
    %1737 = vmatpush.bf16.msra.mxu0 %v1728
    %1738 = vmatmul.bf16.gmra.mxu0 %v1725
    %v1739 = vpop.f32.mrf.mxu0
    %v1740 = vadd.f32 0.0, %v1739
    %v1741 = vpop.f32.mrf.mxu0
    %1742 = vdwg.mxu0
    %1743 = vrot.lane.b32.xlu0 %v1502, 48
    %v1744 = vpop.permute.xlu0 %1743
    %v1746 = vsel %vm235, %v1721, 0
    %v1749 = vsel %vm291, %v1744, 0
    %1751 = vmatpush.bf16.msra.mxu0 0
    %1752 = vmatpush.bf16.msra.mxu0 0
    %1753 = vmatpush.bf16.msra.mxu0 0
    %1754 = vmatpush.bf16.msra.mxu0 0
    %1755 = vmatpush.bf16.msra.mxu0 0
    %1756 = vmatpush.bf16.msra.mxu0 0
    %1757 = vmatpush.bf16.msra.mxu0 0
    %1758 = vmatpush.bf16.msra.mxu0 %v1749
    %1759 = vmatmul.bf16.gmra.mxu0 %v1746
    %v1760 = vpop.f32.mrf.mxu0
    %v1761 = vadd.f32 0.0, %v1760
    %v1762 = vpop.f32.mrf.mxu0
    %1763 = vdwg.mxu0
    %1766 = vrot.lane.b32.xlu0 %v1740, 16
    %v1767 = vpop.permute.xlu0 %1766
    %1768 = vrot.lane.b32.xlu0 %v1761, 16
    %v1769 = vpop.permute.xlu0 %1768
    %1772 = vst.msk [vmem:[#allocation2] sm:$0xff] %vm481, %v1767
    %1773 = vst.msk [vmem:[#allocation2 + $0x8] sm:$0xff] %vm481, %v1769
    %v1774 = vld [vmem:[#allocation2] sm:$0xff]
    %v1775 = vld [vmem:[#allocation2 + $0x8] sm:$0xff]
    %s1776 = scalar_lea.vmem %s6, 32
    %v1777 = vld [vmem:[%s1776] sm:$0xf]
    %v1778 = vld [vmem:[%s1776 + $0x4] sm:$0xf]
    %v1779 = vld [vmem:[%s1776 + $0x8] sm:$0xf]
    %v1780 = vld [vmem:[%s1776 + $0xc] sm:$0xf]
    %v1781 = vpack.c.bf16 %v1774, %v1774
    %v1782 = vpack.c.bf16 %v1775, %v1775
    %s1783 = scalar_lea.vmem %s7, 2
    %v1784 = vld [vmem:[%s1783] sm:$0x1]
    %v1786 = vperm.slane %v1784, 0
    %v1790 = vunpack.c.l.b16 %v1781
    %v1791 = vunpack.c.l.b16 %v1782
    %v1792 = vpack.c.b16 %v1791, %v1790
    %v1797 = vunpack.c.l.b16 %v1777
    %v1798 = vunpack.c.l.b16 %v1778
    %v1799 = vunpack.c.l.b16 %v1779
    %v1800 = vunpack.c.l.b16 %v1780
    %v1801 = vpack.c.b16 %v1798, %v1797
    %v1802 = vpack.c.b16 %v1800, %v1799
    %v1806 = vsel %vm68, %v1792, 0
    %1808 = vmatpush.bf16.msra.mxu0 0
    %1809 = vmatpush.bf16.msra.mxu0 0
    %1810 = vmatpush.bf16.msra.mxu0 0
    %1811 = vmatpush.bf16.msra.mxu0 0
    %1812 = vmatpush.bf16.msra.mxu0 0
    %1813 = vmatpush.bf16.msra.mxu0 0
    %1814 = vmatpush.bf16.msra.mxu0 %v1802
    %1815 = vmatpush.bf16.msra.mxu0 %v1801
    %1816 = vmatmul.bf16.gmra.mxu0 %v1806
    %v1817 = vpop.f32.mrf.mxu0
    %v1818 = vadd.f32 %v1786, %v1817
    %v1819 = vpop.f32.mrf.mxu0
    %v1820 = vadd.f32 %v1786, %v1819
    %1821 = vdwg.mxu0
    %v1822 = vadd.f32 %v1818, %v1417
    %v1823 = vadd.f32 %v1820, %v1418
    %s1824 = scalar_lea.vmem %s8, 2
    %v1825 = vld [vmem:[%s1824] sm:$0x1]
    %s1826 = scalar_lea.vmem %s9, 2
    %v1827 = vld [vmem:[%s1826] sm:$0x1]
    %v1828 = vsel %vm68, %v1822, 0.0
    %1829 = vadd.xlane.f32.xlu0 %v1828
    %v1830 = vpop.xlane.xlu0 %1829
    %v1831 = vsel %vm68, %v1823, 0.0
    %1832 = vadd.xlane.f32.xlu0 %v1831
    %v1833 = vpop.xlane.xlu0 %1832
    %v1834 = vmul.f32 %v1830, %v81
    %v1835 = vmul.f32 %v1833, %v81
    %v1836 = vsub.f32 %v1822, %v1834
    %v1837 = vsub.f32 %v1823, %v1835
    %v1838 = vmul.f32 %v1836, %v1836
    %v1839 = vmul.f32 %v1837, %v1837
    %v1840 = vsel %vm68, %v1838, 0.0
    %1841 = vadd.xlane.f32.xlu0 %v1840
    %v1842 = vpop.xlane.xlu0 %1841
    %v1843 = vsel %vm68, %v1839, 0.0
    %1844 = vadd.xlane.f32.xlu0 %v1843
    %v1845 = vpop.xlane.xlu0 %1844
    %v1846 = vmul.f32 %v1842, %v81
    %v1847 = vmul.f32 %v1845, %v81
    %v1848 = vadd.f32 %v1846, 1e-05
    %v1849 = vadd.f32 %v1847, 1e-05
    %v1850 = vrsqrt.pop %v1848
    %v1851 = vmul.f32 %v1850, %v1848
    %v1852 = vmul.f32 %v1851, %v1850
    %v1853 = vmul.f32 0.5, %v1852
    %v1854 = vsub.f32 1.5, %v1853
    %v1855 = vmul.f32 %v1850, %v1854
    %vm1856 = vweird.f32 %v1848
    %vm1857 = vweird.f32 %v1850
    %vm1858 = vmor %vm1856, %vm1857
    %v1859 = vsel %vm1858, %v1850, %v1855
    %v1860 = vrsqrt.pop %v1849
    %v1861 = vmul.f32 %v1860, %v1849
    %v1862 = vmul.f32 %v1861, %v1860
    %v1863 = vmul.f32 0.5, %v1862
    %v1864 = vsub.f32 1.5, %v1863
    %v1865 = vmul.f32 %v1860, %v1864
    %vm1866 = vweird.f32 %v1849
    %vm1867 = vweird.f32 %v1860
    %vm1868 = vmor %vm1866, %vm1867
    %v1869 = vsel %vm1868, %v1860, %v1865
    %v1870 = vmul.f32 %v1836, %v1859
    %v1871 = vmul.f32 %v1837, %v1869
    %v1873 = vperm.slane %v1825, 0
    %v1875 = vmul.f32 %v1870, %v1873
    %v1876 = vmul.f32 %v1871, %v1873
    %v1878 = vperm.slane %v1827, 0
    %v1880 = vadd.f32 %v1875, %v1878
    %v1881 = vadd.f32 %v1876, %v1878
    %s1882 = scalar_lea.vmem %s10, 32
    %v1883 = vld [vmem:[%s1882] sm:$0xf]
    %v1884 = vld [vmem:[%s1882 + $0x4] sm:$0xf]
    %v1885 = vld [vmem:[%s1882 + $0x8] sm:$0xf]
    %v1886 = vld [vmem:[%s1882 + $0xc] sm:$0xf]
    %v1887 = vpack.c.bf16 %v1880, %v1880
    %v1888 = vpack.c.bf16 %v1881, %v1881
    %s1889 = scalar_lea.vmem %s11, 2
    %v1890 = vld [vmem:[%s1889] sm:$0x1]
    %v1892 = vperm.slane %v1890, 0
    %v1896 = vunpack.c.l.b16 %v1887
    %v1897 = vunpack.c.l.b16 %v1888
    %v1898 = vpack.c.b16 %v1897, %v1896
    %v1903 = vunpack.c.l.b16 %v1883
    %v1904 = vunpack.c.l.b16 %v1884
    %v1905 = vunpack.c.l.b16 %v1885
    %v1906 = vunpack.c.l.b16 %v1886
    %v1907 = vpack.c.b16 %v1904, %v1903
    %v1908 = vpack.c.b16 %v1906, %v1905
    %v1912 = vsel %vm68, %v1898, 0
    %1914 = vmatpush.bf16.msra.mxu0 0
    %1915 = vmatpush.bf16.msra.mxu0 0
    %1916 = vmatpush.bf16.msra.mxu0 0
    %1917 = vmatpush.bf16.msra.mxu0 0
    %1918 = vmatpush.bf16.msra.mxu0 0
    %1919 = vmatpush.bf16.msra.mxu0 0
    %1920 = vmatpush.bf16.msra.mxu0 %v1908
    %1921 = vmatpush.bf16.msra.mxu0 %v1907
    %1922 = vmatmul.bf16.gmra.mxu0 %v1912
    %v1923 = vpop.f32.mrf.mxu0
    %v1924 = vadd.f32 %v1892, %v1923
    %v1925 = vpop.f32.mrf.mxu0
    %v1926 = vadd.f32 %v1892, %v1925
    %1927 = vdwg.mxu0
    %v1928 = vmul.f32 %v1924, %v1924
    %v1929 = vmul.f32 %v1926, %v1926
    %v1930 = vmul.f32 %v1924, %v1928
    %v1931 = vmul.f32 %v1926, %v1929
    %v1932 = vmul.f32 %v1930, 0.044715
    %v1933 = vmul.f32 %v1931, 0.044715
    %v1934 = vadd.f32 %v1924, %v1932
    %v1935 = vadd.f32 %v1926, %v1933
    %v1936 = vmul.f32 %v1934, 0.7978846
    %v1937 = vmul.f32 %v1935, 0.7978846
    %v1938 = vtanh.pop %v1936
    %v1939 = vtanh.pop %v1937
    %v1940 = vadd.f32 %v1938, 1.0
    %v1941 = vadd.f32 %v1939, 1.0
    %v1942 = vmul.f32 %v1940, 0.5
    %v1943 = vmul.f32 %v1941, 0.5
    %v1944 = vmul.f32 %v1924, %v1942
    %v1945 = vmul.f32 %v1926, %v1943
    %s1946 = scalar_lea.vmem %s12, 64
    %v1947 = vld [vmem:[%s1946] sm:$0xf]
    %v1948 = vld [vmem:[%s1946 + $0x4] sm:$0xf]
    %v1949 = vld [vmem:[%s1946 + $0x8] sm:$0xf]
    %v1950 = vld [vmem:[%s1946 + $0xc] sm:$0xf]
    %v1951 = vld [vmem:[%s1946 + $0x10] sm:$0xf]
    %v1952 = vld [vmem:[%s1946 + $0x14] sm:$0xf]
    %v1953 = vld [vmem:[%s1946 + $0x18] sm:$0xf]
    %v1954 = vld [vmem:[%s1946 + $0x1c] sm:$0xf]
    %v1955 = vpack.c.bf16 %v1944, %v1944
    %v1956 = vpack.c.bf16 %v1945, %v1945
    %s1957 = scalar_lea.vmem %s13, 2
    %v1958 = vld [vmem:[%s1957] sm:$0x1]
    %v1960 = vperm.slane %v1958, 0
    %v1964 = vunpack.c.l.b16 %v1955
    %v1965 = vunpack.c.l.b16 %v1956
    %v1966 = vpack.c.b16 %v1965, %v1964
    %v1975 = vunpack.c.l.b16 %v1947
    %v1976 = vunpack.c.l.b16 %v1948
    %v1977 = vunpack.c.l.b16 %v1949
    %v1978 = vunpack.c.l.b16 %v1950
    %v1979 = vunpack.c.l.b16 %v1951
    %v1980 = vunpack.c.l.b16 %v1952
    %v1981 = vunpack.c.l.b16 %v1953
    %v1982 = vunpack.c.l.b16 %v1954
    %v1983 = vpack.c.b16 %v1976, %v1975
    %v1984 = vpack.c.b16 %v1978, %v1977
    %v1985 = vpack.c.b16 %v1980, %v1979
    %v1986 = vpack.c.b16 %v1982, %v1981
    %v1992 = vsel %vm693, %v1966, 0
    %1994 = vmatpush.bf16.msra.mxu0 0
    %1995 = vmatpush.bf16.msra.mxu0 0
    %1996 = vmatpush.bf16.msra.mxu0 0
    %1997 = vmatpush.bf16.msra.mxu0 0
    %1998 = vmatpush.bf16.msra.mxu0 %v1986
    %1999 = vmatpush.bf16.msra.mxu0 %v1985
    %2000 = vmatpush.bf16.msra.mxu0 %v1984
    %2001 = vmatpush.bf16.msra.mxu0 %v1983
    %2002 = vmatmul.bf16.gmra.mxu0 %v1992
    %v2003 = vpop.f32.mrf.mxu0
    %v2004 = vadd.f32 %v1960, %v2003
    %v2005 = vpop.f32.mrf.mxu0
    %v2006 = vadd.f32 %v1960, %v2005
    %2007 = vdwg.mxu0
    %v2008 = vadd.f32 %v2004, %v1880
    %v2009 = vadd.f32 %v2006, %v1881
    %s2010 = scalar_lea.vmem %s14, 2
    %v2011 = vld [vmem:[%s2010] sm:$0x1]
    %s2012 = scalar_lea.vmem %s15, 2
    %v2013 = vld [vmem:[%s2012] sm:$0x1]
    %v2014 = vsel %vm68, %v2008, 0.0
    %2015 = vadd.xlane.f32.xlu0 %v2014
    %v2016 = vpop.xlane.xlu0 %2015
    %v2017 = vsel %vm68, %v2009, 0.0
    %2018 = vadd.xlane.f32.xlu0 %v2017
    %v2019 = vpop.xlane.xlu0 %2018
    %v2020 = vmul.f32 %v2016, %v81
    %v2021 = vmul.f32 %v2019, %v81
    %v2022 = vsub.f32 %v2008, %v2020
    %v2023 = vsub.f32 %v2009, %v2021
    %v2024 = vmul.f32 %v2022, %v2022
    %v2025 = vmul.f32 %v2023, %v2023
    %v2026 = vsel %vm68, %v2024, 0.0
    %2027 = vadd.xlane.f32.xlu0 %v2026
    %v2028 = vpop.xlane.xlu0 %2027
    %v2029 = vsel %vm68, %v2025, 0.0
    %2030 = vadd.xlane.f32.xlu0 %v2029
    %v2031 = vpop.xlane.xlu0 %2030
    %v2032 = vmul.f32 %v2028, %v81
    %v2033 = vmul.f32 %v2031, %v81
    %v2034 = vadd.f32 %v2032, 1e-05
    %v2035 = vadd.f32 %v2033, 1e-05
    %v2036 = vrsqrt.pop %v2034
    %v2037 = vmul.f32 %v2036, %v2034
    %v2038 = vmul.f32 %v2037, %v2036
    %v2039 = vmul.f32 0.5, %v2038
    %v2040 = vsub.f32 1.5, %v2039
    %v2041 = vmul.f32 %v2036, %v2040
    %vm2042 = vweird.f32 %v2034
    %vm2043 = vweird.f32 %v2036
    %vm2044 = vmor %vm2042, %vm2043
    %v2045 = vsel %vm2044, %v2036, %v2041
    %v2046 = vrsqrt.pop %v2035
    %v2047 = vmul.f32 %v2046, %v2035
    %v2048 = vmul.f32 %v2047, %v2046
    %v2049 = vmul.f32 0.5, %v2048
    %v2050 = vsub.f32 1.5, %v2049
    %v2051 = vmul.f32 %v2046, %v2050
    %vm2052 = vweird.f32 %v2035
    %vm2053 = vweird.f32 %v2046
    %vm2054 = vmor %vm2052, %vm2053
    %v2055 = vsel %vm2054, %v2046, %v2051
    %v2056 = vmul.f32 %v2022, %v2045
    %v2057 = vmul.f32 %v2023, %v2055
    %v2059 = vperm.slane %v2011, 0
    %v2061 = vmul.f32 %v2056, %v2059
    %v2062 = vmul.f32 %v2057, %v2059
    %v2064 = vperm.slane %v2013, 0
    %v2066 = vadd.f32 %v2061, %v2064
    %v2067 = vadd.f32 %v2062, %v2064
    %v2070 = vrot.slane %v2067, 7
    %v2071 = vsel %vm772, %v2070, %v2066
    %2072 = vrot.lane.b32.xlu0 %v2071, 32
    %v2073 = vpop.permute.xlu0 %2072
    %vm2075 = vcmask 517376
    %2076 = vst.msk [vmem:[#allocation3] sm:$0x3] %vm2075, %v2073
    %s2077 = scalar_lea.vmem %s4, 48
    %v2078 = vld [vmem:[%s2077] sm:$0xf]
    %v2079 = vld [vmem:[%s2077 + $0x4] sm:$0xf]
    %v2080 = vld [vmem:[%s2077 + $0x8] sm:$0xf]
    %v2081 = vld [vmem:[%s2077 + $0xc] sm:$0xf]
    %v2082 = vpack.c.bf16 %v2066, %v2066
    %v2083 = vpack.c.bf16 %v2067, %v2067
    %s2084 = scalar_lea.vmem %s5, 3
    %v2085 = vld [vmem:[%s2084] sm:$0x1]
    %v2087 = vperm.slane %v2085, 0
    %v2091 = vunpack.c.l.b16 %v2082
    %v2092 = vunpack.c.l.b16 %v2083
    %v2093 = vpack.c.b16 %v2092, %v2091
    %v2098 = vunpack.c.l.b16 %v2078
    %v2099 = vunpack.c.l.b16 %v2079
    %v2100 = vunpack.c.l.b16 %v2080
    %v2101 = vunpack.c.l.b16 %v2081
    %v2102 = vpack.c.b16 %v2099, %v2098
    %v2103 = vpack.c.b16 %v2101, %v2100
    %v2107 = vsel %vm68, %v2093, 0
    %2109 = vmatpush.bf16.msra.mxu0 0
    %2110 = vmatpush.bf16.msra.mxu0 0
    %2111 = vmatpush.bf16.msra.mxu0 0
    %2112 = vmatpush.bf16.msra.mxu0 0
    %2113 = vmatpush.bf16.msra.mxu0 0
    %2114 = vmatpush.bf16.msra.mxu0 0
    %2115 = vmatpush.bf16.msra.mxu0 %v2103
    %2116 = vmatpush.bf16.msra.mxu0 %v2102
    %2117 = vmatmul.bf16.gmra.mxu0 %v2107
    %v2118 = vpop.f32.mrf.mxu0
    %v2119 = vadd.f32 %v2087, %v2118
    %v2120 = vpop.f32.mrf.mxu0
    %v2121 = vadd.f32 %v2087, %v2120
    %2122 = vdwg.mxu0
    %v2123 = vpack.c.bf16 %v2119, %v2119
    %v2124 = vpack.c.bf16 %v2121, %v2121
    %v2126 = vunpack.c.l.b16 %v2123
    %v2127 = vpack.c.b16 %v2126, %v2126
    %2128 = vrot.lane.b32.xlu0 %v2127, 96
    %v2129 = vpop.permute.xlu0 %2128
    %v2131 = vsel %vm181, %v2123, 0
    %v2134 = vsel %vm181, %v2129, 0
    %2136 = vmatpush.bf16.xpose.msra.mxu0 0
    %2137 = vmatpush.bf16.xpose.msra.mxu0 0
    %2138 = vmatpush.bf16.xpose.msra.mxu0 0
    %2139 = vmatpush.bf16.xpose.msra.mxu0 0
    %2140 = vmatpush.bf16.xpose.msra.mxu0 0
    %2141 = vmatpush.bf16.xpose.msra.mxu0 0
    %2142 = vmatpush.bf16.xpose.msra.mxu0 0
    %2143 = vmatpush.bf16.xpose.msra.mxu0 %v2134
    %2144 = vmatmul.bf16.gmra.mxu0 %v2131
    %v2145 = vpop.f32.mrf.mxu0
    %v2146 = vadd.f32 0.0, %v2145
    %v2147 = vpop.f32.mrf.mxu0
    %2148 = vdwg.mxu0
    %v2150 = vunpack.c.l.b16 %v2124
    %v2151 = vpack.c.b16 %v2150, %v2150
    %2152 = vrot.lane.b32.xlu0 %v2151, 96
    %v2153 = vpop.permute.xlu0 %2152
    %v2155 = vsel %vm181, %v2124, 0
    %v2158 = vsel %vm181, %v2153, 0
    %2160 = vmatpush.bf16.xpose.msra.mxu0 0
    %2161 = vmatpush.bf16.xpose.msra.mxu0 0
    %2162 = vmatpush.bf16.xpose.msra.mxu0 0
    %2163 = vmatpush.bf16.xpose.msra.mxu0 0
    %2164 = vmatpush.bf16.xpose.msra.mxu0 0
    %2165 = vmatpush.bf16.xpose.msra.mxu0 0
    %2166 = vmatpush.bf16.xpose.msra.mxu0 0
    %2167 = vmatpush.bf16.xpose.msra.mxu0 %v2158
    %2168 = vmatmul.bf16.gmra.mxu0 %v2155
    %v2169 = vpop.f32.mrf.mxu0
    %v2170 = vadd.f32 0.0, %v2169
    %v2171 = vpop.f32.mrf.mxu0
    %2172 = vdwg.mxu0
    %v2173 = vmul.f32 %v2146, 0.25
    %v2174 = vmul.f32 %v2170, 0.25
    %v2175 = vadd.f32 %v2173, %v229
    %v2176 = vadd.f32 %v2174, %v230
    %v2177 = vsel %vm235, %v2175, -inf
    %2178 = vmax.xlane.f32.xlu0 %v2177
    %v2179 = vpop.xlane.xlu0 %2178
    %v2180 = vsel %vm235, %v2176, -inf
    %2181 = vmax.xlane.f32.xlu0 %v2180
    %v2182 = vpop.xlane.xlu0 %2181
    %v2183 = vsub.f32 %v2175, %v2179
    %v2184 = vsub.f32 %v2176, %v2182
    %v2185 = vmul.f32 %v2183, 1.442695
    %v2186 = vpow.pop %v2185
    %v2187 = vmul.f32 %v2184, 1.442695
    %v2188 = vpow.pop %v2187
    %v2189 = vsel %vm235, %v2186, 0.0
    %2190 = vadd.xlane.f32.xlu0 %v2189
    %v2191 = vpop.xlane.xlu0 %2190
    %v2192 = vsel %vm235, %v2188, 0.0
    %2193 = vadd.xlane.f32.xlu0 %v2192
    %v2194 = vpop.xlane.xlu0 %2193
    %v2195 = vrcp.pop %v2191
    %v2196 = vmul.f32 %v2191, %v2195
    %v2197 = vsub.f32 1.0, %v2196
    %v2198 = vmul.f32 %v2195, %v2197
    %v2199 = vadd.f32 %v2195, %v2198
    %vm2200 = vweird.f32 %v2191
    %vm2201 = vweird.f32 %v2195
    %vm2202 = vmor %vm2200, %vm2201
    %v2203 = vsel %vm2202, %v2195, %v2199
    %v2204 = vand.u32 2147483647, %v2191
    %vm2205 = vcmp.eq.f32.partialorder %v2204, 8.507059e+37
    %v2206 = vand.u32 %v2191, 2147483648
    %v2207 = vor.u32 1.1754944e-38, %v2206
    %v2208 = vsel %vm2205, %v2207, %v2203
    %v2209 = vmul.f32 %v2186, %v2208
    %v2210 = vrcp.pop %v2194
    %v2211 = vmul.f32 %v2194, %v2210
    %v2212 = vsub.f32 1.0, %v2211
    %v2213 = vmul.f32 %v2210, %v2212
    %v2214 = vadd.f32 %v2210, %v2213
    %vm2215 = vweird.f32 %v2194
    %vm2216 = vweird.f32 %v2210
    %vm2217 = vmor %vm2215, %vm2216
    %v2218 = vsel %vm2217, %v2210, %v2214
    %v2219 = vand.u32 2147483647, %v2194
    %vm2220 = vcmp.eq.f32.partialorder %v2219, 8.507059e+37
    %v2221 = vand.u32 %v2194, 2147483648
    %v2222 = vor.u32 1.1754944e-38, %v2221
    %v2223 = vsel %vm2220, %v2222, %v2218
    %v2224 = vmul.f32 %v2188, %v2223
    %v2225 = vpack.c.bf16 %v2209, %v2209
    %v2226 = vpack.c.bf16 %v2224, %v2224
    %2227 = vrot.lane.b32.xlu0 %v2127, 64
    %v2228 = vpop.permute.xlu0 %2227
    %v2230 = vsel %vm235, %v2225, 0
    %v2233 = vsel %vm291, %v2228, 0
    %2235 = vmatpush.bf16.msra.mxu0 0
    %2236 = vmatpush.bf16.msra.mxu0 0
    %2237 = vmatpush.bf16.msra.mxu0 0
    %2238 = vmatpush.bf16.msra.mxu0 0
    %2239 = vmatpush.bf16.msra.mxu0 0
    %2240 = vmatpush.bf16.msra.mxu0 0
    %2241 = vmatpush.bf16.msra.mxu0 0
    %2242 = vmatpush.bf16.msra.mxu0 %v2233
    %2243 = vmatmul.bf16.gmra.mxu0 %v2230
    %v2244 = vpop.f32.mrf.mxu0
    %v2245 = vadd.f32 0.0, %v2244
    %v2246 = vpop.f32.mrf.mxu0
    %2247 = vdwg.mxu0
    %2248 = vrot.lane.b32.xlu0 %v2151, 64
    %v2249 = vpop.permute.xlu0 %2248
    %v2251 = vsel %vm235, %v2226, 0
    %v2254 = vsel %vm291, %v2249, 0
    %2256 = vmatpush.bf16.msra.mxu0 0
    %2257 = vmatpush.bf16.msra.mxu0 0
    %2258 = vmatpush.bf16.msra.mxu0 0
    %2259 = vmatpush.bf16.msra.mxu0 0
    %2260 = vmatpush.bf16.msra.mxu0 0
    %2261 = vmatpush.bf16.msra.mxu0 0
    %2262 = vmatpush.bf16.msra.mxu0 0
    %2263 = vmatpush.bf16.msra.mxu0 %v2254
    %2264 = vmatmul.bf16.gmra.mxu0 %v2251
    %v2265 = vpop.f32.mrf.mxu0
    %v2266 = vadd.f32 0.0, %v2265
    %v2267 = vpop.f32.mrf.mxu0
    %2268 = vdwg.mxu0
    %2269 = vst.msk [vmem:[#allocation2] sm:$0xff] %vm181, %v2245
    %2270 = vst.msk [vmem:[#allocation2 + $0x8] sm:$0xff] %vm181, %v2266
    %2271 = vrot.lane.b32.xlu0 %v2127, 112
    %v2272 = vpop.permute.xlu0 %2271
    %2273 = vrot.lane.b32.xlu0 %v2127, 80
    %v2274 = vpop.permute.xlu0 %2273
    %v2276 = vsel %vm181, %v2272, 0
    %v2279 = vsel %vm181, %v2274, 0
    %2281 = vmatpush.bf16.xpose.msra.mxu0 0
    %2282 = vmatpush.bf16.xpose.msra.mxu0 0
    %2283 = vmatpush.bf16.xpose.msra.mxu0 0
    %2284 = vmatpush.bf16.xpose.msra.mxu0 0
    %2285 = vmatpush.bf16.xpose.msra.mxu0 0
    %2286 = vmatpush.bf16.xpose.msra.mxu0 0
    %2287 = vmatpush.bf16.xpose.msra.mxu0 0
    %2288 = vmatpush.bf16.xpose.msra.mxu0 %v2279
    %2289 = vmatmul.bf16.gmra.mxu0 %v2276
    %v2290 = vpop.f32.mrf.mxu0
    %v2291 = vadd.f32 0.0, %v2290
    %v2292 = vpop.f32.mrf.mxu0
    %2293 = vdwg.mxu0
    %2294 = vrot.lane.b32.xlu0 %v2151, 112
    %v2295 = vpop.permute.xlu0 %2294
    %2296 = vrot.lane.b32.xlu0 %v2151, 80
    %v2297 = vpop.permute.xlu0 %2296
    %v2299 = vsel %vm181, %v2295, 0
    %v2302 = vsel %vm181, %v2297, 0
    %2304 = vmatpush.bf16.xpose.msra.mxu0 0
    %2305 = vmatpush.bf16.xpose.msra.mxu0 0
    %2306 = vmatpush.bf16.xpose.msra.mxu0 0
    %2307 = vmatpush.bf16.xpose.msra.mxu0 0
    %2308 = vmatpush.bf16.xpose.msra.mxu0 0
    %2309 = vmatpush.bf16.xpose.msra.mxu0 0
    %2310 = vmatpush.bf16.xpose.msra.mxu0 0
    %2311 = vmatpush.bf16.xpose.msra.mxu0 %v2302
    %2312 = vmatmul.bf16.gmra.mxu0 %v2299
    %v2313 = vpop.f32.mrf.mxu0
    %v2314 = vadd.f32 0.0, %v2313
    %v2315 = vpop.f32.mrf.mxu0
    %2316 = vdwg.mxu0
    %v2317 = vmul.f32 %v2291, 0.25
    %v2318 = vmul.f32 %v2314, 0.25
    %v2319 = vadd.f32 %v2317, %v229
    %v2320 = vadd.f32 %v2318, %v230
    %v2321 = vsel %vm235, %v2319, -inf
    %2322 = vmax.xlane.f32.xlu0 %v2321
    %v2323 = vpop.xlane.xlu0 %2322
    %v2324 = vsel %vm235, %v2320, -inf
    %2325 = vmax.xlane.f32.xlu0 %v2324
    %v2326 = vpop.xlane.xlu0 %2325
    %v2327 = vsub.f32 %v2319, %v2323
    %v2328 = vsub.f32 %v2320, %v2326
    %v2329 = vmul.f32 %v2327, 1.442695
    %v2330 = vpow.pop %v2329
    %v2331 = vmul.f32 %v2328, 1.442695
    %v2332 = vpow.pop %v2331
    %v2333 = vsel %vm235, %v2330, 0.0
    %2334 = vadd.xlane.f32.xlu0 %v2333
    %v2335 = vpop.xlane.xlu0 %2334
    %v2336 = vsel %vm235, %v2332, 0.0
    %2337 = vadd.xlane.f32.xlu0 %v2336
    %v2338 = vpop.xlane.xlu0 %2337
    %v2339 = vrcp.pop %v2335
    %v2340 = vmul.f32 %v2335, %v2339
    %v2341 = vsub.f32 1.0, %v2340
    %v2342 = vmul.f32 %v2339, %v2341
    %v2343 = vadd.f32 %v2339, %v2342
    %vm2344 = vweird.f32 %v2335
    %vm2345 = vweird.f32 %v2339
    %vm2346 = vmor %vm2344, %vm2345
    %v2347 = vsel %vm2346, %v2339, %v2343
    %v2348 = vand.u32 2147483647, %v2335
    %vm2349 = vcmp.eq.f32.partialorder %v2348, 8.507059e+37
    %v2350 = vand.u32 %v2335, 2147483648
    %v2351 = vor.u32 1.1754944e-38, %v2350
    %v2352 = vsel %vm2349, %v2351, %v2347
    %v2353 = vmul.f32 %v2330, %v2352
    %v2354 = vrcp.pop %v2338
    %v2355 = vmul.f32 %v2338, %v2354
    %v2356 = vsub.f32 1.0, %v2355
    %v2357 = vmul.f32 %v2354, %v2356
    %v2358 = vadd.f32 %v2354, %v2357
    %vm2359 = vweird.f32 %v2338
    %vm2360 = vweird.f32 %v2354
    %vm2361 = vmor %vm2359, %vm2360
    %v2362 = vsel %vm2361, %v2354, %v2358
    %v2363 = vand.u32 2147483647, %v2338
    %vm2364 = vcmp.eq.f32.partialorder %v2363, 8.507059e+37
    %v2365 = vand.u32 %v2338, 2147483648
    %v2366 = vor.u32 1.1754944e-38, %v2365
    %v2367 = vsel %vm2364, %v2366, %v2362
    %v2368 = vmul.f32 %v2332, %v2367
    %v2369 = vpack.c.bf16 %v2353, %v2353
    %v2370 = vpack.c.bf16 %v2368, %v2368
    %2371 = vrot.lane.b32.xlu0 %v2127, 48
    %v2372 = vpop.permute.xlu0 %2371
    %v2374 = vsel %vm235, %v2369, 0
    %v2377 = vsel %vm291, %v2372, 0
    %2379 = vmatpush.bf16.msra.mxu0 0
    %2380 = vmatpush.bf16.msra.mxu0 0
    %2381 = vmatpush.bf16.msra.mxu0 0
    %2382 = vmatpush.bf16.msra.mxu0 0
    %2383 = vmatpush.bf16.msra.mxu0 0
    %2384 = vmatpush.bf16.msra.mxu0 0
    %2385 = vmatpush.bf16.msra.mxu0 0
    %2386 = vmatpush.bf16.msra.mxu0 %v2377
    %2387 = vmatmul.bf16.gmra.mxu0 %v2374
    %v2388 = vpop.f32.mrf.mxu0
    %v2389 = vadd.f32 0.0, %v2388
    %v2390 = vpop.f32.mrf.mxu0
    %2391 = vdwg.mxu0
    %2392 = vrot.lane.b32.xlu0 %v2151, 48
    %v2393 = vpop.permute.xlu0 %2392
    %v2395 = vsel %vm235, %v2370, 0
    %v2398 = vsel %vm291, %v2393, 0
    %2400 = vmatpush.bf16.msra.mxu0 0
    %2401 = vmatpush.bf16.msra.mxu0 0
    %2402 = vmatpush.bf16.msra.mxu0 0
    %2403 = vmatpush.bf16.msra.mxu0 0
    %2404 = vmatpush.bf16.msra.mxu0 0
    %2405 = vmatpush.bf16.msra.mxu0 0
    %2406 = vmatpush.bf16.msra.mxu0 0
    %2407 = vmatpush.bf16.msra.mxu0 %v2398
    %2408 = vmatmul.bf16.gmra.mxu0 %v2395
    %v2409 = vpop.f32.mrf.mxu0
    %v2410 = vadd.f32 0.0, %v2409
    %v2411 = vpop.f32.mrf.mxu0
    %2412 = vdwg.mxu0
    %2415 = vrot.lane.b32.xlu0 %v2389, 16
    %v2416 = vpop.permute.xlu0 %2415
    %2417 = vrot.lane.b32.xlu0 %v2410, 16
    %v2418 = vpop.permute.xlu0 %2417
    %2421 = vst.msk [vmem:[#allocation2] sm:$0xff] %vm481, %v2416
    %2422 = vst.msk [vmem:[#allocation2 + $0x8] sm:$0xff] %vm481, %v2418
    %v2423 = vld [vmem:[#allocation2] sm:$0xff]
    %v2424 = vld [vmem:[#allocation2 + $0x8] sm:$0xff]
    %s2425 = scalar_lea.vmem %s6, 48
    %v2426 = vld [vmem:[%s2425] sm:$0xf]
    %v2427 = vld [vmem:[%s2425 + $0x4] sm:$0xf]
    %v2428 = vld [vmem:[%s2425 + $0x8] sm:$0xf]
    %v2429 = vld [vmem:[%s2425 + $0xc] sm:$0xf]
    %v2430 = vpack.c.bf16 %v2423, %v2423
    %v2431 = vpack.c.bf16 %v2424, %v2424
    %s2432 = scalar_lea.vmem %s7, 3
    %v2433 = vld [vmem:[%s2432] sm:$0x1]
    %v2435 = vperm.slane %v2433, 0
    %v2439 = vunpack.c.l.b16 %v2430
    %v2440 = vunpack.c.l.b16 %v2431
    %v2441 = vpack.c.b16 %v2440, %v2439
    %v2446 = vunpack.c.l.b16 %v2426
    %v2447 = vunpack.c.l.b16 %v2427
    %v2448 = vunpack.c.l.b16 %v2428
    %v2449 = vunpack.c.l.b16 %v2429
    %v2450 = vpack.c.b16 %v2447, %v2446
    %v2451 = vpack.c.b16 %v2449, %v2448
    %v2455 = vsel %vm68, %v2441, 0
    %2457 = vmatpush.bf16.msra.mxu0 0
    %2458 = vmatpush.bf16.msra.mxu0 0
    %2459 = vmatpush.bf16.msra.mxu0 0
    %2460 = vmatpush.bf16.msra.mxu0 0
    %2461 = vmatpush.bf16.msra.mxu0 0
    %2462 = vmatpush.bf16.msra.mxu0 0
    %2463 = vmatpush.bf16.msra.mxu0 %v2451
    %2464 = vmatpush.bf16.msra.mxu0 %v2450
    %2465 = vmatmul.bf16.gmra.mxu0 %v2455
    %v2466 = vpop.f32.mrf.mxu0
    %v2467 = vadd.f32 %v2435, %v2466
    %v2468 = vpop.f32.mrf.mxu0
    %v2469 = vadd.f32 %v2435, %v2468
    %2470 = vdwg.mxu0
    %v2471 = vadd.f32 %v2467, %v2066
    %v2472 = vadd.f32 %v2469, %v2067
    %s2473 = scalar_lea.vmem %s8, 3
    %v2474 = vld [vmem:[%s2473] sm:$0x1]
    %s2475 = scalar_lea.vmem %s9, 3
    %v2476 = vld [vmem:[%s2475] sm:$0x1]
    %v2477 = vsel %vm68, %v2471, 0.0
    %2478 = vadd.xlane.f32.xlu0 %v2477
    %v2479 = vpop.xlane.xlu0 %2478
    %v2480 = vsel %vm68, %v2472, 0.0
    %2481 = vadd.xlane.f32.xlu0 %v2480
    %v2482 = vpop.xlane.xlu0 %2481
    %v2483 = vmul.f32 %v2479, %v81
    %v2484 = vmul.f32 %v2482, %v81
    %v2485 = vsub.f32 %v2471, %v2483
    %v2486 = vsub.f32 %v2472, %v2484
    %v2487 = vmul.f32 %v2485, %v2485
    %v2488 = vmul.f32 %v2486, %v2486
    %v2489 = vsel %vm68, %v2487, 0.0
    %2490 = vadd.xlane.f32.xlu0 %v2489
    %v2491 = vpop.xlane.xlu0 %2490
    %v2492 = vsel %vm68, %v2488, 0.0
    %2493 = vadd.xlane.f32.xlu0 %v2492
    %v2494 = vpop.xlane.xlu0 %2493
    %v2495 = vmul.f32 %v2491, %v81
    %v2496 = vmul.f32 %v2494, %v81
    %v2497 = vadd.f32 %v2495, 1e-05
    %v2498 = vadd.f32 %v2496, 1e-05
    %v2499 = vrsqrt.pop %v2497
    %v2500 = vmul.f32 %v2499, %v2497
    %v2501 = vmul.f32 %v2500, %v2499
    %v2502 = vmul.f32 0.5, %v2501
    %v2503 = vsub.f32 1.5, %v2502
    %v2504 = vmul.f32 %v2499, %v2503
    %vm2505 = vweird.f32 %v2497
    %vm2506 = vweird.f32 %v2499
    %vm2507 = vmor %vm2505, %vm2506
    %v2508 = vsel %vm2507, %v2499, %v2504
    %v2509 = vrsqrt.pop %v2498
    %v2510 = vmul.f32 %v2509, %v2498
    %v2511 = vmul.f32 %v2510, %v2509
    %v2512 = vmul.f32 0.5, %v2511
    %v2513 = vsub.f32 1.5, %v2512
    %v2514 = vmul.f32 %v2509, %v2513
    %vm2515 = vweird.f32 %v2498
    %vm2516 = vweird.f32 %v2509
    %vm2517 = vmor %vm2515, %vm2516
    %v2518 = vsel %vm2517, %v2509, %v2514
    %v2519 = vmul.f32 %v2485, %v2508
    %v2520 = vmul.f32 %v2486, %v2518
    %v2522 = vperm.slane %v2474, 0
    %v2524 = vmul.f32 %v2519, %v2522
    %v2525 = vmul.f32 %v2520, %v2522
    %v2527 = vperm.slane %v2476, 0
    %v2529 = vadd.f32 %v2524, %v2527
    %v2530 = vadd.f32 %v2525, %v2527
    %s2531 = scalar_lea.vmem %s10, 48
    %v2532 = vld [vmem:[%s2531] sm:$0xf]
    %v2533 = vld [vmem:[%s2531 + $0x4] sm:$0xf]
    %v2534 = vld [vmem:[%s2531 + $0x8] sm:$0xf]
    %v2535 = vld [vmem:[%s2531 + $0xc] sm:$0xf]
    %v2536 = vpack.c.bf16 %v2529, %v2529
    %v2537 = vpack.c.bf16 %v2530, %v2530
    %s2538 = scalar_lea.vmem %s11, 3
    %v2539 = vld [vmem:[%s2538] sm:$0x1]
    %v2541 = vperm.slane %v2539, 0
    %v2545 = vunpack.c.l.b16 %v2536
    %v2546 = vunpack.c.l.b16 %v2537
    %v2547 = vpack.c.b16 %v2546, %v2545
    %v2552 = vunpack.c.l.b16 %v2532
    %v2553 = vunpack.c.l.b16 %v2533
    %v2554 = vunpack.c.l.b16 %v2534
    %v2555 = vunpack.c.l.b16 %v2535
    %v2556 = vpack.c.b16 %v2553, %v2552
    %v2557 = vpack.c.b16 %v2555, %v2554
    %v2561 = vsel %vm68, %v2547, 0
    %2563 = vmatpush.bf16.msra.mxu0 0
    %2564 = vmatpush.bf16.msra.mxu0 0
    %2565 = vmatpush.bf16.msra.mxu0 0
    %2566 = vmatpush.bf16.msra.mxu0 0
    %2567 = vmatpush.bf16.msra.mxu0 0
    %2568 = vmatpush.bf16.msra.mxu0 0
    %2569 = vmatpush.bf16.msra.mxu0 %v2557
    %2570 = vmatpush.bf16.msra.mxu0 %v2556
    %2571 = vmatmul.bf16.gmra.mxu0 %v2561
    %v2572 = vpop.f32.mrf.mxu0
    %v2573 = vadd.f32 %v2541, %v2572
    %v2574 = vpop.f32.mrf.mxu0
    %v2575 = vadd.f32 %v2541, %v2574
    %2576 = vdwg.mxu0
    %v2577 = vmul.f32 %v2573, %v2573
    %v2578 = vmul.f32 %v2575, %v2575
    %v2579 = vmul.f32 %v2573, %v2577
    %v2580 = vmul.f32 %v2575, %v2578
    %v2581 = vmul.f32 %v2579, 0.044715
    %v2582 = vmul.f32 %v2580, 0.044715
    %v2583 = vadd.f32 %v2573, %v2581
    %v2584 = vadd.f32 %v2575, %v2582
    %v2585 = vmul.f32 %v2583, 0.7978846
    %v2586 = vmul.f32 %v2584, 0.7978846
    %v2587 = vtanh.pop %v2585
    %v2588 = vtanh.pop %v2586
    %v2589 = vadd.f32 %v2587, 1.0
    %v2590 = vadd.f32 %v2588, 1.0
    %v2591 = vmul.f32 %v2589, 0.5
    %v2592 = vmul.f32 %v2590, 0.5
    %v2593 = vmul.f32 %v2573, %v2591
    %v2594 = vmul.f32 %v2575, %v2592
    %s2595 = scalar_lea.vmem %s12, 96
    %v2596 = vld [vmem:[%s2595] sm:$0xf]
    %v2597 = vld [vmem:[%s2595 + $0x4] sm:$0xf]
    %v2598 = vld [vmem:[%s2595 + $0x8] sm:$0xf]
    %v2599 = vld [vmem:[%s2595 + $0xc] sm:$0xf]
    %v2600 = vld [vmem:[%s2595 + $0x10] sm:$0xf]
    %v2601 = vld [vmem:[%s2595 + $0x14] sm:$0xf]
    %v2602 = vld [vmem:[%s2595 + $0x18] sm:$0xf]
    %v2603 = vld [vmem:[%s2595 + $0x1c] sm:$0xf]
    %v2604 = vpack.c.bf16 %v2593, %v2593
    %v2605 = vpack.c.bf16 %v2594, %v2594
    %s2606 = scalar_lea.vmem %s13, 3
    %v2607 = vld [vmem:[%s2606] sm:$0x1]
    %v2609 = vperm.slane %v2607, 0
    %v2613 = vunpack.c.l.b16 %v2604
    %v2614 = vunpack.c.l.b16 %v2605
    %v2615 = vpack.c.b16 %v2614, %v2613
    %v2624 = vunpack.c.l.b16 %v2596
    %v2625 = vunpack.c.l.b16 %v2597
    %v2626 = vunpack.c.l.b16 %v2598
    %v2627 = vunpack.c.l.b16 %v2599
    %v2628 = vunpack.c.l.b16 %v2600
    %v2629 = vunpack.c.l.b16 %v2601
    %v2630 = vunpack.c.l.b16 %v2602
    %v2631 = vunpack.c.l.b16 %v2603
    %v2632 = vpack.c.b16 %v2625, %v2624
    %v2633 = vpack.c.b16 %v2627, %v2626
    %v2634 = vpack.c.b16 %v2629, %v2628
    %v2635 = vpack.c.b16 %v2631, %v2630
    %v2641 = vsel %vm693, %v2615, 0
    %2643 = vmatpush.bf16.msra.mxu0 0
    %2644 = vmatpush.bf16.msra.mxu0 0
    %2645 = vmatpush.bf16.msra.mxu0 0
    %2646 = vmatpush.bf16.msra.mxu0 0
    %2647 = vmatpush.bf16.msra.mxu0 %v2635
    %2648 = vmatpush.bf16.msra.mxu0 %v2634
    %2649 = vmatpush.bf16.msra.mxu0 %v2633
    %2650 = vmatpush.bf16.msra.mxu0 %v2632
    %2651 = vmatmul.bf16.gmra.mxu0 %v2641
    %v2652 = vpop.f32.mrf.mxu0
    %v2653 = vadd.f32 %v2609, %v2652
    %v2654 = vpop.f32.mrf.mxu0
    %v2655 = vadd.f32 %v2609, %v2654
    %2656 = vdwg.mxu0
    %v2657 = vadd.f32 %v2653, %v2529
    %v2658 = vadd.f32 %v2655, %v2530
    %s2659 = scalar_lea.vmem %s14, 3
    %v2660 = vld [vmem:[%s2659] sm:$0x1]
    %s2661 = scalar_lea.vmem %s15, 3
    %v2662 = vld [vmem:[%s2661] sm:$0x1]
    %v2663 = vsel %vm68, %v2657, 0.0
    %2664 = vadd.xlane.f32.xlu0 %v2663
    %v2665 = vpop.xlane.xlu0 %2664
    %v2666 = vsel %vm68, %v2658, 0.0
    %2667 = vadd.xlane.f32.xlu0 %v2666
    %v2668 = vpop.xlane.xlu0 %2667
    %v2669 = vmul.f32 %v2665, %v81
    %v2670 = vmul.f32 %v2668, %v81
    %v2671 = vsub.f32 %v2657, %v2669
    %v2672 = vsub.f32 %v2658, %v2670
    %v2673 = vmul.f32 %v2671, %v2671
    %v2674 = vmul.f32 %v2672, %v2672
    %v2675 = vsel %vm68, %v2673, 0.0
    %2676 = vadd.xlane.f32.xlu0 %v2675
    %v2677 = vpop.xlane.xlu0 %2676
    %v2678 = vsel %vm68, %v2674, 0.0
    %2679 = vadd.xlane.f32.xlu0 %v2678
    %v2680 = vpop.xlane.xlu0 %2679
    %v2681 = vmul.f32 %v2677, %v81
    %v2682 = vmul.f32 %v2680, %v81
    %v2683 = vadd.f32 %v2681, 1e-05
    %v2684 = vadd.f32 %v2682, 1e-05
    %v2685 = vrsqrt.pop %v2683
    %v2686 = vmul.f32 %v2685, %v2683
    %v2687 = vmul.f32 %v2686, %v2685
    %v2688 = vmul.f32 0.5, %v2687
    %v2689 = vsub.f32 1.5, %v2688
    %v2690 = vmul.f32 %v2685, %v2689
    %vm2691 = vweird.f32 %v2683
    %vm2692 = vweird.f32 %v2685
    %vm2693 = vmor %vm2691, %vm2692
    %v2694 = vsel %vm2693, %v2685, %v2690
    %v2695 = vrsqrt.pop %v2684
    %v2696 = vmul.f32 %v2695, %v2684
    %v2697 = vmul.f32 %v2696, %v2695
    %v2698 = vmul.f32 0.5, %v2697
    %v2699 = vsub.f32 1.5, %v2698
    %v2700 = vmul.f32 %v2695, %v2699
    %vm2701 = vweird.f32 %v2684
    %vm2702 = vweird.f32 %v2695
    %vm2703 = vmor %vm2701, %vm2702
    %v2704 = vsel %vm2703, %v2695, %v2700
    %v2705 = vmul.f32 %v2671, %v2694
    %v2706 = vmul.f32 %v2672, %v2704
    %v2708 = vperm.slane %v2660, 0
    %v2710 = vmul.f32 %v2705, %v2708
    %v2711 = vmul.f32 %v2706, %v2708
    %v2713 = vperm.slane %v2662, 0
    %v2715 = vadd.f32 %v2710, %v2713
    %v2716 = vadd.f32 %v2711, %v2713
    %v2719 = vrot.slane %v2716, 7
    %v2720 = vsel %vm772, %v2719, %v2715
    %vm2722 = vcmask 254976
    %2723 = vst.msk [vmem:[#allocation3] sm:$0x3] %vm2722, %v2720
    %v2724 = vld [vmem:[#allocation3] sm:$0x3]
    %v2725 = vld [vmem:[%s16] sm:$0xf]
    %v2726 = vld [vmem:[%s16 + $0x4] sm:$0xf]
    %v2727 = vld [vmem:[%s16 + $0x8] sm:$0xf]
    %v2728 = vld [vmem:[%s16 + $0xc] sm:$0xf]
    %v2729 = vld [vmem:[%s16 + $0x10] sm:$0xf]
    %v2730 = vld [vmem:[%s16 + $0x14] sm:$0xf]
    %v2731 = vld [vmem:[%s16 + $0x18] sm:$0xf]
    %v2732 = vld [vmem:[%s16 + $0x1c] sm:$0xf]
    %v2733 = vld [vmem:[%s16 + $0x20] sm:$0xf]
    %v2734 = vld [vmem:[%s16 + $0x24] sm:$0xf]
    %v2735 = vld [vmem:[%s16 + $0x28] sm:$0xf]
    %v2736 = vld [vmem:[%s16 + $0x2c] sm:$0xf]
    %v2737 = vld [vmem:[%s16 + $0x30] sm:$0xf]
    %v2738 = vld [vmem:[%s16 + $0x34] sm:$0xf]
    %v2739 = vld [vmem:[%s16 + $0x38] sm:$0xf]
    %v2740 = vld [vmem:[%s16 + $0x3c] sm:$0xf]
    %v2741 = vpack.c.bf16 %v2724, %v2724
    %v2742 = vld [vmem:[%s17] sm:$0x1]
    %v2744 = vperm.slane %v2742, 0
    %v2762 = vunpack.c.l.b16 %v2725
    %v2763 = vunpack.c.l.b16 %v2726
    %v2764 = vunpack.c.l.b16 %v2727
    %v2765 = vunpack.c.l.b16 %v2728
    %v2766 = vunpack.c.l.b16 %v2729
    %v2767 = vunpack.c.l.b16 %v2730
    %v2768 = vunpack.c.l.b16 %v2731
    %v2769 = vunpack.c.l.b16 %v2732
    %v2770 = vunpack.c.l.b16 %v2733
    %v2771 = vunpack.c.l.b16 %v2734
    %v2772 = vunpack.c.l.b16 %v2735
    %v2773 = vunpack.c.l.b16 %v2736
    %v2774 = vunpack.c.l.b16 %v2737
    %v2775 = vunpack.c.l.b16 %v2738
    %v2776 = vunpack.c.l.b16 %v2739
    %v2777 = vunpack.c.l.b16 %v2740
    %v2778 = vpack.c.b16 %v2763, %v2762
    %v2779 = vpack.c.b16 %v2765, %v2764
    %v2780 = vpack.c.b16 %v2767, %v2766
    %v2781 = vpack.c.b16 %v2769, %v2768
    %v2782 = vpack.c.b16 %v2771, %v2770
    %v2783 = vpack.c.b16 %v2773, %v2772
    %v2784 = vpack.c.b16 %v2775, %v2774
    %v2785 = vpack.c.b16 %v2777, %v2776
    %2794 = vmatpush.bf16.msra.mxu0 %v2785
    %2795 = vmatpush.bf16.msra.mxu0 %v2784
    %2796 = vmatpush.bf16.msra.mxu0 %v2783
    %2797 = vmatpush.bf16.msra.mxu0 %v2782
    %2798 = vmatpush.bf16.msra.mxu0 %v2781
    %2799 = vmatpush.bf16.msra.mxu0 %v2780
    %2800 = vmatpush.bf16.msra.mxu0 %v2779
    %2801 = vmatpush.bf16.msra.mxu0 %v2778
    %2802 = vmatmul.bf16.gmra.mxu0 %v2741
    %v2803 = vpop.f32.mrf.mxu0
    %v2804 = vadd.f32 %v2744, %v2803
    %v2805 = vpop.f32.mrf.mxu0
    %2806 = vdwg.mxu0
    %2807 = vst [vmem:[#allocation4] sm:$0x3] %v2804
    // Predicated region
    $region74: #{forward.1} parent=1 // pred_check
      _
    $region75: #{forward.1} parent=1 // pred_check_branch
      %2809 = sbr.rel (0) target = $region77
    $region76: #{forward.1} parent=1 // pred_region
      %2811 = vsyncadd [#allocation5], 0
      %s2813 = sshll.u32 [#allocation4], 4
      %s2814 = int_to_ptr.vmem [resolvable:$true] %s2813
      %s2815 = sshll.u32 %s18, 4
      %s2816 = int_to_ptr.hbm [resolvable:$true] %s2815
      %2818 = dma.vmem_to_hbm [thread:$0]  %s2814, 32, %s2816, [#allocation5]
    $region77: #{forward.1} parent=1 // pred_fallthru
      _
    // Predicated region
    $region78: #{forward.1} parent=1 // pred_check
      _
    $region79: #{forward.1} parent=1 // pred_check_branch
      %2820 = sbr.rel (0) target = $region81
    $region80: #{forward.1} parent=1 // pred_region
      %2822 = dma.done [#allocation5], 32
    $region81: #{forward.1} parent=1 // pred_fallthru
      _
    %2823 = vsyncpa [#allocation5], 1

</llo_original>
